<compile_context>
chip_gen: v5e
topology: v5e:2x2
jax: 0.10.0
libtpu: 0.0.40
codegen_flags: <defaults>
</compile_context>

<pallas_src>
import functools

import jax
import jax.numpy as jnp
from jax.experimental import pallas as pl
from jax.experimental.pallas import tpu as pltpu  # noqa: F401  (TPU backend assumed)

# ----------------------------- configuration --------------------------------
BATCH = 2
SEQ_LEN = 6                  # frames per study; groups of 3 -> T = SEQ_LEN // 3
IMG_H = IMG_W = 16
CNN_FEAT = 64                # surrogate backbone feature width (fc.in_features)
HIDDEN = 128                 # GRU hidden per direction (torch default hidden_dim)
BI_HIDDEN = 2 * HIDDEN       # bidirectional GRU output width = attention dim
HEAD_DIMS = (1, 1, 3, 3, 3)  # bowel, extravasation, kidney, liver, spleen
HEAD_TOTAL = sum(HEAD_DIMS)  # 11
HEAD_PAD = 128               # lane-dense output store
K_IM2COL = 27                # 3x3 conv, 3 input channels
K_PAD = 32                   # sublane-friendly K for the bf16 conv weight


# ----------------------------- in-kernel helpers -----------------------------
def _sigmoid(x):
    # tanh-based sigmoid: lands on the EUP slot, no inf-intermediate exp.
    return 0.5 * (jnp.tanh(0.5 * x) + 1.0)


# ----------------------------- the fused kernel ------------------------------
def _rsna_kernel(
    patches_ref, conv_w_ref, conv_b_ref,
    wi0_ref, bi0_ref, wh0_ref, bh0_ref,
    wi1_ref, bi1_ref, wh1_ref, bh1_ref,
    att_w_ref, att_b_ref, att_v_ref,
    head_w_ref, head_b_ref,
    out_ref,
    *, batch, seq, hidden, hw,
):
    B, T, hd = batch, seq, hidden
    hd2, hd3 = 2 * hidden, 3 * hidden

    # --- surrogate CNN backbone: im2col 3x3 conv (bf16 MXU, f32 acc) + ReLU,
    #     then AdaptiveAvgPool2d(1) as a leading-dim reshape + sublane sum. ---
    y = jnp.dot(patches_ref[...], conv_w_ref[...],
                preferred_element_type=jnp.float32) + conv_b_ref[...]
    y = jnp.maximum(y, 0.0)                                     # (T*B*HW, C)
    feat = jnp.sum(y.reshape(T * B, hw, y.shape[-1]), axis=1) * (1.0 / hw)
    # feat: (T*B, C), row = t*B + b (time-major).
    # SpatialDropout(0.1) -> identity in eval.

    def bidir_layer(x_stack, wi_ref, bi_ref, wh_ref, bh_ref):
        """One bidirectional GRU layer over stacked time-major input (T*B, in)."""
        # Recurrence-independent input projections: ALL timesteps, BOTH
        # directions, one matmul.  Columns: [fwd r,z,n | bwd r,z,n].
        gi_all = jnp.dot(x_stack.astype(jnp.bfloat16), wi_ref[...],
                         preferred_element_type=jnp.float32) + bi_ref[...]
        wh = wh_ref[...]                      # block-diag (2*hd, 6*hd) bf16
        bh = bh_ref[...]
        h_cat = jnp.zeros((B, hd2), jnp.float32)   # lanes = [h_fwd | h_bwd]
        fwd = [None] * T
        bwd = [None] * T
        for s in range(T):
            tb = T - 1 - s
            # One recurrent matmul per step covering both directions.
            gh = jnp.dot(h_cat.astype(jnp.bfloat16), wh,
                         preferred_element_type=jnp.float32) + bh   # (B, 6*hd)
            gi = jnp.concatenate(
                [gi_all[s * B:(s + 1) * B, 0:hd3],          # fwd gates @ time s
                 gi_all[tb * B:(tb + 1) * B, hd3:2 * hd3]],  # bwd gates @ time tb
                axis=1)                                      # (B, 6*hd)
            g = gi + gh
            # torch gate order (r, z, n) per direction block.
            r = _sigmoid(jnp.concatenate(
                [g[:, 0:hd], g[:, hd3:hd3 + hd]], axis=1))
            z = _sigmoid(jnp.concatenate(
                [g[:, hd:hd2], g[:, hd3 + hd:hd3 + hd2]], axis=1))
            gi_n = jnp.concatenate(
                [gi[:, hd2:hd3], gi[:, hd3 + hd2:2 * hd3]], axis=1)
            gh_n = jnp.concatenate(
                [gh[:, hd2:hd3], gh[:, hd3 + hd2:2 * hd3]], axis=1)
            n = jnp.tanh(gi_n + r * gh_n)
            h_cat = (1.0 - z) * n + z * h_cat
            fwd[s] = h_cat[:, 0:hd]
            bwd[tb] = h_cat[:, hd:hd2]
        # Stacked time-major bidirectional output (T*B, 2*hd).
        return jnp.concatenate(
            [jnp.concatenate([fwd[t], bwd[t]], axis=1) for t in range(T)],
            axis=0)

    # --- 2-layer bidirectional GRU (torch gate order r,z,n; h0 = 0) ----------
    xs = bidir_layer(feat, wi0_ref, bi0_ref, wh0_ref, bh0_ref)
    xs = bidir_layer(xs, wi1_ref, bi1_ref, wh1_ref, bh1_ref)     # (T*B, 2*hd)

    # --- MLPAttentionNetwork: batched projection, softmax over the seq axis --
    hproj = jnp.tanh(
        jnp.dot(xs.astype(jnp.bfloat16), att_w_ref[...],
                preferred_element_type=jnp.float32) + att_b_ref[...])
    logit_col = jnp.dot(hproj.astype(jnp.bfloat16), att_v_ref[...],
                        preferred_element_type=jnp.float32)       # (T*B, 1)
    logits = [logit_col[t * B:(t + 1) * B, :] for t in range(T)]
    m = logits[0]
    for t in range(1, T):
        m = jnp.maximum(m, logits[t])
    es = [jnp.exp(l - m) for l in logits]
    denom = es[0]
    for t in range(1, T):
        denom = denom + es[t]
    inv = pl.reciprocal(denom, approx=True)                       # EUP recip
    attn = xs[0:B, :] * (es[0] * inv)
    for t in range(1, T):
        attn = attn + xs[t * B:(t + 1) * B, :] * (es[t] * inv)    # (B, 2*hd)

    # --- all five classification heads fused; lane-dense (B, 128) store ------
    out_ref[...] = (
        jnp.dot(attn.astype(jnp.bfloat16), head_w_ref[...],
                preferred_element_type=jnp.float32) + head_b_ref[...]
    ).astype(out_ref.dtype)


# ----------------------------- host-side wrapper -----------------------------
def _im2col_patches(x):
    """(B, S, H, W) -> (T*B*H*W, K_PAD) bf16 im2col slab, frames time-major."""
    B, S, H, W = x.shape
    T = S // 3
    N = T * B
    # group 3 consecutive frames per study (matches torch reshape), then
    # reorder frames to time-major: row n = t*B + b.
    frames = jnp.transpose(x.reshape(B, T, 3, H, W), (1, 0, 2, 3, 4)).reshape(N, 3, H, W)
    frames = jnp.transpose(frames, (0, 2, 3, 1))                  # NHWC
    xp = jnp.pad(frames, ((0, 0), (1, 1), (1, 1), (0, 0)))
    cols = [xp[:, dy:dy + H, dx:dx + W, :] for dy in range(3) for dx in range(3)]
    patches = jnp.concatenate(cols, axis=-1).reshape(N * H * W, K_IM2COL)
    patches = jnp.pad(patches, ((0, 0), (0, K_PAD - K_IM2COL)))
    return patches.astype(jnp.bfloat16)


def rsna_forward(params, x):
    """x: (B, S, H, W), S % 3 == 0  ->  (bowel, ext, kidney, liver, spleen)."""
    B, S, H, W = x.shape
    T = S // 3
    patches = _im2col_patches(x)

    kernel = functools.partial(_rsna_kernel, batch=B, seq=T, hidden=HIDDEN, hw=H * W)
    logits = pl.pallas_call(
        kernel,
        out_shape=jax.ShapeDtypeStruct((B, HEAD_PAD), jnp.float32),
    )(
        patches, params["conv_w"], params["conv_b"],
        params["wi0"], params["bi0"], params["wh0"], params["bh0"],
        params["wi1"], params["bi1"], params["wh1"], params["bh1"],
        params["att_w"], params["att_b"], params["att_v"],
        params["head_w"], params["head_b"],
    )

    outs = []
    o = 0
    for d in HEAD_DIMS:
        outs.append(logits[:, o:o + d])
        o += d
    # infer=False -> raw logits (no sigmoid / softmax), matching the reference.
    return tuple(outs)


# ----------------------------- parameter init --------------------------------
def _w(key, shape, scale=0.05):
    return scale * jax.random.normal(key, shape, jnp.float32)


def _block_diag(a, b):
    """[[a, 0], [0, b]]  with a, b of shape (hd, 3*hd)."""
    return jnp.concatenate(
        [jnp.concatenate([a, jnp.zeros_like(b)], axis=1),
         jnp.concatenate([jnp.zeros_like(a), b], axis=1)], axis=0)


def init_params(key):
    """Raw per-direction weights (transpose of torch's (3*hd, in) layout; gate
    order r,z,n and separate bi/bh biases match torch), packed for the kernel:
    W_ih fwd|bwd concatenated along N, W_hh as block-diagonal, bf16 operands."""
    ks = jax.random.split(key, 12)
    D3 = 3 * HIDDEN
    bf = jnp.bfloat16
    z = lambda *s: jnp.zeros(s, jnp.float32)

    conv_w = _w(ks[0], (K_IM2COL, CNN_FEAT))
    wi0f, wi0b = _w(ks[1], (CNN_FEAT, D3)), _w(ks[2], (CNN_FEAT, D3))
    wh0f, wh0b = _w(ks[3], (HIDDEN, D3)), _w(ks[4], (HIDDEN, D3))
    wi1f, wi1b = _w(ks[5], (BI_HIDDEN, D3)), _w(ks[6], (BI_HIDDEN, D3))
    wh1f, wh1b = _w(ks[7], (HIDDEN, D3)), _w(ks[8], (HIDDEN, D3))
    head_w = _w(ks[11], (BI_HIDDEN, HEAD_TOTAL))

    return dict(
        # surrogate backbone conv: (3,3,Cin=3,Cout) flattened & K-padded 27->32
        conv_w=jnp.pad(conv_w, ((0, K_PAD - K_IM2COL), (0, 0))).astype(bf),
        conv_b=z(1, CNN_FEAT),
        # GRU layer 0 (input CNN_FEAT)
        wi0=jnp.concatenate([wi0f, wi0b], axis=1).astype(bf),   # (64, 768)
        bi0=z(1, 2 * D3),
        wh0=_block_diag(wh0f, wh0b).astype(bf),                 # (256, 768)
        bh0=z(1, 2 * D3),
        # GRU layer 1 (input = bidirectional output, 2*HIDDEN)
        wi1=jnp.concatenate([wi1f, wi1b], axis=1).astype(bf),   # (256, 768)
        bi1=z(1, 2 * D3),
        wh1=_block_diag(wh1f, wh1b).astype(bf),
        bh1=z(1, 2 * D3),
        # MLP attention: proj_w (bias) + proj_v (no bias)
        att_w=_w(ks[9], (BI_HIDDEN, BI_HIDDEN)).astype(bf),
        att_b=z(1, BI_HIDDEN),
        att_v=_w(ks[10], (BI_HIDDEN, 1)).astype(bf),
        # fused heads [bowel(1)|ext(1)|kidney(3)|liver(3)|spleen(3)], lane-padded
        head_w=jnp.pad(head_w, ((0, 0), (0, HEAD_PAD - HEAD_TOTAL))).astype(bf),
        head_b=z(1, HEAD_PAD),
    )


# ----------------------------- main ------------------------------------------
if __name__ == "__main__":
    key = jax.random.PRNGKey(0)
    kx, kp = jax.random.split(key)

    x = jax.random.normal(kx, (BATCH, SEQ_LEN, IMG_H, IMG_W), jnp.float32)
    params = init_params(kp)

    fwd = jax.jit(rsna_forward)
    bowel, extrav, kidney, liver, spleen = fwd(params, x)
    jax.block_until_ready((bowel, extrav, kidney, liver, spleen))

    assert bowel.shape == (BATCH, 1)
    assert extrav.shape == (BATCH, 1)
    assert kidney.shape == (BATCH, 3)
    assert liver.shape == (BATCH, 3)
    assert spleen.shape == (BATCH, 3)
    print("KERNEL_OK")
</pallas_src>

<mosaic_0001>
module attributes {stable_mosaic.version = 11 : i64} {
  func.func @_rsna_kernel(%arg0: memref<1024x32xbf16, #tpu.memory_space<vmem>>, %arg1: memref<32x64xbf16, #tpu.memory_space<vmem>>, %arg2: memref<1x64xf32, #tpu.memory_space<vmem>>, %arg3: memref<64x768xbf16, #tpu.memory_space<vmem>>, %arg4: memref<1x768xf32, #tpu.memory_space<vmem>>, %arg5: memref<256x768xbf16, #tpu.memory_space<vmem>>, %arg6: memref<1x768xf32, #tpu.memory_space<vmem>>, %arg7: memref<256x768xbf16, #tpu.memory_space<vmem>>, %arg8: memref<1x768xf32, #tpu.memory_space<vmem>>, %arg9: memref<256x768xbf16, #tpu.memory_space<vmem>>, %arg10: memref<1x768xf32, #tpu.memory_space<vmem>>, %arg11: memref<256x256xbf16, #tpu.memory_space<vmem>>, %arg12: memref<1x256xf32, #tpu.memory_space<vmem>>, %arg13: memref<256x1xbf16, #tpu.memory_space<vmem>>, %arg14: memref<256x128xbf16, #tpu.memory_space<vmem>>, %arg15: memref<1x128xf32, #tpu.memory_space<vmem>>, %arg16: memref<2x128xf32, #tpu.memory_space<vmem>>) attributes {dimension_semantics = [], scalar_prefetch = 0 : i64, scratch_operands = 0 : i64, tpu.core_type = #tpu.core_type<tc>} {
    %c0 = arith.constant 0 : index
    %c0_0 = arith.constant 0 : index
    %0 = vector.load %arg0[%c0, %c0_0] : memref<1024x32xbf16, #tpu.memory_space<vmem>>, vector<1024x32xbf16>
    %c0_1 = arith.constant 0 : index
    %c0_2 = arith.constant 0 : index
    %1 = vector.load %arg1[%c0_1, %c0_2] : memref<32x64xbf16, #tpu.memory_space<vmem>>, vector<32x64xbf16>
    %cst = arith.constant dense<0.000000e+00> : vector<1024x64xf32>
    %2 = tpu.matmul %0, %1, %cst {dimension_numbers = #tpu.dot_dimension_numbers<[1], [0], [0], [1], [0, 0, 1, 1], [], []>} : vector<1024x32xbf16>, vector<32x64xbf16>, vector<1024x64xf32> -> vector<1024x64xf32>
    %c0_3 = arith.constant 0 : index
    %c0_4 = arith.constant 0 : index
    %3 = vector.load %arg2[%c0_3, %c0_4] : memref<1x64xf32, #tpu.memory_space<vmem>>, vector<1x64xf32>
    %4 = vector.broadcast %3 : vector<1x64xf32> to vector<1024x64xf32>
    %5 = arith.addf %2, %4 : vector<1024x64xf32>
    %cst_5 = arith.constant 0.000000e+00 : f32
    %6 = vector.broadcast %cst_5 : f32 to vector<1024x64xf32>
    %7 = arith.maximumf %5, %6 : vector<1024x64xf32>
    %8 = vector.shape_cast %7 : vector<1024x64xf32> to vector<4x256x64xf32>
    %cst_6 = arith.constant dense<0.000000e+00> : vector<4x64xf32>
    %9 = vector.multi_reduction <add>, %8, %cst_6 [1] : vector<4x256x64xf32> to vector<4x64xf32>
    %cst_7 = arith.constant 3.906250e-03 : f32
    %10 = vector.broadcast %cst_7 : f32 to vector<4x64xf32>
    %11 = arith.mulf %9, %10 : vector<4x64xf32>
    %12 = arith.truncf %11 : vector<4x64xf32> to vector<4x64xbf16>
    %c0_8 = arith.constant 0 : index
    %c0_9 = arith.constant 0 : index
    %13 = vector.load %arg3[%c0_8, %c0_9] : memref<64x768xbf16, #tpu.memory_space<vmem>>, vector<64x768xbf16>
    %cst_10 = arith.constant dense<0.000000e+00> : vector<4x768xf32>
    %14 = tpu.matmul %12, %13, %cst_10 {dimension_numbers = #tpu.dot_dimension_numbers<[1], [0], [0], [1], [0, 0, 1, 1], [], []>} : vector<4x64xbf16>, vector<64x768xbf16>, vector<4x768xf32> -> vector<4x768xf32>
    %c0_11 = arith.constant 0 : index
    %c0_12 = arith.constant 0 : index
    %15 = vector.load %arg4[%c0_11, %c0_12] : memref<1x768xf32, #tpu.memory_space<vmem>>, vector<1x768xf32>
    %16 = vector.broadcast %15 : vector<1x768xf32> to vector<4x768xf32>
    %17 = arith.addf %14, %16 : vector<4x768xf32>
    %c0_13 = arith.constant 0 : index
    %c0_14 = arith.constant 0 : index
    %18 = vector.load %arg5[%c0_13, %c0_14] : memref<256x768xbf16, #tpu.memory_space<vmem>>, vector<256x768xbf16>
    %c0_15 = arith.constant 0 : index
    %c0_16 = arith.constant 0 : index
    %19 = vector.load %arg6[%c0_15, %c0_16] : memref<1x768xf32, #tpu.memory_space<vmem>>, vector<1x768xf32>
    %cst_17 = arith.constant 0.000000e+00 : f32
    %20 = vector.broadcast %cst_17 : f32 to vector<2x256xf32>
    %21 = arith.truncf %20 : vector<2x256xf32> to vector<2x256xbf16>
    %cst_18 = arith.constant dense<0.000000e+00> : vector<2x768xf32>
    %22 = tpu.matmul %21, %18, %cst_18 {dimension_numbers = #tpu.dot_dimension_numbers<[1], [0], [0], [1], [0, 0, 1, 1], [], []>} : vector<2x256xbf16>, vector<256x768xbf16>, vector<2x768xf32> -> vector<2x768xf32>
    %23 = vector.broadcast %19 : vector<1x768xf32> to vector<2x768xf32>
    %24 = arith.addf %22, %23 : vector<2x768xf32>
    %25 = vector.extract_strided_slice %17 {offsets = [0, 0], sizes = [2, 384], strides = [1, 1]} : vector<4x768xf32> to vector<2x384xf32>
    %26 = vector.extract_strided_slice %17 {offsets = [2, 384], sizes = [2, 384], strides = [1, 1]} : vector<4x768xf32> to vector<2x384xf32>
    %27 = tpu.concatenate %25, %26 in 1 : vector<2x384xf32>, vector<2x384xf32> -> vector<2x768xf32>
    %28 = arith.addf %27, %24 : vector<2x768xf32>
    %29 = vector.extract_strided_slice %28 {offsets = [0, 0], sizes = [2, 128], strides = [1, 1]} : vector<2x768xf32> to vector<2x128xf32>
    %30 = vector.extract_strided_slice %28 {offsets = [0, 384], sizes = [2, 128], strides = [1, 1]} : vector<2x768xf32> to vector<2x128xf32>
    %31 = tpu.concatenate %29, %30 in 1 : vector<2x128xf32>, vector<2x128xf32> -> vector<2x256xf32>
    %cst_19 = arith.constant 5.000000e-01 : f32
    %32 = vector.broadcast %cst_19 : f32 to vector<2x256xf32>
    %33 = arith.mulf %32, %31 : vector<2x256xf32>
    %34 = math.tanh %33 : vector<2x256xf32>
    %cst_20 = arith.constant 1.000000e+00 : f32
    %35 = vector.broadcast %cst_20 : f32 to vector<2x256xf32>
    %36 = arith.addf %34, %35 : vector<2x256xf32>
    %cst_21 = arith.constant 5.000000e-01 : f32
    %37 = vector.broadcast %cst_21 : f32 to vector<2x256xf32>
    %38 = arith.mulf %37, %36 : vector<2x256xf32>
    %39 = vector.extract_strided_slice %28 {offsets = [0, 128], sizes = [2, 128], strides = [1, 1]} : vector<2x768xf32> to vector<2x128xf32>
    %40 = vector.extract_strided_slice %28 {offsets = [0, 512], sizes = [2, 128], strides = [1, 1]} : vector<2x768xf32> to vector<2x128xf32>
    %41 = tpu.concatenate %39, %40 in 1 : vector<2x128xf32>, vector<2x128xf32> -> vector<2x256xf32>
    %cst_22 = arith.constant 5.000000e-01 : f32
    %42 = vector.broadcast %cst_22 : f32 to vector<2x256xf32>
    %43 = arith.mulf %42, %41 : vector<2x256xf32>
    %44 = math.tanh %43 : vector<2x256xf32>
    %cst_23 = arith.constant 1.000000e+00 : f32
    %45 = vector.broadcast %cst_23 : f32 to vector<2x256xf32>
    %46 = arith.addf %44, %45 : vector<2x256xf32>
    %cst_24 = arith.constant 5.000000e-01 : f32
    %47 = vector.broadcast %cst_24 : f32 to vector<2x256xf32>
    %48 = arith.mulf %47, %46 : vector<2x256xf32>
    %49 = vector.extract_strided_slice %27 {offsets = [0, 256], sizes = [2, 128], strides = [1, 1]} : vector<2x768xf32> to vector<2x128xf32>
    %50 = vector.extract_strided_slice %27 {offsets = [0, 640], sizes = [2, 128], strides = [1, 1]} : vector<2x768xf32> to vector<2x128xf32>
    %51 = tpu.concatenate %49, %50 in 1 : vector<2x128xf32>, vector<2x128xf32> -> vector<2x256xf32>
    %52 = vector.extract_strided_slice %24 {offsets = [0, 256], sizes = [2, 128], strides = [1, 1]} : vector<2x768xf32> to vector<2x128xf32>
    %53 = vector.extract_strided_slice %24 {offsets = [0, 640], sizes = [2, 128], strides = [1, 1]} : vector<2x768xf32> to vector<2x128xf32>
    %54 = tpu.concatenate %52, %53 in 1 : vector<2x128xf32>, vector<2x128xf32> -> vector<2x256xf32>
    %55 = arith.mulf %38, %54 : vector<2x256xf32>
    %56 = arith.addf %51, %55 : vector<2x256xf32>
    %57 = math.tanh %56 : vector<2x256xf32>
    %cst_25 = arith.constant 1.000000e+00 : f32
    %58 = vector.broadcast %cst_25 : f32 to vector<2x256xf32>
    %59 = arith.subf %58, %48 : vector<2x256xf32>
    %60 = arith.mulf %59, %57 : vector<2x256xf32>
    %61 = arith.mulf %48, %20 : vector<2x256xf32>
    %62 = arith.addf %60, %61 : vector<2x256xf32>
    %63 = vector.extract_strided_slice %62 {offsets = [0, 0], sizes = [2, 128], strides = [1, 1]} : vector<2x256xf32> to vector<2x128xf32>
    %64 = vector.extract_strided_slice %62 {offsets = [0, 128], sizes = [2, 128], strides = [1, 1]} : vector<2x256xf32> to vector<2x128xf32>
    %65 = arith.truncf %62 : vector<2x256xf32> to vector<2x256xbf16>
    %cst_26 = arith.constant dense<0.000000e+00> : vector<2x768xf32>
    %66 = tpu.matmul %65, %18, %cst_26 {dimension_numbers = #tpu.dot_dimension_numbers<[1], [0], [0], [1], [0, 0, 1, 1], [], []>} : vector<2x256xbf16>, vector<256x768xbf16>, vector<2x768xf32> -> vector<2x768xf32>
    %67 = vector.broadcast %19 : vector<1x768xf32> to vector<2x768xf32>
    %68 = arith.addf %66, %67 : vector<2x768xf32>
    %69 = vector.extract_strided_slice %17 {offsets = [2, 0], sizes = [2, 384], strides = [1, 1]} : vector<4x768xf32> to vector<2x384xf32>
    %70 = vector.extract_strided_slice %17 {offsets = [0, 384], sizes = [2, 384], strides = [1, 1]} : vector<4x768xf32> to vector<2x384xf32>
    %71 = tpu.concatenate %69, %70 in 1 : vector<2x384xf32>, vector<2x384xf32> -> vector<2x768xf32>
    %72 = arith.addf %71, %68 : vector<2x768xf32>
    %73 = vector.extract_strided_slice %72 {offsets = [0, 0], sizes = [2, 128], strides = [1, 1]} : vector<2x768xf32> to vector<2x128xf32>
    %74 = vector.extract_strided_slice %72 {offsets = [0, 384], sizes = [2, 128], strides = [1, 1]} : vector<2x768xf32> to vector<2x128xf32>
    %75 = tpu.concatenate %73, %74 in 1 : vector<2x128xf32>, vector<2x128xf32> -> vector<2x256xf32>
    %cst_27 = arith.constant 5.000000e-01 : f32
    %76 = vector.broadcast %cst_27 : f32 to vector<2x256xf32>
    %77 = arith.mulf %76, %75 : vector<2x256xf32>
    %78 = math.tanh %77 : vector<2x256xf32>
    %cst_28 = arith.constant 1.000000e+00 : f32
    %79 = vector.broadcast %cst_28 : f32 to vector<2x256xf32>
    %80 = arith.addf %78, %79 : vector<2x256xf32>
    %cst_29 = arith.constant 5.000000e-01 : f32
    %81 = vector.broadcast %cst_29 : f32 to vector<2x256xf32>
    %82 = arith.mulf %81, %80 : vector<2x256xf32>
    %83 = vector.extract_strided_slice %72 {offsets = [0, 128], sizes = [2, 128], strides = [1, 1]} : vector<2x768xf32> to vector<2x128xf32>
    %84 = vector.extract_strided_slice %72 {offsets = [0, 512], sizes = [2, 128], strides = [1, 1]} : vector<2x768xf32> to vector<2x128xf32>
    %85 = tpu.concatenate %83, %84 in 1 : vector<2x128xf32>, vector<2x128xf32> -> vector<2x256xf32>
    %cst_30 = arith.constant 5.000000e-01 : f32
    %86 = vector.broadcast %cst_30 : f32 to vector<2x256xf32>
    %87 = arith.mulf %86, %85 : vector<2x256xf32>
    %88 = math.tanh %87 : vector<2x256xf32>
    %cst_31 = arith.constant 1.000000e+00 : f32
    %89 = vector.broadcast %cst_31 : f32 to vector<2x256xf32>
    %90 = arith.addf %88, %89 : vector<2x256xf32>
    %cst_32 = arith.constant 5.000000e-01 : f32
    %91 = vector.broadcast %cst_32 : f32 to vector<2x256xf32>
    %92 = arith.mulf %91, %90 : vector<2x256xf32>
    %93 = vector.extract_strided_slice %71 {offsets = [0, 256], sizes = [2, 128], strides = [1, 1]} : vector<2x768xf32> to vector<2x128xf32>
    %94 = vector.extract_strided_slice %71 {offsets = [0, 640], sizes = [2, 128], strides = [1, 1]} : vector<2x768xf32> to vector<2x128xf32>
    %95 = tpu.concatenate %93, %94 in 1 : vector<2x128xf32>, vector<2x128xf32> -> vector<2x256xf32>
    %96 = vector.extract_strided_slice %68 {offsets = [0, 256], sizes = [2, 128], strides = [1, 1]} : vector<2x768xf32> to vector<2x128xf32>
    %97 = vector.extract_strided_slice %68 {offsets = [0, 640], sizes = [2, 128], strides = [1, 1]} : vector<2x768xf32> to vector<2x128xf32>
    %98 = tpu.concatenate %96, %97 in 1 : vector<2x128xf32>, vector<2x128xf32> -> vector<2x256xf32>
    %99 = arith.mulf %82, %98 : vector<2x256xf32>
    %100 = arith.addf %95, %99 : vector<2x256xf32>
    %101 = math.tanh %100 : vector<2x256xf32>
    %cst_33 = arith.constant 1.000000e+00 : f32
    %102 = vector.broadcast %cst_33 : f32 to vector<2x256xf32>
    %103 = arith.subf %102, %92 : vector<2x256xf32>
    %104 = arith.mulf %103, %101 : vector<2x256xf32>
    %105 = arith.mulf %92, %62 : vector<2x256xf32>
    %106 = arith.addf %104, %105 : vector<2x256xf32>
    %107 = vector.extract_strided_slice %106 {offsets = [0, 0], sizes = [2, 128], strides = [1, 1]} : vector<2x256xf32> to vector<2x128xf32>
    %108 = vector.extract_strided_slice %106 {offsets = [0, 128], sizes = [2, 128], strides = [1, 1]} : vector<2x256xf32> to vector<2x128xf32>
    %109 = tpu.concatenate %63, %108 in 1 : vector<2x128xf32>, vector<2x128xf32> -> vector<2x256xf32>
    %110 = tpu.concatenate %107, %64 in 1 : vector<2x128xf32>, vector<2x128xf32> -> vector<2x256xf32>
    %111 = tpu.concatenate %109, %110 in 0 : vector<2x256xf32>, vector<2x256xf32> -> vector<4x256xf32>
    %112 = arith.truncf %111 : vector<4x256xf32> to vector<4x256xbf16>
    %c0_34 = arith.constant 0 : index
    %c0_35 = arith.constant 0 : index
    %113 = vector.load %arg7[%c0_34, %c0_35] : memref<256x768xbf16, #tpu.memory_space<vmem>>, vector<256x768xbf16>
    %cst_36 = arith.constant dense<0.000000e+00> : vector<4x768xf32>
    %114 = tpu.matmul %112, %113, %cst_36 {dimension_numbers = #tpu.dot_dimension_numbers<[1], [0], [0], [1], [0, 0, 1, 1], [], []>} : vector<4x256xbf16>, vector<256x768xbf16>, vector<4x768xf32> -> vector<4x768xf32>
    %c0_37 = arith.constant 0 : index
    %c0_38 = arith.constant 0 : index
    %115 = vector.load %arg8[%c0_37, %c0_38] : memref<1x768xf32, #tpu.memory_space<vmem>>, vector<1x768xf32>
    %116 = vector.broadcast %115 : vector<1x768xf32> to vector<4x768xf32>
    %117 = arith.addf %114, %116 : vector<4x768xf32>
    %c0_39 = arith.constant 0 : index
    %c0_40 = arith.constant 0 : index
    %118 = vector.load %arg9[%c0_39, %c0_40] : memref<256x768xbf16, #tpu.memory_space<vmem>>, vector<256x768xbf16>
    %c0_41 = arith.constant 0 : index
    %c0_42 = arith.constant 0 : index
    %119 = vector.load %arg10[%c0_41, %c0_42] : memref<1x768xf32, #tpu.memory_space<vmem>>, vector<1x768xf32>
    %cst_43 = arith.constant 0.000000e+00 : f32
    %120 = vector.broadcast %cst_43 : f32 to vector<2x256xf32>
    %121 = arith.truncf %120 : vector<2x256xf32> to vector<2x256xbf16>
    %cst_44 = arith.constant dense<0.000000e+00> : vector<2x768xf32>
    %122 = tpu.matmul %121, %118, %cst_44 {dimension_numbers = #tpu.dot_dimension_numbers<[1], [0], [0], [1], [0, 0, 1, 1], [], []>} : vector<2x256xbf16>, vector<256x768xbf16>, vector<2x768xf32> -> vector<2x768xf32>
    %123 = vector.broadcast %119 : vector<1x768xf32> to vector<2x768xf32>
    %124 = arith.addf %122, %123 : vector<2x768xf32>
    %125 = vector.extract_strided_slice %117 {offsets = [0, 0], sizes = [2, 384], strides = [1, 1]} : vector<4x768xf32> to vector<2x384xf32>
    %126 = vector.extract_strided_slice %117 {offsets = [2, 384], sizes = [2, 384], strides = [1, 1]} : vector<4x768xf32> to vector<2x384xf32>
    %127 = tpu.concatenate %125, %126 in 1 : vector<2x384xf32>, vector<2x384xf32> -> vector<2x768xf32>
    %128 = arith.addf %127, %124 : vector<2x768xf32>
    %129 = vector.extract_strided_slice %128 {offsets = [0, 0], sizes = [2, 128], strides = [1, 1]} : vector<2x768xf32> to vector<2x128xf32>
    %130 = vector.extract_strided_slice %128 {offsets = [0, 384], sizes = [2, 128], strides = [1, 1]} : vector<2x768xf32> to vector<2x128xf32>
    %131 = tpu.concatenate %129, %130 in 1 : vector<2x128xf32>, vector<2x128xf32> -> vector<2x256xf32>
    %cst_45 = arith.constant 5.000000e-01 : f32
    %132 = vector.broadcast %cst_45 : f32 to vector<2x256xf32>
    %133 = arith.mulf %132, %131 : vector<2x256xf32>
    %134 = math.tanh %133 : vector<2x256xf32>
    %cst_46 = arith.constant 1.000000e+00 : f32
    %135 = vector.broadcast %cst_46 : f32 to vector<2x256xf32>
    %136 = arith.addf %134, %135 : vector<2x256xf32>
    %cst_47 = arith.constant 5.000000e-01 : f32
    %137 = vector.broadcast %cst_47 : f32 to vector<2x256xf32>
    %138 = arith.mulf %137, %136 : vector<2x256xf32>
    %139 = vector.extract_strided_slice %128 {offsets = [0, 128], sizes = [2, 128], strides = [1, 1]} : vector<2x768xf32> to vector<2x128xf32>
    %140 = vector.extract_strided_slice %128 {offsets = [0, 512], sizes = [2, 128], strides = [1, 1]} : vector<2x768xf32> to vector<2x128xf32>
    %141 = tpu.concatenate %139, %140 in 1 : vector<2x128xf32>, vector<2x128xf32> -> vector<2x256xf32>
    %cst_48 = arith.constant 5.000000e-01 : f32
    %142 = vector.broadcast %cst_48 : f32 to vector<2x256xf32>
    %143 = arith.mulf %142, %141 : vector<2x256xf32>
    %144 = math.tanh %143 : vector<2x256xf32>
    %cst_49 = arith.constant 1.000000e+00 : f32
    %145 = vector.broadcast %cst_49 : f32 to vector<2x256xf32>
    %146 = arith.addf %144, %145 : vector<2x256xf32>
    %cst_50 = arith.constant 5.000000e-01 : f32
    %147 = vector.broadcast %cst_50 : f32 to vector<2x256xf32>
    %148 = arith.mulf %147, %146 : vector<2x256xf32>
    %149 = vector.extract_strided_slice %127 {offsets = [0, 256], sizes = [2, 128], strides = [1, 1]} : vector<2x768xf32> to vector<2x128xf32>
    %150 = vector.extract_strided_slice %127 {offsets = [0, 640], sizes = [2, 128], strides = [1, 1]} : vector<2x768xf32> to vector<2x128xf32>
    %151 = tpu.concatenate %149, %150 in 1 : vector<2x128xf32>, vector<2x128xf32> -> vector<2x256xf32>
    %152 = vector.extract_strided_slice %124 {offsets = [0, 256], sizes = [2, 128], strides = [1, 1]} : vector<2x768xf32> to vector<2x128xf32>
    %153 = vector.extract_strided_slice %124 {offsets = [0, 640], sizes = [2, 128], strides = [1, 1]} : vector<2x768xf32> to vector<2x128xf32>
    %154 = tpu.concatenate %152, %153 in 1 : vector<2x128xf32>, vector<2x128xf32> -> vector<2x256xf32>
    %155 = arith.mulf %138, %154 : vector<2x256xf32>
    %156 = arith.addf %151, %155 : vector<2x256xf32>
    %157 = math.tanh %156 : vector<2x256xf32>
    %cst_51 = arith.constant 1.000000e+00 : f32
    %158 = vector.broadcast %cst_51 : f32 to vector<2x256xf32>
    %159 = arith.subf %158, %148 : vector<2x256xf32>
    %160 = arith.mulf %159, %157 : vector<2x256xf32>
    %161 = arith.mulf %148, %120 : vector<2x256xf32>
    %162 = arith.addf %160, %161 : vector<2x256xf32>
    %163 = vector.extract_strided_slice %162 {offsets = [0, 0], sizes = [2, 128], strides = [1, 1]} : vector<2x256xf32> to vector<2x128xf32>
    %164 = vector.extract_strided_slice %162 {offsets = [0, 128], sizes = [2, 128], strides = [1, 1]} : vector<2x256xf32> to vector<2x128xf32>
    %165 = arith.truncf %162 : vector<2x256xf32> to vector<2x256xbf16>
    %cst_52 = arith.constant dense<0.000000e+00> : vector<2x768xf32>
    %166 = tpu.matmul %165, %118, %cst_52 {dimension_numbers = #tpu.dot_dimension_numbers<[1], [0], [0], [1], [0, 0, 1, 1], [], []>} : vector<2x256xbf16>, vector<256x768xbf16>, vector<2x768xf32> -> vector<2x768xf32>
    %167 = vector.broadcast %119 : vector<1x768xf32> to vector<2x768xf32>
    %168 = arith.addf %166, %167 : vector<2x768xf32>
    %169 = vector.extract_strided_slice %117 {offsets = [2, 0], sizes = [2, 384], strides = [1, 1]} : vector<4x768xf32> to vector<2x384xf32>
    %170 = vector.extract_strided_slice %117 {offsets = [0, 384], sizes = [2, 384], strides = [1, 1]} : vector<4x768xf32> to vector<2x384xf32>
    %171 = tpu.concatenate %169, %170 in 1 : vector<2x384xf32>, vector<2x384xf32> -> vector<2x768xf32>
    %172 = arith.addf %171, %168 : vector<2x768xf32>
    %173 = vector.extract_strided_slice %172 {offsets = [0, 0], sizes = [2, 128], strides = [1, 1]} : vector<2x768xf32> to vector<2x128xf32>
    %174 = vector.extract_strided_slice %172 {offsets = [0, 384], sizes = [2, 128], strides = [1, 1]} : vector<2x768xf32> to vector<2x128xf32>
    %175 = tpu.concatenate %173, %174 in 1 : vector<2x128xf32>, vector<2x128xf32> -> vector<2x256xf32>
    %cst_53 = arith.constant 5.000000e-01 : f32
    %176 = vector.broadcast %cst_53 : f32 to vector<2x256xf32>
    %177 = arith.mulf %176, %175 : vector<2x256xf32>
    %178 = math.tanh %177 : vector<2x256xf32>
    %cst_54 = arith.constant 1.000000e+00 : f32
    %179 = vector.broadcast %cst_54 : f32 to vector<2x256xf32>
    %180 = arith.addf %178, %179 : vector<2x256xf32>
    %cst_55 = arith.constant 5.000000e-01 : f32
    %181 = vector.broadcast %cst_55 : f32 to vector<2x256xf32>
    %182 = arith.mulf %181, %180 : vector<2x256xf32>
    %183 = vector.extract_strided_slice %172 {offsets = [0, 128], sizes = [2, 128], strides = [1, 1]} : vector<2x768xf32> to vector<2x128xf32>
    %184 = vector.extract_strided_slice %172 {offsets = [0, 512], sizes = [2, 128], strides = [1, 1]} : vector<2x768xf32> to vector<2x128xf32>
    %185 = tpu.concatenate %183, %184 in 1 : vector<2x128xf32>, vector<2x128xf32> -> vector<2x256xf32>
    %cst_56 = arith.constant 5.000000e-01 : f32
    %186 = vector.broadcast %cst_56 : f32 to vector<2x256xf32>
    %187 = arith.mulf %186, %185 : vector<2x256xf32>
    %188 = math.tanh %187 : vector<2x256xf32>
    %cst_57 = arith.constant 1.000000e+00 : f32
    %189 = vector.broadcast %cst_57 : f32 to vector<2x256xf32>
    %190 = arith.addf %188, %189 : vector<2x256xf32>
    %cst_58 = arith.constant 5.000000e-01 : f32
    %191 = vector.broadcast %cst_58 : f32 to vector<2x256xf32>
    %192 = arith.mulf %191, %190 : vector<2x256xf32>
    %193 = vector.extract_strided_slice %171 {offsets = [0, 256], sizes = [2, 128], strides = [1, 1]} : vector<2x768xf32> to vector<2x128xf32>
    %194 = vector.extract_strided_slice %171 {offsets = [0, 640], sizes = [2, 128], strides = [1, 1]} : vector<2x768xf32> to vector<2x128xf32>
    %195 = tpu.concatenate %193, %194 in 1 : vector<2x128xf32>, vector<2x128xf32> -> vector<2x256xf32>
    %196 = vector.extract_strided_slice %168 {offsets = [0, 256], sizes = [2, 128], strides = [1, 1]} : vector<2x768xf32> to vector<2x128xf32>
    %197 = vector.extract_strided_slice %168 {offsets = [0, 640], sizes = [2, 128], strides = [1, 1]} : vector<2x768xf32> to vector<2x128xf32>
    %198 = tpu.concatenate %196, %197 in 1 : vector<2x128xf32>, vector<2x128xf32> -> vector<2x256xf32>
    %199 = arith.mulf %182, %198 : vector<2x256xf32>
    %200 = arith.addf %195, %199 : vector<2x256xf32>
    %201 = math.tanh %200 : vector<2x256xf32>
    %cst_59 = arith.constant 1.000000e+00 : f32
    %202 = vector.broadcast %cst_59 : f32 to vector<2x256xf32>
    %203 = arith.subf %202, %192 : vector<2x256xf32>
    %204 = arith.mulf %203, %201 : vector<2x256xf32>
    %205 = arith.mulf %192, %162 : vector<2x256xf32>
    %206 = arith.addf %204, %205 : vector<2x256xf32>
    %207 = vector.extract_strided_slice %206 {offsets = [0, 0], sizes = [2, 128], strides = [1, 1]} : vector<2x256xf32> to vector<2x128xf32>
    %208 = vector.extract_strided_slice %206 {offsets = [0, 128], sizes = [2, 128], strides = [1, 1]} : vector<2x256xf32> to vector<2x128xf32>
    %209 = tpu.concatenate %163, %208 in 1 : vector<2x128xf32>, vector<2x128xf32> -> vector<2x256xf32>
    %210 = tpu.concatenate %207, %164 in 1 : vector<2x128xf32>, vector<2x128xf32> -> vector<2x256xf32>
    %211 = tpu.concatenate %209, %210 in 0 : vector<2x256xf32>, vector<2x256xf32> -> vector<4x256xf32>
    %212 = arith.truncf %211 : vector<4x256xf32> to vector<4x256xbf16>
    %c0_60 = arith.constant 0 : index
    %c0_61 = arith.constant 0 : index
    %213 = vector.load %arg11[%c0_60, %c0_61] : memref<256x256xbf16, #tpu.memory_space<vmem>>, vector<256x256xbf16>
    %cst_62 = arith.constant dense<0.000000e+00> : vector<4x256xf32>
    %214 = tpu.matmul %212, %213, %cst_62 {dimension_numbers = #tpu.dot_dimension_numbers<[1], [0], [0], [1], [0, 0, 1, 1], [], []>} : vector<4x256xbf16>, vector<256x256xbf16>, vector<4x256xf32> -> vector<4x256xf32>
    %c0_63 = arith.constant 0 : index
    %c0_64 = arith.constant 0 : index
    %215 = vector.load %arg12[%c0_63, %c0_64] : memref<1x256xf32, #tpu.memory_space<vmem>>, vector<1x256xf32>
    %216 = vector.broadcast %215 : vector<1x256xf32> to vector<4x256xf32>
    %217 = arith.addf %214, %216 : vector<4x256xf32>
    %218 = math.tanh %217 : vector<4x256xf32>
    %219 = arith.truncf %218 : vector<4x256xf32> to vector<4x256xbf16>
    %c0_65 = arith.constant 0 : index
    %c0_66 = arith.constant 0 : index
    %220 = vector.load %arg13[%c0_65, %c0_66] : memref<256x1xbf16, #tpu.memory_space<vmem>>, vector<256x1xbf16>
    %cst_67 = arith.constant dense<0.000000e+00> : vector<4x1xf32>
    %221 = tpu.matmul %219, %220, %cst_67 {dimension_numbers = #tpu.dot_dimension_numbers<[1], [0], [0], [1], [0, 0, 1, 1], [], []>} : vector<4x256xbf16>, vector<256x1xbf16>, vector<4x1xf32> -> vector<4x1xf32>
    %222 = vector.extract_strided_slice %221 {offsets = [0, 0], sizes = [2, 1], strides = [1, 1]} : vector<4x1xf32> to vector<2x1xf32>
    %223 = vector.extract_strided_slice %221 {offsets = [2, 0], sizes = [2, 1], strides = [1, 1]} : vector<4x1xf32> to vector<2x1xf32>
    %224 = arith.maximumf %222, %223 : vector<2x1xf32>
    %225 = arith.subf %222, %224 : vector<2x1xf32>
    %226 = math.exp %225 : vector<2x1xf32>
    %227 = arith.subf %223, %224 : vector<2x1xf32>
    %228 = math.exp %227 : vector<2x1xf32>
    %229 = arith.addf %226, %228 : vector<2x1xf32>
    %230 = tpu.reciprocal %229 {approx = true} : vector<2x1xf32> -> vector<2x1xf32>
    %231 = vector.extract_strided_slice %211 {offsets = [0, 0], sizes = [2, 256], strides = [1, 1]} : vector<4x256xf32> to vector<2x256xf32>
    %232 = arith.mulf %226, %230 : vector<2x1xf32>
    %233 = vector.broadcast %232 : vector<2x1xf32> to vector<2x256xf32>
    %234 = arith.mulf %231, %233 : vector<2x256xf32>
    %235 = vector.extract_strided_slice %211 {offsets = [2, 0], sizes = [2, 256], strides = [1, 1]} : vector<4x256xf32> to vector<2x256xf32>
    %236 = arith.mulf %228, %230 : vector<2x1xf32>
    %237 = vector.broadcast %236 : vector<2x1xf32> to vector<2x256xf32>
    %238 = arith.mulf %235, %237 : vector<2x256xf32>
    %239 = arith.addf %234, %238 : vector<2x256xf32>
    %240 = arith.truncf %239 : vector<2x256xf32> to vector<2x256xbf16>
    %c0_68 = arith.constant 0 : index
    %c0_69 = arith.constant 0 : index
    %241 = vector.load %arg14[%c0_68, %c0_69] : memref<256x128xbf16, #tpu.memory_space<vmem>>, vector<256x128xbf16>
    %cst_70 = arith.constant dense<0.000000e+00> : vector<2x128xf32>
    %242 = tpu.matmul %240, %241, %cst_70 {dimension_numbers = #tpu.dot_dimension_numbers<[1], [0], [0], [1], [0, 0, 1, 1], [], []>} : vector<2x256xbf16>, vector<256x128xbf16>, vector<2x128xf32> -> vector<2x128xf32>
    %c0_71 = arith.constant 0 : index
    %c0_72 = arith.constant 0 : index
    %243 = vector.load %arg15[%c0_71, %c0_72] : memref<1x128xf32, #tpu.memory_space<vmem>>, vector<1x128xf32>
    %244 = vector.broadcast %243 : vector<1x128xf32> to vector<2x128xf32>
    %245 = arith.addf %242, %244 : vector<2x128xf32>
    %c0_73 = arith.constant 0 : index
    %c0_74 = arith.constant 0 : index
    %246 = vector.load %arg16[%c0_73, %c0_74] : memref<2x128xf32, #tpu.memory_space<vmem>>, vector<2x128xf32>
    tpu.vector_store %arg16[%c0_73, %c0_74], %245 {strides = array<i32>} : memref<2x128xf32, #tpu.memory_space<vmem>>, vector<2x128xf32>,
    return
  }
}

</mosaic_0001>

<llo_original>
// kernel: rsna_forward.1
$region0: #{rsna_forward.1}
  #allocation0 [shape = 'u32[]', space=smem, size = 0x4, offset = 0x4, fixed_abs, tag = 'smem constant byte address 0x4 - core index']
  #allocation1 [shape = 'u32[72,128]{1,0:T(1,128)}', space=vmem, size = 0x9000, scoped, tag = 'internal scratch']
  %s0 = inlined_call_operand.vmem [shape: bf16[1024,32], index: 0, kind: input, shape index: {}]
  %s1 = inlined_call_operand.vmem [shape: bf16[32,64], index: 1, kind: input, shape index: {}]
  %s2 = inlined_call_operand.vmem [shape: f32[1,64], index: 2, kind: input, shape index: {}]
  %s3 = inlined_call_operand.vmem [shape: bf16[64,768], index: 3, kind: input, shape index: {}]
  %s4 = inlined_call_operand.vmem [shape: f32[1,768], index: 4, kind: input, shape index: {}]
  %s5 = inlined_call_operand.vmem [shape: bf16[256,768], index: 5, kind: input, shape index: {}]
  %s6 = inlined_call_operand.vmem [shape: f32[1,768], index: 6, kind: input, shape index: {}]
  %s7 = inlined_call_operand.vmem [shape: bf16[256,768], index: 7, kind: input, shape index: {}]
  %s8 = inlined_call_operand.vmem [shape: f32[1,768], index: 8, kind: input, shape index: {}]
  %s9 = inlined_call_operand.vmem [shape: bf16[256,768], index: 9, kind: input, shape index: {}]
  %s10 = inlined_call_operand.vmem [shape: f32[1,768], index: 10, kind: input, shape index: {}]
  %s11 = inlined_call_operand.vmem [shape: bf16[256,256], index: 11, kind: input, shape index: {}]
  %s12 = inlined_call_operand.vmem [shape: f32[1,256], index: 12, kind: input, shape index: {}]
  %s13 = inlined_call_operand.vmem [shape: bf16[256,1], index: 13, kind: input, shape index: {}]
  %s14 = inlined_call_operand.vmem [shape: bf16[256,128], index: 14, kind: input, shape index: {}]
  %s15 = inlined_call_operand.vmem [shape: f32[1,128], index: 15, kind: input, shape index: {}]
  %s16 = inlined_call_operand.vmem [shape: f32[2,128], index: 16, kind: output, shape index: {}]
  %s17 = sld [smem:[#allocation0]]
  $region74: #{rsna_forward.1} parent=0
    _
  %s19 = ssub.s32 1, %s17
  %s20 = scalar_select 0, %s19, %s17
  // Predicated region
  $region2: #{rsna_forward.1} parent=0 // pred_check
    _
  $region3: #{rsna_forward.1} parent=0 // pred_check_branch
    %22 = sbr.rel (0) target = $region5
  $region4: #{rsna_forward.1} parent=0 // pred_region
    _
  $region5: #{rsna_forward.1} parent=0 // pred_fallthru
    _
  // Predicated region
  $region6: #{rsna_forward.1} parent=0 // pred_check
    _
  $region7: #{rsna_forward.1} parent=0 // pred_check_branch
    %24 = sbr.rel (0) target = $region9
  $region8: #{rsna_forward.1} parent=0 // pred_region
    _
  $region9: #{rsna_forward.1} parent=0 // pred_fallthru
    _
  // Predicated region
  $region10: #{rsna_forward.1} parent=0 // pred_check
    _
  $region11: #{rsna_forward.1} parent=0 // pred_check_branch
    %26 = sbr.rel (0) target = $region13
  $region12: #{rsna_forward.1} parent=0 // pred_region
    _
  $region13: #{rsna_forward.1} parent=0 // pred_fallthru
    _
  // Predicated region
  $region14: #{rsna_forward.1} parent=0 // pred_check
    _
  $region15: #{rsna_forward.1} parent=0 // pred_check_branch
    %28 = sbr.rel (0) target = $region17
  $region16: #{rsna_forward.1} parent=0 // pred_region
    _
  $region17: #{rsna_forward.1} parent=0 // pred_fallthru
    _
  // Predicated region
  $region18: #{rsna_forward.1} parent=0 // pred_check
    _
  $region19: #{rsna_forward.1} parent=0 // pred_check_branch
    %30 = sbr.rel (0) target = $region21
  $region20: #{rsna_forward.1} parent=0 // pred_region
    _
  $region21: #{rsna_forward.1} parent=0 // pred_fallthru
    _
  // Predicated region
  $region22: #{rsna_forward.1} parent=0 // pred_check
    _
  $region23: #{rsna_forward.1} parent=0 // pred_check_branch
    %32 = sbr.rel (0) target = $region25
  $region24: #{rsna_forward.1} parent=0 // pred_region
    _
  $region25: #{rsna_forward.1} parent=0 // pred_fallthru
    _
  // Predicated region
  $region26: #{rsna_forward.1} parent=0 // pred_check
    _
  $region27: #{rsna_forward.1} parent=0 // pred_check_branch
    %34 = sbr.rel (0) target = $region29
  $region28: #{rsna_forward.1} parent=0 // pred_region
    _
  $region29: #{rsna_forward.1} parent=0 // pred_fallthru
    _
  // Predicated region
  $region30: #{rsna_forward.1} parent=0 // pred_check
    _
  $region31: #{rsna_forward.1} parent=0 // pred_check_branch
    %36 = sbr.rel (0) target = $region33
  $region32: #{rsna_forward.1} parent=0 // pred_region
    _
  $region33: #{rsna_forward.1} parent=0 // pred_fallthru
    _
  // Predicated region
  $region34: #{rsna_forward.1} parent=0 // pred_check
    _
  $region35: #{rsna_forward.1} parent=0 // pred_check_branch
    %38 = sbr.rel (0) target = $region37
  $region36: #{rsna_forward.1} parent=0 // pred_region
    _
  $region37: #{rsna_forward.1} parent=0 // pred_fallthru
    _
  // Predicated region
  $region38: #{rsna_forward.1} parent=0 // pred_check
    _
  $region39: #{rsna_forward.1} parent=0 // pred_check_branch
    %40 = sbr.rel (0) target = $region41
  $region40: #{rsna_forward.1} parent=0 // pred_region
    _
  $region41: #{rsna_forward.1} parent=0 // pred_fallthru
    _
  // Predicated region
  $region42: #{rsna_forward.1} parent=0 // pred_check
    _
  $region43: #{rsna_forward.1} parent=0 // pred_check_branch
    %42 = sbr.rel (0) target = $region45
  $region44: #{rsna_forward.1} parent=0 // pred_region
    _
  $region45: #{rsna_forward.1} parent=0 // pred_fallthru
    _
  // Predicated region
  $region46: #{rsna_forward.1} parent=0 // pred_check
    _
  $region47: #{rsna_forward.1} parent=0 // pred_check_branch
    %44 = sbr.rel (0) target = $region49
  $region48: #{rsna_forward.1} parent=0 // pred_region
    _
  $region49: #{rsna_forward.1} parent=0 // pred_fallthru
    _
  // Predicated region
  $region50: #{rsna_forward.1} parent=0 // pred_check
    _
  $region51: #{rsna_forward.1} parent=0 // pred_check_branch
    %46 = sbr.rel (0) target = $region53
  $region52: #{rsna_forward.1} parent=0 // pred_region
    _
  $region53: #{rsna_forward.1} parent=0 // pred_fallthru
    _
  // Predicated region
  $region54: #{rsna_forward.1} parent=0 // pred_check
    _
  $region55: #{rsna_forward.1} parent=0 // pred_check_branch
    %48 = sbr.rel (0) target = $region57
  $region56: #{rsna_forward.1} parent=0 // pred_region
    _
  $region57: #{rsna_forward.1} parent=0 // pred_fallthru
    _
  // Predicated region
  $region58: #{rsna_forward.1} parent=0 // pred_check
    _
  $region59: #{rsna_forward.1} parent=0 // pred_check_branch
    %50 = sbr.rel (0) target = $region61
  $region60: #{rsna_forward.1} parent=0 // pred_region
    _
  $region61: #{rsna_forward.1} parent=0 // pred_fallthru
    _
  // Predicated region
  $region62: #{rsna_forward.1} parent=0 // pred_check
    _
  $region63: #{rsna_forward.1} parent=0 // pred_check_branch
    %52 = sbr.rel (0) target = $region65
  $region64: #{rsna_forward.1} parent=0 // pred_region
    _
  $region65: #{rsna_forward.1} parent=0 // pred_fallthru
    _
  %v54 = vld [vmem:[%s0] sm:$0xf]
  %v55 = vld [vmem:[%s0 + $0x4] sm:$0xf]
  %v56 = vld [vmem:[%s0 + $0x8] sm:$0xf]
  %v57 = vld [vmem:[%s0 + $0xc] sm:$0xf]
  %v58 = vld [vmem:[%s0 + $0x10] sm:$0xf]
  %v59 = vld [vmem:[%s0 + $0x14] sm:$0xf]
  %v60 = vld [vmem:[%s0 + $0x18] sm:$0xf]
  %v61 = vld [vmem:[%s0 + $0x1c] sm:$0xf]
  %v62 = vld [vmem:[%s0 + $0x20] sm:$0xf]
  %v63 = vld [vmem:[%s0 + $0x24] sm:$0xf]
  %v64 = vld [vmem:[%s0 + $0x28] sm:$0xf]
  %v65 = vld [vmem:[%s0 + $0x2c] sm:$0xf]
  %v66 = vld [vmem:[%s0 + $0x30] sm:$0xf]
  %v67 = vld [vmem:[%s0 + $0x34] sm:$0xf]
  %v68 = vld [vmem:[%s0 + $0x38] sm:$0xf]
  %v69 = vld [vmem:[%s0 + $0x3c] sm:$0xf]
  %v70 = vld [vmem:[%s0 + $0x40] sm:$0xf]
  %v71 = vld [vmem:[%s0 + $0x44] sm:$0xf]
  %v72 = vld [vmem:[%s0 + $0x48] sm:$0xf]
  %v73 = vld [vmem:[%s0 + $0x4c] sm:$0xf]
  %v74 = vld [vmem:[%s0 + $0x50] sm:$0xf]
  %v75 = vld [vmem:[%s0 + $0x54] sm:$0xf]
  %v76 = vld [vmem:[%s0 + $0x58] sm:$0xf]
  %v77 = vld [vmem:[%s0 + $0x5c] sm:$0xf]
  %v78 = vld [vmem:[%s0 + $0x60] sm:$0xf]
  %v79 = vld [vmem:[%s0 + $0x64] sm:$0xf]
  %v80 = vld [vmem:[%s0 + $0x68] sm:$0xf]
  %v81 = vld [vmem:[%s0 + $0x6c] sm:$0xf]
  %v82 = vld [vmem:[%s0 + $0x70] sm:$0xf]
  %v83 = vld [vmem:[%s0 + $0x74] sm:$0xf]
  %v84 = vld [vmem:[%s0 + $0x78] sm:$0xf]
  %v85 = vld [vmem:[%s0 + $0x7c] sm:$0xf]
  %v86 = vld [vmem:[%s0 + $0x80] sm:$0xf]
  %v87 = vld [vmem:[%s0 + $0x84] sm:$0xf]
  %v88 = vld [vmem:[%s0 + $0x88] sm:$0xf]
  %v89 = vld [vmem:[%s0 + $0x8c] sm:$0xf]
  %v90 = vld [vmem:[%s0 + $0x90] sm:$0xf]
  %v91 = vld [vmem:[%s0 + $0x94] sm:$0xf]
  %v92 = vld [vmem:[%s0 + $0x98] sm:$0xf]
  %v93 = vld [vmem:[%s0 + $0x9c] sm:$0xf]
  %v94 = vld [vmem:[%s0 + $0xa0] sm:$0xf]
  %v95 = vld [vmem:[%s0 + $0xa4] sm:$0xf]
  %v96 = vld [vmem:[%s0 + $0xa8] sm:$0xf]
  %v97 = vld [vmem:[%s0 + $0xac] sm:$0xf]
  %v98 = vld [vmem:[%s0 + $0xb0] sm:$0xf]
  %v99 = vld [vmem:[%s0 + $0xb4] sm:$0xf]
  %v100 = vld [vmem:[%s0 + $0xb8] sm:$0xf]
  %v101 = vld [vmem:[%s0 + $0xbc] sm:$0xf]
  %v102 = vld [vmem:[%s0 + $0xc0] sm:$0xf]
  %v103 = vld [vmem:[%s0 + $0xc4] sm:$0xf]
  %v104 = vld [vmem:[%s0 + $0xc8] sm:$0xf]
  %v105 = vld [vmem:[%s0 + $0xcc] sm:$0xf]
  %v106 = vld [vmem:[%s0 + $0xd0] sm:$0xf]
  %v107 = vld [vmem:[%s0 + $0xd4] sm:$0xf]
  %v108 = vld [vmem:[%s0 + $0xd8] sm:$0xf]
  %v109 = vld [vmem:[%s0 + $0xdc] sm:$0xf]
  %v110 = vld [vmem:[%s0 + $0xe0] sm:$0xf]
  %v111 = vld [vmem:[%s0 + $0xe4] sm:$0xf]
  %v112 = vld [vmem:[%s0 + $0xe8] sm:$0xf]
  %v113 = vld [vmem:[%s0 + $0xec] sm:$0xf]
  %v114 = vld [vmem:[%s0 + $0xf0] sm:$0xf]
  %v115 = vld [vmem:[%s0 + $0xf4] sm:$0xf]
  %v116 = vld [vmem:[%s0 + $0xf8] sm:$0xf]
  %v117 = vld [vmem:[%s0 + $0xfc] sm:$0xf]
  %v118 = vld [vmem:[%s0 + $0x100] sm:$0xf]
  %v119 = vld [vmem:[%s0 + $0x104] sm:$0xf]
  %v120 = vld [vmem:[%s0 + $0x108] sm:$0xf]
  %v121 = vld [vmem:[%s0 + $0x10c] sm:$0xf]
  %v122 = vld [vmem:[%s0 + $0x110] sm:$0xf]
  %v123 = vld [vmem:[%s0 + $0x114] sm:$0xf]
  %v124 = vld [vmem:[%s0 + $0x118] sm:$0xf]
  %v125 = vld [vmem:[%s0 + $0x11c] sm:$0xf]
  %v126 = vld [vmem:[%s0 + $0x120] sm:$0xf]
  %v127 = vld [vmem:[%s0 + $0x124] sm:$0xf]
  %v128 = vld [vmem:[%s0 + $0x128] sm:$0xf]
  %v129 = vld [vmem:[%s0 + $0x12c] sm:$0xf]
  %v130 = vld [vmem:[%s0 + $0x130] sm:$0xf]
  %v131 = vld [vmem:[%s0 + $0x134] sm:$0xf]
  %v132 = vld [vmem:[%s0 + $0x138] sm:$0xf]
  %v133 = vld [vmem:[%s0 + $0x13c] sm:$0xf]
  %v134 = vld [vmem:[%s0 + $0x140] sm:$0xf]
  %v135 = vld [vmem:[%s0 + $0x144] sm:$0xf]
  %v136 = vld [vmem:[%s0 + $0x148] sm:$0xf]
  %v137 = vld [vmem:[%s0 + $0x14c] sm:$0xf]
  %v138 = vld [vmem:[%s0 + $0x150] sm:$0xf]
  %v139 = vld [vmem:[%s0 + $0x154] sm:$0xf]
  %v140 = vld [vmem:[%s0 + $0x158] sm:$0xf]
  %v141 = vld [vmem:[%s0 + $0x15c] sm:$0xf]
  %v142 = vld [vmem:[%s0 + $0x160] sm:$0xf]
  %v143 = vld [vmem:[%s0 + $0x164] sm:$0xf]
  %v144 = vld [vmem:[%s0 + $0x168] sm:$0xf]
  %v145 = vld [vmem:[%s0 + $0x16c] sm:$0xf]
  %v146 = vld [vmem:[%s0 + $0x170] sm:$0xf]
  %v147 = vld [vmem:[%s0 + $0x174] sm:$0xf]
  %v148 = vld [vmem:[%s0 + $0x178] sm:$0xf]
  %v149 = vld [vmem:[%s0 + $0x17c] sm:$0xf]
  %v150 = vld [vmem:[%s0 + $0x180] sm:$0xf]
  %v151 = vld [vmem:[%s0 + $0x184] sm:$0xf]
  %v152 = vld [vmem:[%s0 + $0x188] sm:$0xf]
  %v153 = vld [vmem:[%s0 + $0x18c] sm:$0xf]
  %v154 = vld [vmem:[%s0 + $0x190] sm:$0xf]
  %v155 = vld [vmem:[%s0 + $0x194] sm:$0xf]
  %v156 = vld [vmem:[%s0 + $0x198] sm:$0xf]
  %v157 = vld [vmem:[%s0 + $0x19c] sm:$0xf]
  %v158 = vld [vmem:[%s0 + $0x1a0] sm:$0xf]
  %v159 = vld [vmem:[%s0 + $0x1a4] sm:$0xf]
  %v160 = vld [vmem:[%s0 + $0x1a8] sm:$0xf]
  %v161 = vld [vmem:[%s0 + $0x1ac] sm:$0xf]
  %v162 = vld [vmem:[%s0 + $0x1b0] sm:$0xf]
  %v163 = vld [vmem:[%s0 + $0x1b4] sm:$0xf]
  %v164 = vld [vmem:[%s0 + $0x1b8] sm:$0xf]
  %v165 = vld [vmem:[%s0 + $0x1bc] sm:$0xf]
  %v166 = vld [vmem:[%s0 + $0x1c0] sm:$0xf]
  %v167 = vld [vmem:[%s0 + $0x1c4] sm:$0xf]
  %v168 = vld [vmem:[%s0 + $0x1c8] sm:$0xf]
  %v169 = vld [vmem:[%s0 + $0x1cc] sm:$0xf]
  %v170 = vld [vmem:[%s0 + $0x1d0] sm:$0xf]
  %v171 = vld [vmem:[%s0 + $0x1d4] sm:$0xf]
  %v172 = vld [vmem:[%s0 + $0x1d8] sm:$0xf]
  %v173 = vld [vmem:[%s0 + $0x1dc] sm:$0xf]
  %v174 = vld [vmem:[%s0 + $0x1e0] sm:$0xf]
  %v175 = vld [vmem:[%s0 + $0x1e4] sm:$0xf]
  %v176 = vld [vmem:[%s0 + $0x1e8] sm:$0xf]
  %v177 = vld [vmem:[%s0 + $0x1ec] sm:$0xf]
  %v178 = vld [vmem:[%s0 + $0x1f0] sm:$0xf]
  %v179 = vld [vmem:[%s0 + $0x1f4] sm:$0xf]
  %v180 = vld [vmem:[%s0 + $0x1f8] sm:$0xf]
  %v181 = vld [vmem:[%s0 + $0x1fc] sm:$0xf]
  %v182 = vld [vmem:[%s1] sm:$0xf]
  %v183 = vld [vmem:[%s1 + $0x4] sm:$0xf]
  %v184 = vld [vmem:[%s1 + $0x8] sm:$0xf]
  %v185 = vld [vmem:[%s1 + $0xc] sm:$0xf]
  %v186 = vld [vmem:[%s2] sm:$0x1]
  %v188 = vperm.slane %v186, 0
  %v318 = vunpack.c.l.b16 %v54
  %v319 = vunpack.c.l.b16 %v55
  %v320 = vunpack.c.l.b16 %v56
  %v321 = vunpack.c.l.b16 %v57
  %v322 = vunpack.c.l.b16 %v58
  %v323 = vunpack.c.l.b16 %v59
  %v324 = vunpack.c.l.b16 %v60
  %v325 = vunpack.c.l.b16 %v61
  %v326 = vunpack.c.l.b16 %v62
  %v327 = vunpack.c.l.b16 %v63
  %v328 = vunpack.c.l.b16 %v64
  %v329 = vunpack.c.l.b16 %v65
  %v330 = vunpack.c.l.b16 %v66
  %v331 = vunpack.c.l.b16 %v67
  %v332 = vunpack.c.l.b16 %v68
  %v333 = vunpack.c.l.b16 %v69
  %v334 = vunpack.c.l.b16 %v70
  %v335 = vunpack.c.l.b16 %v71
  %v336 = vunpack.c.l.b16 %v72
  %v337 = vunpack.c.l.b16 %v73
  %v338 = vunpack.c.l.b16 %v74
  %v339 = vunpack.c.l.b16 %v75
  %v340 = vunpack.c.l.b16 %v76
  %v341 = vunpack.c.l.b16 %v77
  %v342 = vunpack.c.l.b16 %v78
  %v343 = vunpack.c.l.b16 %v79
  %v344 = vunpack.c.l.b16 %v80
  %v345 = vunpack.c.l.b16 %v81
  %v346 = vunpack.c.l.b16 %v82
  %v347 = vunpack.c.l.b16 %v83
  %v348 = vunpack.c.l.b16 %v84
  %v349 = vunpack.c.l.b16 %v85
  %v350 = vunpack.c.l.b16 %v86
  %v351 = vunpack.c.l.b16 %v87
  %v352 = vunpack.c.l.b16 %v88
  %v353 = vunpack.c.l.b16 %v89
  %v354 = vunpack.c.l.b16 %v90
  %v355 = vunpack.c.l.b16 %v91
  %v356 = vunpack.c.l.b16 %v92
  %v357 = vunpack.c.l.b16 %v93
  %v358 = vunpack.c.l.b16 %v94
  %v359 = vunpack.c.l.b16 %v95
  %v360 = vunpack.c.l.b16 %v96
  %v361 = vunpack.c.l.b16 %v97
  %v362 = vunpack.c.l.b16 %v98
  %v363 = vunpack.c.l.b16 %v99
  %v364 = vunpack.c.l.b16 %v100
  %v365 = vunpack.c.l.b16 %v101
  %v366 = vunpack.c.l.b16 %v102
  %v367 = vunpack.c.l.b16 %v103
  %v368 = vunpack.c.l.b16 %v104
  %v369 = vunpack.c.l.b16 %v105
  %v370 = vunpack.c.l.b16 %v106
  %v371 = vunpack.c.l.b16 %v107
  %v372 = vunpack.c.l.b16 %v108
  %v373 = vunpack.c.l.b16 %v109
  %v374 = vunpack.c.l.b16 %v110
  %v375 = vunpack.c.l.b16 %v111
  %v376 = vunpack.c.l.b16 %v112
  %v377 = vunpack.c.l.b16 %v113
  %v378 = vunpack.c.l.b16 %v114
  %v379 = vunpack.c.l.b16 %v115
  %v380 = vunpack.c.l.b16 %v116
  %v381 = vunpack.c.l.b16 %v117
  %v382 = vunpack.c.l.b16 %v118
  %v383 = vunpack.c.l.b16 %v119
  %v384 = vunpack.c.l.b16 %v120
  %v385 = vunpack.c.l.b16 %v121
  %v386 = vunpack.c.l.b16 %v122
  %v387 = vunpack.c.l.b16 %v123
  %v388 = vunpack.c.l.b16 %v124
  %v389 = vunpack.c.l.b16 %v125
  %v390 = vunpack.c.l.b16 %v126
  %v391 = vunpack.c.l.b16 %v127
  %v392 = vunpack.c.l.b16 %v128
  %v393 = vunpack.c.l.b16 %v129
  %v394 = vunpack.c.l.b16 %v130
  %v395 = vunpack.c.l.b16 %v131
  %v396 = vunpack.c.l.b16 %v132
  %v397 = vunpack.c.l.b16 %v133
  %v398 = vunpack.c.l.b16 %v134
  %v399 = vunpack.c.l.b16 %v135
  %v400 = vunpack.c.l.b16 %v136
  %v401 = vunpack.c.l.b16 %v137
  %v402 = vunpack.c.l.b16 %v138
  %v403 = vunpack.c.l.b16 %v139
  %v404 = vunpack.c.l.b16 %v140
  %v405 = vunpack.c.l.b16 %v141
  %v406 = vunpack.c.l.b16 %v142
  %v407 = vunpack.c.l.b16 %v143
  %v408 = vunpack.c.l.b16 %v144
  %v409 = vunpack.c.l.b16 %v145
  %v410 = vunpack.c.l.b16 %v146
  %v411 = vunpack.c.l.b16 %v147
  %v412 = vunpack.c.l.b16 %v148
  %v413 = vunpack.c.l.b16 %v149
  %v414 = vunpack.c.l.b16 %v150
  %v415 = vunpack.c.l.b16 %v151
  %v416 = vunpack.c.l.b16 %v152
  %v417 = vunpack.c.l.b16 %v153
  %v418 = vunpack.c.l.b16 %v154
  %v419 = vunpack.c.l.b16 %v155
  %v420 = vunpack.c.l.b16 %v156
  %v421 = vunpack.c.l.b16 %v157
  %v422 = vunpack.c.l.b16 %v158
  %v423 = vunpack.c.l.b16 %v159
  %v424 = vunpack.c.l.b16 %v160
  %v425 = vunpack.c.l.b16 %v161
  %v426 = vunpack.c.l.b16 %v162
  %v427 = vunpack.c.l.b16 %v163
  %v428 = vunpack.c.l.b16 %v164
  %v429 = vunpack.c.l.b16 %v165
  %v430 = vunpack.c.l.b16 %v166
  %v431 = vunpack.c.l.b16 %v167
  %v432 = vunpack.c.l.b16 %v168
  %v433 = vunpack.c.l.b16 %v169
  %v434 = vunpack.c.l.b16 %v170
  %v435 = vunpack.c.l.b16 %v171
  %v436 = vunpack.c.l.b16 %v172
  %v437 = vunpack.c.l.b16 %v173
  %v438 = vunpack.c.l.b16 %v174
  %v439 = vunpack.c.l.b16 %v175
  %v440 = vunpack.c.l.b16 %v176
  %v441 = vunpack.c.l.b16 %v177
  %v442 = vunpack.c.l.b16 %v178
  %v443 = vunpack.c.l.b16 %v179
  %v444 = vunpack.c.l.b16 %v180
  %v445 = vunpack.c.l.b16 %v181
  %v446 = vpack.c.b16 %v319, %v318
  %v447 = vpack.c.b16 %v321, %v320
  %v448 = vpack.c.b16 %v323, %v322
  %v449 = vpack.c.b16 %v325, %v324
  %v450 = vpack.c.b16 %v327, %v326
  %v451 = vpack.c.b16 %v329, %v328
  %v452 = vpack.c.b16 %v331, %v330
  %v453 = vpack.c.b16 %v333, %v332
  %v454 = vpack.c.b16 %v335, %v334
  %v455 = vpack.c.b16 %v337, %v336
  %v456 = vpack.c.b16 %v339, %v338
  %v457 = vpack.c.b16 %v341, %v340
  %v458 = vpack.c.b16 %v343, %v342
  %v459 = vpack.c.b16 %v345, %v344
  %v460 = vpack.c.b16 %v347, %v346
  %v461 = vpack.c.b16 %v349, %v348
  %v462 = vpack.c.b16 %v351, %v350
  %v463 = vpack.c.b16 %v353, %v352
  %v464 = vpack.c.b16 %v355, %v354
  %v465 = vpack.c.b16 %v357, %v356
  %v466 = vpack.c.b16 %v359, %v358
  %v467 = vpack.c.b16 %v361, %v360
  %v468 = vpack.c.b16 %v363, %v362
  %v469 = vpack.c.b16 %v365, %v364
  %v470 = vpack.c.b16 %v367, %v366
  %v471 = vpack.c.b16 %v369, %v368
  %v472 = vpack.c.b16 %v371, %v370
  %v473 = vpack.c.b16 %v373, %v372
  %v474 = vpack.c.b16 %v375, %v374
  %v475 = vpack.c.b16 %v377, %v376
  %v476 = vpack.c.b16 %v379, %v378
  %v477 = vpack.c.b16 %v381, %v380
  %v478 = vpack.c.b16 %v383, %v382
  %v479 = vpack.c.b16 %v385, %v384
  %v480 = vpack.c.b16 %v387, %v386
  %v481 = vpack.c.b16 %v389, %v388
  %v482 = vpack.c.b16 %v391, %v390
  %v483 = vpack.c.b16 %v393, %v392
  %v484 = vpack.c.b16 %v395, %v394
  %v485 = vpack.c.b16 %v397, %v396
  %v486 = vpack.c.b16 %v399, %v398
  %v487 = vpack.c.b16 %v401, %v400
  %v488 = vpack.c.b16 %v403, %v402
  %v489 = vpack.c.b16 %v405, %v404
  %v490 = vpack.c.b16 %v407, %v406
  %v491 = vpack.c.b16 %v409, %v408
  %v492 = vpack.c.b16 %v411, %v410
  %v493 = vpack.c.b16 %v413, %v412
  %v494 = vpack.c.b16 %v415, %v414
  %v495 = vpack.c.b16 %v417, %v416
  %v496 = vpack.c.b16 %v419, %v418
  %v497 = vpack.c.b16 %v421, %v420
  %v498 = vpack.c.b16 %v423, %v422
  %v499 = vpack.c.b16 %v425, %v424
  %v500 = vpack.c.b16 %v427, %v426
  %v501 = vpack.c.b16 %v429, %v428
  %v502 = vpack.c.b16 %v431, %v430
  %v503 = vpack.c.b16 %v433, %v432
  %v504 = vpack.c.b16 %v435, %v434
  %v505 = vpack.c.b16 %v437, %v436
  %v506 = vpack.c.b16 %v439, %v438
  %v507 = vpack.c.b16 %v441, %v440
  %v508 = vpack.c.b16 %v443, %v442
  %v509 = vpack.c.b16 %v445, %v444
  %v514 = vunpack.c.l.b16 %v182
  %v515 = vunpack.c.l.b16 %v183
  %v516 = vunpack.c.l.b16 %v184
  %v517 = vunpack.c.l.b16 %v185
  %v518 = vpack.c.b16 %v515, %v514
  %v519 = vpack.c.b16 %v517, %v516
  %vm522 = vcmask 261120
  %v524 = vsel %vm522, %v446, 0
  %v527 = vsel %vm522, %v447, 0
  %v530 = vsel %vm522, %v448, 0
  %v533 = vsel %vm522, %v449, 0
  %v536 = vsel %vm522, %v450, 0
  %v539 = vsel %vm522, %v451, 0
  %v542 = vsel %vm522, %v452, 0
  %v545 = vsel %vm522, %v453, 0
  %v548 = vsel %vm522, %v454, 0
  %v551 = vsel %vm522, %v455, 0
  %v554 = vsel %vm522, %v456, 0
  %v557 = vsel %vm522, %v457, 0
  %v560 = vsel %vm522, %v458, 0
  %v563 = vsel %vm522, %v459, 0
  %v566 = vsel %vm522, %v460, 0
  %v569 = vsel %vm522, %v461, 0
  %v572 = vsel %vm522, %v462, 0
  %v575 = vsel %vm522, %v463, 0
  %v578 = vsel %vm522, %v464, 0
  %v581 = vsel %vm522, %v465, 0
  %v584 = vsel %vm522, %v466, 0
  %v587 = vsel %vm522, %v467, 0
  %v590 = vsel %vm522, %v468, 0
  %v593 = vsel %vm522, %v469, 0
  %v596 = vsel %vm522, %v470, 0
  %v599 = vsel %vm522, %v471, 0
  %v602 = vsel %vm522, %v472, 0
  %v605 = vsel %vm522, %v473, 0
  %v608 = vsel %vm522, %v474, 0
  %v611 = vsel %vm522, %v475, 0
  %v614 = vsel %vm522, %v476, 0
  %v617 = vsel %vm522, %v477, 0
  %v620 = vsel %vm522, %v478, 0
  %v623 = vsel %vm522, %v479, 0
  %v626 = vsel %vm522, %v480, 0
  %v629 = vsel %vm522, %v481, 0
  %v632 = vsel %vm522, %v482, 0
  %v635 = vsel %vm522, %v483, 0
  %v638 = vsel %vm522, %v484, 0
  %v641 = vsel %vm522, %v485, 0
  %v644 = vsel %vm522, %v486, 0
  %v647 = vsel %vm522, %v487, 0
  %v650 = vsel %vm522, %v488, 0
  %v653 = vsel %vm522, %v489, 0
  %v656 = vsel %vm522, %v490, 0
  %v659 = vsel %vm522, %v491, 0
  %v662 = vsel %vm522, %v492, 0
  %v665 = vsel %vm522, %v493, 0
  %v668 = vsel %vm522, %v494, 0
  %v671 = vsel %vm522, %v495, 0
  %v674 = vsel %vm522, %v496, 0
  %v677 = vsel %vm522, %v497, 0
  %v680 = vsel %vm522, %v498, 0
  %v683 = vsel %vm522, %v499, 0
  %v686 = vsel %vm522, %v500, 0
  %v689 = vsel %vm522, %v501, 0
  %v692 = vsel %vm522, %v502, 0
  %v695 = vsel %vm522, %v503, 0
  %v698 = vsel %vm522, %v504, 0
  %v701 = vsel %vm522, %v505, 0
  %v704 = vsel %vm522, %v506, 0
  %v707 = vsel %vm522, %v507, 0
  %v710 = vsel %vm522, %v508, 0
  %v713 = vsel %vm522, %v509, 0
  %715 = vmatpush.bf16.msra.mxu0 0
  %716 = vmatpush.bf16.msra.mxu0 0
  %717 = vmatpush.bf16.msra.mxu0 0
  %718 = vmatpush.bf16.msra.mxu0 0
  %719 = vmatpush.bf16.msra.mxu0 0
  %720 = vmatpush.bf16.msra.mxu0 0
  %721 = vmatpush.bf16.msra.mxu0 %v519
  %722 = vmatpush.bf16.msra.mxu0 %v518
  %723 = vmatmul.bf16.gmra.mxu0 %v524
  %v724 = vpop.f32.mrf.mxu0
  %v725 = vadd.f32 %v188, %v724
  %v726 = vpop.f32.mrf.mxu0
  %v727 = vadd.f32 %v188, %v726
  %728 = vmatmul.bf16.gmra.mxu0 %v527
  %v729 = vpop.f32.mrf.mxu0
  %v730 = vadd.f32 %v188, %v729
  %v731 = vpop.f32.mrf.mxu0
  %v732 = vadd.f32 %v188, %v731
  %733 = vmatmul.bf16.gmra.mxu0 %v530
  %v734 = vpop.f32.mrf.mxu0
  %v735 = vadd.f32 %v188, %v734
  %v736 = vpop.f32.mrf.mxu0
  %v737 = vadd.f32 %v188, %v736
  %738 = vmatmul.bf16.gmra.mxu0 %v533
  %v739 = vpop.f32.mrf.mxu0
  %v740 = vadd.f32 %v188, %v739
  %v741 = vpop.f32.mrf.mxu0
  %v742 = vadd.f32 %v188, %v741
  %743 = vmatmul.bf16.gmra.mxu0 %v536
  %v744 = vpop.f32.mrf.mxu0
  %v745 = vadd.f32 %v188, %v744
  %v746 = vpop.f32.mrf.mxu0
  %v747 = vadd.f32 %v188, %v746
  %748 = vmatmul.bf16.gmra.mxu0 %v539
  %v749 = vpop.f32.mrf.mxu0
  %v750 = vadd.f32 %v188, %v749
  %v751 = vpop.f32.mrf.mxu0
  %v752 = vadd.f32 %v188, %v751
  %753 = vmatmul.bf16.gmra.mxu0 %v542
  %v754 = vpop.f32.mrf.mxu0
  %v755 = vadd.f32 %v188, %v754
  %v756 = vpop.f32.mrf.mxu0
  %v757 = vadd.f32 %v188, %v756
  %758 = vmatmul.bf16.gmra.mxu0 %v545
  %v759 = vpop.f32.mrf.mxu0
  %v760 = vadd.f32 %v188, %v759
  %v761 = vpop.f32.mrf.mxu0
  %v762 = vadd.f32 %v188, %v761
  %763 = vmatmul.bf16.gmra.mxu0 %v548
  %v764 = vpop.f32.mrf.mxu0
  %v765 = vadd.f32 %v188, %v764
  %v766 = vpop.f32.mrf.mxu0
  %v767 = vadd.f32 %v188, %v766
  %768 = vmatmul.bf16.gmra.mxu0 %v551
  %v769 = vpop.f32.mrf.mxu0
  %v770 = vadd.f32 %v188, %v769
  %v771 = vpop.f32.mrf.mxu0
  %v772 = vadd.f32 %v188, %v771
  %773 = vmatmul.bf16.gmra.mxu0 %v554
  %v774 = vpop.f32.mrf.mxu0
  %v775 = vadd.f32 %v188, %v774
  %v776 = vpop.f32.mrf.mxu0
  %v777 = vadd.f32 %v188, %v776
  %778 = vmatmul.bf16.gmra.mxu0 %v557
  %v779 = vpop.f32.mrf.mxu0
  %v780 = vadd.f32 %v188, %v779
  %v781 = vpop.f32.mrf.mxu0
  %v782 = vadd.f32 %v188, %v781
  %783 = vmatmul.bf16.gmra.mxu0 %v560
  %v784 = vpop.f32.mrf.mxu0
  %v785 = vadd.f32 %v188, %v784
  %v786 = vpop.f32.mrf.mxu0
  %v787 = vadd.f32 %v188, %v786
  %788 = vmatmul.bf16.gmra.mxu0 %v563
  %v789 = vpop.f32.mrf.mxu0
  %v790 = vadd.f32 %v188, %v789
  %v791 = vpop.f32.mrf.mxu0
  %v792 = vadd.f32 %v188, %v791
  %793 = vmatmul.bf16.gmra.mxu0 %v566
  %v794 = vpop.f32.mrf.mxu0
  %v795 = vadd.f32 %v188, %v794
  %v796 = vpop.f32.mrf.mxu0
  %v797 = vadd.f32 %v188, %v796
  %798 = vmatmul.bf16.gmra.mxu0 %v569
  %v799 = vpop.f32.mrf.mxu0
  %v800 = vadd.f32 %v188, %v799
  %v801 = vpop.f32.mrf.mxu0
  %v802 = vadd.f32 %v188, %v801
  %803 = vmatmul.bf16.gmra.mxu0 %v572
  %v804 = vpop.f32.mrf.mxu0
  %v805 = vadd.f32 %v188, %v804
  %v806 = vpop.f32.mrf.mxu0
  %v807 = vadd.f32 %v188, %v806
  %808 = vmatmul.bf16.gmra.mxu0 %v575
  %v809 = vpop.f32.mrf.mxu0
  %v810 = vadd.f32 %v188, %v809
  %v811 = vpop.f32.mrf.mxu0
  %v812 = vadd.f32 %v188, %v811
  %813 = vmatmul.bf16.gmra.mxu0 %v578
  %v814 = vpop.f32.mrf.mxu0
  %v815 = vadd.f32 %v188, %v814
  %v816 = vpop.f32.mrf.mxu0
  %v817 = vadd.f32 %v188, %v816
  %818 = vmatmul.bf16.gmra.mxu0 %v581
  %v819 = vpop.f32.mrf.mxu0
  %v820 = vadd.f32 %v188, %v819
  %v821 = vpop.f32.mrf.mxu0
  %v822 = vadd.f32 %v188, %v821
  %823 = vmatmul.bf16.gmra.mxu0 %v584
  %v824 = vpop.f32.mrf.mxu0
  %v825 = vadd.f32 %v188, %v824
  %v826 = vpop.f32.mrf.mxu0
  %v827 = vadd.f32 %v188, %v826
  %828 = vmatmul.bf16.gmra.mxu0 %v587
  %v829 = vpop.f32.mrf.mxu0
  %v830 = vadd.f32 %v188, %v829
  %v831 = vpop.f32.mrf.mxu0
  %v832 = vadd.f32 %v188, %v831
  %833 = vmatmul.bf16.gmra.mxu0 %v590
  %v834 = vpop.f32.mrf.mxu0
  %v835 = vadd.f32 %v188, %v834
  %v836 = vpop.f32.mrf.mxu0
  %v837 = vadd.f32 %v188, %v836
  %838 = vmatmul.bf16.gmra.mxu0 %v593
  %v839 = vpop.f32.mrf.mxu0
  %v840 = vadd.f32 %v188, %v839
  %v841 = vpop.f32.mrf.mxu0
  %v842 = vadd.f32 %v188, %v841
  %843 = vmatmul.bf16.gmra.mxu0 %v596
  %v844 = vpop.f32.mrf.mxu0
  %v845 = vadd.f32 %v188, %v844
  %v846 = vpop.f32.mrf.mxu0
  %v847 = vadd.f32 %v188, %v846
  %848 = vmatmul.bf16.gmra.mxu0 %v599
  %v849 = vpop.f32.mrf.mxu0
  %v850 = vadd.f32 %v188, %v849
  %v851 = vpop.f32.mrf.mxu0
  %v852 = vadd.f32 %v188, %v851
  %853 = vmatmul.bf16.gmra.mxu0 %v602
  %v854 = vpop.f32.mrf.mxu0
  %v855 = vadd.f32 %v188, %v854
  %v856 = vpop.f32.mrf.mxu0
  %v857 = vadd.f32 %v188, %v856
  %858 = vmatmul.bf16.gmra.mxu0 %v605
  %v859 = vpop.f32.mrf.mxu0
  %v860 = vadd.f32 %v188, %v859
  %v861 = vpop.f32.mrf.mxu0
  %v862 = vadd.f32 %v188, %v861
  %863 = vmatmul.bf16.gmra.mxu0 %v608
  %v864 = vpop.f32.mrf.mxu0
  %v865 = vadd.f32 %v188, %v864
  %v866 = vpop.f32.mrf.mxu0
  %v867 = vadd.f32 %v188, %v866
  %868 = vmatmul.bf16.gmra.mxu0 %v611
  %v869 = vpop.f32.mrf.mxu0
  %v870 = vadd.f32 %v188, %v869
  %v871 = vpop.f32.mrf.mxu0
  %v872 = vadd.f32 %v188, %v871
  %873 = vmatmul.bf16.gmra.mxu0 %v614
  %v874 = vpop.f32.mrf.mxu0
  %v875 = vadd.f32 %v188, %v874
  %v876 = vpop.f32.mrf.mxu0
  %v877 = vadd.f32 %v188, %v876
  %878 = vmatmul.bf16.gmra.mxu0 %v617
  %v879 = vpop.f32.mrf.mxu0
  %v880 = vadd.f32 %v188, %v879
  %v881 = vpop.f32.mrf.mxu0
  %v882 = vadd.f32 %v188, %v881
  %883 = vmatmul.bf16.gmra.mxu0 %v620
  %v884 = vpop.f32.mrf.mxu0
  %v885 = vadd.f32 %v188, %v884
  %v886 = vpop.f32.mrf.mxu0
  %v887 = vadd.f32 %v188, %v886
  %888 = vmatmul.bf16.gmra.mxu0 %v623
  %v889 = vpop.f32.mrf.mxu0
  %v890 = vadd.f32 %v188, %v889
  %v891 = vpop.f32.mrf.mxu0
  %v892 = vadd.f32 %v188, %v891
  %893 = vmatmul.bf16.gmra.mxu0 %v626
  %v894 = vpop.f32.mrf.mxu0
  %v895 = vadd.f32 %v188, %v894
  %v896 = vpop.f32.mrf.mxu0
  %v897 = vadd.f32 %v188, %v896
  %898 = vmatmul.bf16.gmra.mxu0 %v629
  %v899 = vpop.f32.mrf.mxu0
  %v900 = vadd.f32 %v188, %v899
  %v901 = vpop.f32.mrf.mxu0
  %v902 = vadd.f32 %v188, %v901
  %903 = vmatmul.bf16.gmra.mxu0 %v632
  %v904 = vpop.f32.mrf.mxu0
  %v905 = vadd.f32 %v188, %v904
  %v906 = vpop.f32.mrf.mxu0
  %v907 = vadd.f32 %v188, %v906
  %908 = vmatmul.bf16.gmra.mxu0 %v635
  %v909 = vpop.f32.mrf.mxu0
  %v910 = vadd.f32 %v188, %v909
  %v911 = vpop.f32.mrf.mxu0
  %v912 = vadd.f32 %v188, %v911
  %913 = vmatmul.bf16.gmra.mxu0 %v638
  %v914 = vpop.f32.mrf.mxu0
  %v915 = vadd.f32 %v188, %v914
  %v916 = vpop.f32.mrf.mxu0
  %v917 = vadd.f32 %v188, %v916
  %918 = vmatmul.bf16.gmra.mxu0 %v641
  %v919 = vpop.f32.mrf.mxu0
  %v920 = vadd.f32 %v188, %v919
  %v921 = vpop.f32.mrf.mxu0
  %v922 = vadd.f32 %v188, %v921
  %923 = vmatmul.bf16.gmra.mxu0 %v644
  %v924 = vpop.f32.mrf.mxu0
  %v925 = vadd.f32 %v188, %v924
  %v926 = vpop.f32.mrf.mxu0
  %v927 = vadd.f32 %v188, %v926
  %928 = vmatmul.bf16.gmra.mxu0 %v647
  %v929 = vpop.f32.mrf.mxu0
  %v930 = vadd.f32 %v188, %v929
  %v931 = vpop.f32.mrf.mxu0
  %v932 = vadd.f32 %v188, %v931
  %933 = vmatmul.bf16.gmra.mxu0 %v650
  %v934 = vpop.f32.mrf.mxu0
  %v935 = vadd.f32 %v188, %v934
  %v936 = vpop.f32.mrf.mxu0
  %v937 = vadd.f32 %v188, %v936
  %938 = vmatmul.bf16.gmra.mxu0 %v653
  %v939 = vpop.f32.mrf.mxu0
  %v940 = vadd.f32 %v188, %v939
  %v941 = vpop.f32.mrf.mxu0
  %v942 = vadd.f32 %v188, %v941
  %943 = vmatmul.bf16.gmra.mxu0 %v656
  %v944 = vpop.f32.mrf.mxu0
  %v945 = vadd.f32 %v188, %v944
  %v946 = vpop.f32.mrf.mxu0
  %v947 = vadd.f32 %v188, %v946
  %948 = vmatmul.bf16.gmra.mxu0 %v659
  %v949 = vpop.f32.mrf.mxu0
  %v950 = vadd.f32 %v188, %v949
  %v951 = vpop.f32.mrf.mxu0
  %v952 = vadd.f32 %v188, %v951
  %953 = vmatmul.bf16.gmra.mxu0 %v662
  %v954 = vpop.f32.mrf.mxu0
  %v955 = vadd.f32 %v188, %v954
  %v956 = vpop.f32.mrf.mxu0
  %v957 = vadd.f32 %v188, %v956
  %958 = vmatmul.bf16.gmra.mxu0 %v665
  %v959 = vpop.f32.mrf.mxu0
  %v960 = vadd.f32 %v188, %v959
  %v961 = vpop.f32.mrf.mxu0
  %v962 = vadd.f32 %v188, %v961
  %963 = vmatmul.bf16.gmra.mxu0 %v668
  %v964 = vpop.f32.mrf.mxu0
  %v965 = vadd.f32 %v188, %v964
  %v966 = vpop.f32.mrf.mxu0
  %v967 = vadd.f32 %v188, %v966
  %968 = vmatmul.bf16.gmra.mxu0 %v671
  %v969 = vpop.f32.mrf.mxu0
  %v970 = vadd.f32 %v188, %v969
  %v971 = vpop.f32.mrf.mxu0
  %v972 = vadd.f32 %v188, %v971
  %973 = vmatmul.bf16.gmra.mxu0 %v674
  %v974 = vpop.f32.mrf.mxu0
  %v975 = vadd.f32 %v188, %v974
  %v976 = vpop.f32.mrf.mxu0
  %v977 = vadd.f32 %v188, %v976
  %978 = vmatmul.bf16.gmra.mxu0 %v677
  %v979 = vpop.f32.mrf.mxu0
  %v980 = vadd.f32 %v188, %v979
  %v981 = vpop.f32.mrf.mxu0
  %v982 = vadd.f32 %v188, %v981
  %983 = vmatmul.bf16.gmra.mxu0 %v680
  %v984 = vpop.f32.mrf.mxu0
  %v985 = vadd.f32 %v188, %v984
  %v986 = vpop.f32.mrf.mxu0
  %v987 = vadd.f32 %v188, %v986
  %988 = vmatmul.bf16.gmra.mxu0 %v683
  %v989 = vpop.f32.mrf.mxu0
  %v990 = vadd.f32 %v188, %v989
  %v991 = vpop.f32.mrf.mxu0
  %v992 = vadd.f32 %v188, %v991
  %993 = vmatmul.bf16.gmra.mxu0 %v686
  %v994 = vpop.f32.mrf.mxu0
  %v995 = vadd.f32 %v188, %v994
  %v996 = vpop.f32.mrf.mxu0
  %v997 = vadd.f32 %v188, %v996
  %998 = vmatmul.bf16.gmra.mxu0 %v689
  %v999 = vpop.f32.mrf.mxu0
  %v1000 = vadd.f32 %v188, %v999
  %v1001 = vpop.f32.mrf.mxu0
  %v1002 = vadd.f32 %v188, %v1001
  %1003 = vmatmul.bf16.gmra.mxu0 %v692
  %v1004 = vpop.f32.mrf.mxu0
  %v1005 = vadd.f32 %v188, %v1004
  %v1006 = vpop.f32.mrf.mxu0
  %v1007 = vadd.f32 %v188, %v1006
  %1008 = vmatmul.bf16.gmra.mxu0 %v695
  %v1009 = vpop.f32.mrf.mxu0
  %v1010 = vadd.f32 %v188, %v1009
  %v1011 = vpop.f32.mrf.mxu0
  %v1012 = vadd.f32 %v188, %v1011
  %1013 = vmatmul.bf16.gmra.mxu0 %v698
  %v1014 = vpop.f32.mrf.mxu0
  %v1015 = vadd.f32 %v188, %v1014
  %v1016 = vpop.f32.mrf.mxu0
  %v1017 = vadd.f32 %v188, %v1016
  %1018 = vmatmul.bf16.gmra.mxu0 %v701
  %v1019 = vpop.f32.mrf.mxu0
  %v1020 = vadd.f32 %v188, %v1019
  %v1021 = vpop.f32.mrf.mxu0
  %v1022 = vadd.f32 %v188, %v1021
  %1023 = vmatmul.bf16.gmra.mxu0 %v704
  %v1024 = vpop.f32.mrf.mxu0
  %v1025 = vadd.f32 %v188, %v1024
  %v1026 = vpop.f32.mrf.mxu0
  %v1027 = vadd.f32 %v188, %v1026
  %1028 = vmatmul.bf16.gmra.mxu0 %v707
  %v1029 = vpop.f32.mrf.mxu0
  %v1030 = vadd.f32 %v188, %v1029
  %v1031 = vpop.f32.mrf.mxu0
  %v1032 = vadd.f32 %v188, %v1031
  %1033 = vmatmul.bf16.gmra.mxu0 %v710
  %v1034 = vpop.f32.mrf.mxu0
  %v1035 = vadd.f32 %v188, %v1034
  %v1036 = vpop.f32.mrf.mxu0
  %v1037 = vadd.f32 %v188, %v1036
  %1038 = vmatmul.bf16.gmra.mxu0 %v713
  %v1039 = vpop.f32.mrf.mxu0
  %v1040 = vadd.f32 %v188, %v1039
  %v1041 = vpop.f32.mrf.mxu0
  %v1042 = vadd.f32 %v188, %v1041
  %1043 = vdwg.mxu0
  %v1044 = vmax.f32 %v725, 0.0
  %v1045 = vmax.f32 %v727, 0.0
  %v1046 = vmax.f32 %v730, 0.0
  %v1047 = vmax.f32 %v732, 0.0
  %v1048 = vmax.f32 %v735, 0.0
  %v1049 = vmax.f32 %v737, 0.0
  %v1050 = vmax.f32 %v740, 0.0
  %v1051 = vmax.f32 %v742, 0.0
  %v1052 = vmax.f32 %v745, 0.0
  %v1053 = vmax.f32 %v747, 0.0
  %v1054 = vmax.f32 %v750, 0.0
  %v1055 = vmax.f32 %v752, 0.0
  %v1056 = vmax.f32 %v755, 0.0
  %v1057 = vmax.f32 %v757, 0.0
  %v1058 = vmax.f32 %v760, 0.0
  %v1059 = vmax.f32 %v762, 0.0
  %v1060 = vmax.f32 %v765, 0.0
  %v1061 = vmax.f32 %v767, 0.0
  %v1062 = vmax.f32 %v770, 0.0
  %v1063 = vmax.f32 %v772, 0.0
  %v1064 = vmax.f32 %v775, 0.0
  %v1065 = vmax.f32 %v777, 0.0
  %v1066 = vmax.f32 %v780, 0.0
  %v1067 = vmax.f32 %v782, 0.0
  %v1068 = vmax.f32 %v785, 0.0
  %v1069 = vmax.f32 %v787, 0.0
  %v1070 = vmax.f32 %v790, 0.0
  %v1071 = vmax.f32 %v792, 0.0
  %v1072 = vmax.f32 %v795, 0.0
  %v1073 = vmax.f32 %v797, 0.0
  %v1074 = vmax.f32 %v800, 0.0
  %v1075 = vmax.f32 %v802, 0.0
  %v1076 = vmax.f32 %v805, 0.0
  %v1077 = vmax.f32 %v807, 0.0
  %v1078 = vmax.f32 %v810, 0.0
  %v1079 = vmax.f32 %v812, 0.0
  %v1080 = vmax.f32 %v815, 0.0
  %v1081 = vmax.f32 %v817, 0.0
  %v1082 = vmax.f32 %v820, 0.0
  %v1083 = vmax.f32 %v822, 0.0
  %v1084 = vmax.f32 %v825, 0.0
  %v1085 = vmax.f32 %v827, 0.0
  %v1086 = vmax.f32 %v830, 0.0
  %v1087 = vmax.f32 %v832, 0.0
  %v1088 = vmax.f32 %v835, 0.0
  %v1089 = vmax.f32 %v837, 0.0
  %v1090 = vmax.f32 %v840, 0.0
  %v1091 = vmax.f32 %v842, 0.0
  %v1092 = vmax.f32 %v845, 0.0
  %v1093 = vmax.f32 %v847, 0.0
  %v1094 = vmax.f32 %v850, 0.0
  %v1095 = vmax.f32 %v852, 0.0
  %v1096 = vmax.f32 %v855, 0.0
  %v1097 = vmax.f32 %v857, 0.0
  %v1098 = vmax.f32 %v860, 0.0
  %v1099 = vmax.f32 %v862, 0.0
  %v1100 = vmax.f32 %v865, 0.0
  %v1101 = vmax.f32 %v867, 0.0
  %v1102 = vmax.f32 %v870, 0.0
  %v1103 = vmax.f32 %v872, 0.0
  %v1104 = vmax.f32 %v875, 0.0
  %v1105 = vmax.f32 %v877, 0.0
  %v1106 = vmax.f32 %v880, 0.0
  %v1107 = vmax.f32 %v882, 0.0
  %v1108 = vmax.f32 %v885, 0.0
  %v1109 = vmax.f32 %v887, 0.0
  %v1110 = vmax.f32 %v890, 0.0
  %v1111 = vmax.f32 %v892, 0.0
  %v1112 = vmax.f32 %v895, 0.0
  %v1113 = vmax.f32 %v897, 0.0
  %v1114 = vmax.f32 %v900, 0.0
  %v1115 = vmax.f32 %v902, 0.0
  %v1116 = vmax.f32 %v905, 0.0
  %v1117 = vmax.f32 %v907, 0.0
  %v1118 = vmax.f32 %v910, 0.0
  %v1119 = vmax.f32 %v912, 0.0
  %v1120 = vmax.f32 %v915, 0.0
  %v1121 = vmax.f32 %v917, 0.0
  %v1122 = vmax.f32 %v920, 0.0
  %v1123 = vmax.f32 %v922, 0.0
  %v1124 = vmax.f32 %v925, 0.0
  %v1125 = vmax.f32 %v927, 0.0
  %v1126 = vmax.f32 %v930, 0.0
  %v1127 = vmax.f32 %v932, 0.0
  %v1128 = vmax.f32 %v935, 0.0
  %v1129 = vmax.f32 %v937, 0.0
  %v1130 = vmax.f32 %v940, 0.0
  %v1131 = vmax.f32 %v942, 0.0
  %v1132 = vmax.f32 %v945, 0.0
  %v1133 = vmax.f32 %v947, 0.0
  %v1134 = vmax.f32 %v950, 0.0
  %v1135 = vmax.f32 %v952, 0.0
  %v1136 = vmax.f32 %v955, 0.0
  %v1137 = vmax.f32 %v957, 0.0
  %v1138 = vmax.f32 %v960, 0.0
  %v1139 = vmax.f32 %v962, 0.0
  %v1140 = vmax.f32 %v965, 0.0
  %v1141 = vmax.f32 %v967, 0.0
  %v1142 = vmax.f32 %v970, 0.0
  %v1143 = vmax.f32 %v972, 0.0
  %v1144 = vmax.f32 %v975, 0.0
  %v1145 = vmax.f32 %v977, 0.0
  %v1146 = vmax.f32 %v980, 0.0
  %v1147 = vmax.f32 %v982, 0.0
  %v1148 = vmax.f32 %v985, 0.0
  %v1149 = vmax.f32 %v987, 0.0
  %v1150 = vmax.f32 %v990, 0.0
  %v1151 = vmax.f32 %v992, 0.0
  %v1152 = vmax.f32 %v995, 0.0
  %v1153 = vmax.f32 %v997, 0.0
  %v1154 = vmax.f32 %v1000, 0.0
  %v1155 = vmax.f32 %v1002, 0.0
  %v1156 = vmax.f32 %v1005, 0.0
  %v1157 = vmax.f32 %v1007, 0.0
  %v1158 = vmax.f32 %v1010, 0.0
  %v1159 = vmax.f32 %v1012, 0.0
  %v1160 = vmax.f32 %v1015, 0.0
  %v1161 = vmax.f32 %v1017, 0.0
  %v1162 = vmax.f32 %v1020, 0.0
  %v1163 = vmax.f32 %v1022, 0.0
  %v1164 = vmax.f32 %v1025, 0.0
  %v1165 = vmax.f32 %v1027, 0.0
  %v1166 = vmax.f32 %v1030, 0.0
  %v1167 = vmax.f32 %v1032, 0.0
  %v1168 = vmax.f32 %v1035, 0.0
  %v1169 = vmax.f32 %v1037, 0.0
  %v1170 = vmax.f32 %v1040, 0.0
  %v1171 = vmax.f32 %v1042, 0.0
  %vm1172 = vcmask 523264
  %v1173 = vsel %vm1172, %v1044, 0.0
  %v1174 = vsel %vm1172, %v1045, 0.0
  %v1175 = vadd.f32 %v1173, %v1174
  %v1176 = vsel %vm1172, %v1046, 0.0
  %v1177 = vadd.f32 %v1175, %v1176
  %v1178 = vsel %vm1172, %v1047, 0.0
  %v1179 = vadd.f32 %v1177, %v1178
  %v1180 = vsel %vm1172, %v1048, 0.0
  %v1181 = vadd.f32 %v1179, %v1180
  %v1182 = vsel %vm1172, %v1049, 0.0
  %v1183 = vadd.f32 %v1181, %v1182
  %v1184 = vsel %vm1172, %v1050, 0.0
  %v1185 = vadd.f32 %v1183, %v1184
  %v1186 = vsel %vm1172, %v1051, 0.0
  %v1187 = vadd.f32 %v1185, %v1186
  %v1188 = vsel %vm1172, %v1052, 0.0
  %v1189 = vadd.f32 %v1187, %v1188
  %v1190 = vsel %vm1172, %v1053, 0.0
  %v1191 = vadd.f32 %v1189, %v1190
  %v1192 = vsel %vm1172, %v1054, 0.0
  %v1193 = vadd.f32 %v1191, %v1192
  %v1194 = vsel %vm1172, %v1055, 0.0
  %v1195 = vadd.f32 %v1193, %v1194
  %v1196 = vsel %vm1172, %v1056, 0.0
  %v1197 = vadd.f32 %v1195, %v1196
  %v1198 = vsel %vm1172, %v1057, 0.0
  %v1199 = vadd.f32 %v1197, %v1198
  %v1200 = vsel %vm1172, %v1058, 0.0
  %v1201 = vadd.f32 %v1199, %v1200
  %v1202 = vsel %vm1172, %v1059, 0.0
  %v1203 = vadd.f32 %v1201, %v1202
  %v1204 = vsel %vm1172, %v1060, 0.0
  %v1205 = vadd.f32 %v1203, %v1204
  %v1206 = vsel %vm1172, %v1061, 0.0
  %v1207 = vadd.f32 %v1205, %v1206
  %v1208 = vsel %vm1172, %v1062, 0.0
  %v1209 = vadd.f32 %v1207, %v1208
  %v1210 = vsel %vm1172, %v1063, 0.0
  %v1211 = vadd.f32 %v1209, %v1210
  %v1212 = vsel %vm1172, %v1064, 0.0
  %v1213 = vadd.f32 %v1211, %v1212
  %v1214 = vsel %vm1172, %v1065, 0.0
  %v1215 = vadd.f32 %v1213, %v1214
  %v1216 = vsel %vm1172, %v1066, 0.0
  %v1217 = vadd.f32 %v1215, %v1216
  %v1218 = vsel %vm1172, %v1067, 0.0
  %v1219 = vadd.f32 %v1217, %v1218
  %v1220 = vsel %vm1172, %v1068, 0.0
  %v1221 = vadd.f32 %v1219, %v1220
  %v1222 = vsel %vm1172, %v1069, 0.0
  %v1223 = vadd.f32 %v1221, %v1222
  %v1224 = vsel %vm1172, %v1070, 0.0
  %v1225 = vadd.f32 %v1223, %v1224
  %v1226 = vsel %vm1172, %v1071, 0.0
  %v1227 = vadd.f32 %v1225, %v1226
  %v1228 = vsel %vm1172, %v1072, 0.0
  %v1229 = vadd.f32 %v1227, %v1228
  %v1230 = vsel %vm1172, %v1073, 0.0
  %v1231 = vadd.f32 %v1229, %v1230
  %v1232 = vsel %vm1172, %v1074, 0.0
  %v1233 = vadd.f32 %v1231, %v1232
  %v1234 = vsel %vm1172, %v1075, 0.0
  %v1235 = vadd.f32 %v1233, %v1234
  %v1236 = vrot.slane %v1235, 4
  %v1237 = vadd.f32 %v1235, %v1236
  %v1238 = vrot.slane %v1237, 2
  %v1239 = vadd.f32 %v1237, %v1238
  %v1240 = vrot.slane %v1239, 1
  %v1241 = vadd.f32 %v1239, %v1240
  %v1242 = vsel %vm1172, %v1076, 0.0
  %v1243 = vsel %vm1172, %v1077, 0.0
  %v1244 = vadd.f32 %v1242, %v1243
  %v1245 = vsel %vm1172, %v1078, 0.0
  %v1246 = vadd.f32 %v1244, %v1245
  %v1247 = vsel %vm1172, %v1079, 0.0
  %v1248 = vadd.f32 %v1246, %v1247
  %v1249 = vsel %vm1172, %v1080, 0.0
  %v1250 = vadd.f32 %v1248, %v1249
  %v1251 = vsel %vm1172, %v1081, 0.0
  %v1252 = vadd.f32 %v1250, %v1251
  %v1253 = vsel %vm1172, %v1082, 0.0
  %v1254 = vadd.f32 %v1252, %v1253
  %v1255 = vsel %vm1172, %v1083, 0.0
  %v1256 = vadd.f32 %v1254, %v1255
  %v1257 = vsel %vm1172, %v1084, 0.0
  %v1258 = vadd.f32 %v1256, %v1257
  %v1259 = vsel %vm1172, %v1085, 0.0
  %v1260 = vadd.f32 %v1258, %v1259
  %v1261 = vsel %vm1172, %v1086, 0.0
  %v1262 = vadd.f32 %v1260, %v1261
  %v1263 = vsel %vm1172, %v1087, 0.0
  %v1264 = vadd.f32 %v1262, %v1263
  %v1265 = vsel %vm1172, %v1088, 0.0
  %v1266 = vadd.f32 %v1264, %v1265
  %v1267 = vsel %vm1172, %v1089, 0.0
  %v1268 = vadd.f32 %v1266, %v1267
  %v1269 = vsel %vm1172, %v1090, 0.0
  %v1270 = vadd.f32 %v1268, %v1269
  %v1271 = vsel %vm1172, %v1091, 0.0
  %v1272 = vadd.f32 %v1270, %v1271
  %v1273 = vsel %vm1172, %v1092, 0.0
  %v1274 = vadd.f32 %v1272, %v1273
  %v1275 = vsel %vm1172, %v1093, 0.0
  %v1276 = vadd.f32 %v1274, %v1275
  %v1277 = vsel %vm1172, %v1094, 0.0
  %v1278 = vadd.f32 %v1276, %v1277
  %v1279 = vsel %vm1172, %v1095, 0.0
  %v1280 = vadd.f32 %v1278, %v1279
  %v1281 = vsel %vm1172, %v1096, 0.0
  %v1282 = vadd.f32 %v1280, %v1281
  %v1283 = vsel %vm1172, %v1097, 0.0
  %v1284 = vadd.f32 %v1282, %v1283
  %v1285 = vsel %vm1172, %v1098, 0.0
  %v1286 = vadd.f32 %v1284, %v1285
  %v1287 = vsel %vm1172, %v1099, 0.0
  %v1288 = vadd.f32 %v1286, %v1287
  %v1289 = vsel %vm1172, %v1100, 0.0
  %v1290 = vadd.f32 %v1288, %v1289
  %v1291 = vsel %vm1172, %v1101, 0.0
  %v1292 = vadd.f32 %v1290, %v1291
  %v1293 = vsel %vm1172, %v1102, 0.0
  %v1294 = vadd.f32 %v1292, %v1293
  %v1295 = vsel %vm1172, %v1103, 0.0
  %v1296 = vadd.f32 %v1294, %v1295
  %v1297 = vsel %vm1172, %v1104, 0.0
  %v1298 = vadd.f32 %v1296, %v1297
  %v1299 = vsel %vm1172, %v1105, 0.0
  %v1300 = vadd.f32 %v1298, %v1299
  %v1301 = vsel %vm1172, %v1106, 0.0
  %v1302 = vadd.f32 %v1300, %v1301
  %v1303 = vsel %vm1172, %v1107, 0.0
  %v1304 = vadd.f32 %v1302, %v1303
  %v1305 = vrot.slane %v1304, 4
  %v1306 = vadd.f32 %v1304, %v1305
  %v1307 = vrot.slane %v1306, 2
  %v1308 = vadd.f32 %v1306, %v1307
  %v1309 = vrot.slane %v1308, 1
  %v1310 = vadd.f32 %v1308, %v1309
  %v1311 = vsel %vm1172, %v1108, 0.0
  %v1312 = vsel %vm1172, %v1109, 0.0
  %v1313 = vadd.f32 %v1311, %v1312
  %v1314 = vsel %vm1172, %v1110, 0.0
  %v1315 = vadd.f32 %v1313, %v1314
  %v1316 = vsel %vm1172, %v1111, 0.0
  %v1317 = vadd.f32 %v1315, %v1316
  %v1318 = vsel %vm1172, %v1112, 0.0
  %v1319 = vadd.f32 %v1317, %v1318
  %v1320 = vsel %vm1172, %v1113, 0.0
  %v1321 = vadd.f32 %v1319, %v1320
  %v1322 = vsel %vm1172, %v1114, 0.0
  %v1323 = vadd.f32 %v1321, %v1322
  %v1324 = vsel %vm1172, %v1115, 0.0
  %v1325 = vadd.f32 %v1323, %v1324
  %v1326 = vsel %vm1172, %v1116, 0.0
  %v1327 = vadd.f32 %v1325, %v1326
  %v1328 = vsel %vm1172, %v1117, 0.0
  %v1329 = vadd.f32 %v1327, %v1328
  %v1330 = vsel %vm1172, %v1118, 0.0
  %v1331 = vadd.f32 %v1329, %v1330
  %v1332 = vsel %vm1172, %v1119, 0.0
  %v1333 = vadd.f32 %v1331, %v1332
  %v1334 = vsel %vm1172, %v1120, 0.0
  %v1335 = vadd.f32 %v1333, %v1334
  %v1336 = vsel %vm1172, %v1121, 0.0
  %v1337 = vadd.f32 %v1335, %v1336
  %v1338 = vsel %vm1172, %v1122, 0.0
  %v1339 = vadd.f32 %v1337, %v1338
  %v1340 = vsel %vm1172, %v1123, 0.0
  %v1341 = vadd.f32 %v1339, %v1340
  %v1342 = vsel %vm1172, %v1124, 0.0
  %v1343 = vadd.f32 %v1341, %v1342
  %v1344 = vsel %vm1172, %v1125, 0.0
  %v1345 = vadd.f32 %v1343, %v1344
  %v1346 = vsel %vm1172, %v1126, 0.0
  %v1347 = vadd.f32 %v1345, %v1346
  %v1348 = vsel %vm1172, %v1127, 0.0
  %v1349 = vadd.f32 %v1347, %v1348
  %v1350 = vsel %vm1172, %v1128, 0.0
  %v1351 = vadd.f32 %v1349, %v1350
  %v1352 = vsel %vm1172, %v1129, 0.0
  %v1353 = vadd.f32 %v1351, %v1352
  %v1354 = vsel %vm1172, %v1130, 0.0
  %v1355 = vadd.f32 %v1353, %v1354
  %v1356 = vsel %vm1172, %v1131, 0.0
  %v1357 = vadd.f32 %v1355, %v1356
  %v1358 = vsel %vm1172, %v1132, 0.0
  %v1359 = vadd.f32 %v1357, %v1358
  %v1360 = vsel %vm1172, %v1133, 0.0
  %v1361 = vadd.f32 %v1359, %v1360
  %v1362 = vsel %vm1172, %v1134, 0.0
  %v1363 = vadd.f32 %v1361, %v1362
  %v1364 = vsel %vm1172, %v1135, 0.0
  %v1365 = vadd.f32 %v1363, %v1364
  %v1366 = vsel %vm1172, %v1136, 0.0
  %v1367 = vadd.f32 %v1365, %v1366
  %v1368 = vsel %vm1172, %v1137, 0.0
  %v1369 = vadd.f32 %v1367, %v1368
  %v1370 = vsel %vm1172, %v1138, 0.0
  %v1371 = vadd.f32 %v1369, %v1370
  %v1372 = vsel %vm1172, %v1139, 0.0
  %v1373 = vadd.f32 %v1371, %v1372
  %v1374 = vrot.slane %v1373, 4
  %v1375 = vadd.f32 %v1373, %v1374
  %v1376 = vrot.slane %v1375, 2
  %v1377 = vadd.f32 %v1375, %v1376
  %v1378 = vrot.slane %v1377, 1
  %v1379 = vadd.f32 %v1377, %v1378
  %v1380 = vsel %vm1172, %v1140, 0.0
  %v1381 = vsel %vm1172, %v1141, 0.0
  %v1382 = vadd.f32 %v1380, %v1381
  %v1383 = vsel %vm1172, %v1142, 0.0
  %v1384 = vadd.f32 %v1382, %v1383
  %v1385 = vsel %vm1172, %v1143, 0.0
  %v1386 = vadd.f32 %v1384, %v1385
  %v1387 = vsel %vm1172, %v1144, 0.0
  %v1388 = vadd.f32 %v1386, %v1387
  %v1389 = vsel %vm1172, %v1145, 0.0
  %v1390 = vadd.f32 %v1388, %v1389
  %v1391 = vsel %vm1172, %v1146, 0.0
  %v1392 = vadd.f32 %v1390, %v1391
  %v1393 = vsel %vm1172, %v1147, 0.0
  %v1394 = vadd.f32 %v1392, %v1393
  %v1395 = vsel %vm1172, %v1148, 0.0
  %v1396 = vadd.f32 %v1394, %v1395
  %v1397 = vsel %vm1172, %v1149, 0.0
  %v1398 = vadd.f32 %v1396, %v1397
  %v1399 = vsel %vm1172, %v1150, 0.0
  %v1400 = vadd.f32 %v1398, %v1399
  %v1401 = vsel %vm1172, %v1151, 0.0
  %v1402 = vadd.f32 %v1400, %v1401
  %v1403 = vsel %vm1172, %v1152, 0.0
  %v1404 = vadd.f32 %v1402, %v1403
  %v1405 = vsel %vm1172, %v1153, 0.0
  %v1406 = vadd.f32 %v1404, %v1405
  %v1407 = vsel %vm1172, %v1154, 0.0
  %v1408 = vadd.f32 %v1406, %v1407
  %v1409 = vsel %vm1172, %v1155, 0.0
  %v1410 = vadd.f32 %v1408, %v1409
  %v1411 = vsel %vm1172, %v1156, 0.0
  %v1412 = vadd.f32 %v1410, %v1411
  %v1413 = vsel %vm1172, %v1157, 0.0
  %v1414 = vadd.f32 %v1412, %v1413
  %v1415 = vsel %vm1172, %v1158, 0.0
  %v1416 = vadd.f32 %v1414, %v1415
  %v1417 = vsel %vm1172, %v1159, 0.0
  %v1418 = vadd.f32 %v1416, %v1417
  %v1419 = vsel %vm1172, %v1160, 0.0
  %v1420 = vadd.f32 %v1418, %v1419
  %v1421 = vsel %vm1172, %v1161, 0.0
  %v1422 = vadd.f32 %v1420, %v1421
  %v1423 = vsel %vm1172, %v1162, 0.0
  %v1424 = vadd.f32 %v1422, %v1423
  %v1425 = vsel %vm1172, %v1163, 0.0
  %v1426 = vadd.f32 %v1424, %v1425
  %v1427 = vsel %vm1172, %v1164, 0.0
  %v1428 = vadd.f32 %v1426, %v1427
  %v1429 = vsel %vm1172, %v1165, 0.0
  %v1430 = vadd.f32 %v1428, %v1429
  %v1431 = vsel %vm1172, %v1166, 0.0
  %v1432 = vadd.f32 %v1430, %v1431
  %v1433 = vsel %vm1172, %v1167, 0.0
  %v1434 = vadd.f32 %v1432, %v1433
  %v1435 = vsel %vm1172, %v1168, 0.0
  %v1436 = vadd.f32 %v1434, %v1435
  %v1437 = vsel %vm1172, %v1169, 0.0
  %v1438 = vadd.f32 %v1436, %v1437
  %v1439 = vsel %vm1172, %v1170, 0.0
  %v1440 = vadd.f32 %v1438, %v1439
  %v1441 = vsel %vm1172, %v1171, 0.0
  %v1442 = vadd.f32 %v1440, %v1441
  %v1443 = vrot.slane %v1442, 4
  %v1444 = vadd.f32 %v1442, %v1443
  %v1445 = vrot.slane %v1444, 2
  %v1446 = vadd.f32 %v1444, %v1445
  %v1447 = vrot.slane %v1446, 1
  %v1448 = vadd.f32 %v1446, %v1447
  %v1449 = vmul.f32 %v1241, 0.00390625
  %v1450 = vmul.f32 %v1310, 0.00390625
  %v1451 = vmul.f32 %v1379, 0.00390625
  %v1452 = vmul.f32 %v1448, 0.00390625
  %v1453 = vpack.c.bf16 %v1449, %v1449
  %v1454 = vpack.c.bf16 %v1450, %v1450
  %v1455 = vpack.c.bf16 %v1451, %v1451
  %v1456 = vpack.c.bf16 %v1452, %v1452
  %v1457 = vld [vmem:[%s3] sm:$0xff]
  %v1458 = vld [vmem:[%s3 + $0x8] sm:$0xff]
  %v1459 = vld [vmem:[%s3 + $0x10] sm:$0xff]
  %v1460 = vld [vmem:[%s3 + $0x18] sm:$0xff]
  %v1461 = vld [vmem:[%s3 + $0x20] sm:$0xff]
  %v1462 = vld [vmem:[%s3 + $0x28] sm:$0xff]
  %v1463 = vld [vmem:[%s3 + $0x30] sm:$0xff]
  %v1464 = vld [vmem:[%s3 + $0x38] sm:$0xff]
  %v1465 = vld [vmem:[%s3 + $0x40] sm:$0xff]
  %v1466 = vld [vmem:[%s3 + $0x48] sm:$0xff]
  %v1467 = vld [vmem:[%s3 + $0x50] sm:$0xff]
  %v1468 = vld [vmem:[%s3 + $0x58] sm:$0xff]
  %v1469 = vld [vmem:[%s3 + $0x60] sm:$0xff]
  %v1470 = vld [vmem:[%s3 + $0x68] sm:$0xff]
  %v1471 = vld [vmem:[%s3 + $0x70] sm:$0xff]
  %v1472 = vld [vmem:[%s3 + $0x78] sm:$0xff]
  %v1473 = vld [vmem:[%s3 + $0x80] sm:$0xff]
  %v1474 = vld [vmem:[%s3 + $0x88] sm:$0xff]
  %v1475 = vld [vmem:[%s3 + $0x90] sm:$0xff]
  %v1476 = vld [vmem:[%s3 + $0x98] sm:$0xff]
  %v1477 = vld [vmem:[%s3 + $0xa0] sm:$0xff]
  %v1478 = vld [vmem:[%s3 + $0xa8] sm:$0xff]
  %v1479 = vld [vmem:[%s3 + $0xb0] sm:$0xff]
  %v1480 = vld [vmem:[%s3 + $0xb8] sm:$0xff]
  %v1481 = vld [vmem:[%s4] sm:$0x3f]
  %v1483 = vperm.slane %v1481, 0
  %v1484 = vperm.slane %v1481, 1
  %v1485 = vperm.slane %v1481, 2
  %v1486 = vperm.slane %v1481, 3
  %v1487 = vperm.slane %v1481, 4
  %v1488 = vperm.slane %v1481, 5
  %v1499 = vunpack.c.l.b16 %v1453
  %v1500 = vunpack.c.l.b16 %v1454
  %v1501 = vunpack.c.l.b16 %v1455
  %v1502 = vunpack.c.l.b16 %v1456
  %vm1503 = vcmask 1041409
  %v1504 = vsel %vm1503, %v1500, %v1499
  %vm1505 = vcmask 1042434
  %v1506 = vsel %vm1505, %v1501, %v1504
  %vm1507 = vcmask 1043459
  %v1508 = vsel %vm1507, %v1502, %v1506
  %v1509 = vpack.c.b16 %v1508, %v1508
  %v1534 = vunpack.c.l.b16 %v1457
  %v1535 = vunpack.c.h.b16 %v1457
  %v1536 = vunpack.c.l.b16 %v1458
  %v1537 = vunpack.c.h.b16 %v1458
  %v1538 = vunpack.c.l.b16 %v1459
  %v1539 = vunpack.c.h.b16 %v1459
  %v1540 = vunpack.c.l.b16 %v1460
  %v1541 = vunpack.c.h.b16 %v1460
  %v1542 = vunpack.c.l.b16 %v1461
  %v1543 = vunpack.c.h.b16 %v1461
  %v1544 = vunpack.c.l.b16 %v1462
  %v1545 = vunpack.c.h.b16 %v1462
  %v1546 = vunpack.c.l.b16 %v1463
  %v1547 = vunpack.c.h.b16 %v1463
  %v1548 = vunpack.c.l.b16 %v1464
  %v1549 = vunpack.c.h.b16 %v1464
  %v1550 = vunpack.c.l.b16 %v1465
  %v1551 = vunpack.c.h.b16 %v1465
  %v1552 = vunpack.c.l.b16 %v1466
  %v1553 = vunpack.c.h.b16 %v1466
  %v1554 = vunpack.c.l.b16 %v1467
  %v1555 = vunpack.c.h.b16 %v1467
  %v1556 = vunpack.c.l.b16 %v1468
  %v1557 = vunpack.c.h.b16 %v1468
  %v1558 = vunpack.c.l.b16 %v1469
  %v1559 = vunpack.c.h.b16 %v1469
  %v1560 = vunpack.c.l.b16 %v1470
  %v1561 = vunpack.c.h.b16 %v1470
  %v1562 = vunpack.c.l.b16 %v1471
  %v1563 = vunpack.c.h.b16 %v1471
  %v1564 = vunpack.c.l.b16 %v1472
  %v1565 = vunpack.c.h.b16 %v1472
  %v1566 = vunpack.c.l.b16 %v1473
  %v1567 = vunpack.c.h.b16 %v1473
  %v1568 = vunpack.c.l.b16 %v1474
  %v1569 = vunpack.c.h.b16 %v1474
  %v1570 = vunpack.c.l.b16 %v1475
  %v1571 = vunpack.c.h.b16 %v1475
  %v1572 = vunpack.c.l.b16 %v1476
  %v1573 = vunpack.c.h.b16 %v1476
  %v1574 = vunpack.c.l.b16 %v1477
  %v1575 = vunpack.c.h.b16 %v1477
  %v1576 = vunpack.c.l.b16 %v1478
  %v1577 = vunpack.c.h.b16 %v1478
  %v1578 = vunpack.c.l.b16 %v1479
  %v1579 = vunpack.c.h.b16 %v1479
  %v1580 = vunpack.c.l.b16 %v1480
  %v1581 = vunpack.c.h.b16 %v1480
  %v1582 = vpack.c.b16 %v1540, %v1534
  %v1583 = vpack.c.b16 %v1541, %v1535
  %v1584 = vpack.c.b16 %v1542, %v1536
  %v1585 = vpack.c.b16 %v1543, %v1537
  %v1586 = vpack.c.b16 %v1544, %v1538
  %v1587 = vpack.c.b16 %v1545, %v1539
  %v1588 = vpack.c.b16 %v1552, %v1546
  %v1589 = vpack.c.b16 %v1553, %v1547
  %v1590 = vpack.c.b16 %v1554, %v1548
  %v1591 = vpack.c.b16 %v1555, %v1549
  %v1592 = vpack.c.b16 %v1556, %v1550
  %v1593 = vpack.c.b16 %v1557, %v1551
  %v1594 = vpack.c.b16 %v1564, %v1558
  %v1595 = vpack.c.b16 %v1565, %v1559
  %v1596 = vpack.c.b16 %v1566, %v1560
  %v1597 = vpack.c.b16 %v1567, %v1561
  %v1598 = vpack.c.b16 %v1568, %v1562
  %v1599 = vpack.c.b16 %v1569, %v1563
  %v1600 = vpack.c.b16 %v1576, %v1570
  %v1601 = vpack.c.b16 %v1577, %v1571
  %v1602 = vpack.c.b16 %v1578, %v1572
  %v1603 = vpack.c.b16 %v1579, %v1573
  %v1604 = vpack.c.b16 %v1580, %v1574
  %v1605 = vpack.c.b16 %v1581, %v1575
  %v1631 = vsel %vm1172, %v1509, 0
  %1633 = vmatpush.bf16.msra.mxu0 0
  %1634 = vmatpush.bf16.msra.mxu0 0
  %1635 = vmatpush.bf16.msra.mxu0 0
  %1636 = vmatpush.bf16.msra.mxu0 0
  %1637 = vmatpush.bf16.msra.mxu0 %v1600
  %1638 = vmatpush.bf16.msra.mxu0 %v1594
  %1639 = vmatpush.bf16.msra.mxu0 %v1588
  %1640 = vmatpush.bf16.msra.mxu0 %v1582
  %1641 = vmatmul.bf16.gmra.mxu0 %v1631
  %v1642 = vpop.f32.mrf.mxu0
  %v1643 = vadd.f32 %v1483, %v1642
  %v1644 = vpop.f32.mrf.mxu0
  %1645 = vdwg.mxu0
  %1646 = vmatpush.bf16.msra.mxu0 0
  %1647 = vmatpush.bf16.msra.mxu0 0
  %1648 = vmatpush.bf16.msra.mxu0 0
  %1649 = vmatpush.bf16.msra.mxu0 0
  %1650 = vmatpush.bf16.msra.mxu0 %v1601
  %1651 = vmatpush.bf16.msra.mxu0 %v1595
  %1652 = vmatpush.bf16.msra.mxu0 %v1589
  %1653 = vmatpush.bf16.msra.mxu0 %v1583
  %1654 = vmatmul.bf16.gmra.mxu0 %v1631
  %v1655 = vpop.f32.mrf.mxu0
  %v1656 = vadd.f32 %v1484, %v1655
  %v1657 = vpop.f32.mrf.mxu0
  %1658 = vdwg.mxu0
  %1659 = vmatpush.bf16.msra.mxu0 0
  %1660 = vmatpush.bf16.msra.mxu0 0
  %1661 = vmatpush.bf16.msra.mxu0 0
  %1662 = vmatpush.bf16.msra.mxu0 0
  %1663 = vmatpush.bf16.msra.mxu0 %v1602
  %1664 = vmatpush.bf16.msra.mxu0 %v1596
  %1665 = vmatpush.bf16.msra.mxu0 %v1590
  %1666 = vmatpush.bf16.msra.mxu0 %v1584
  %1667 = vmatmul.bf16.gmra.mxu0 %v1631
  %v1668 = vpop.f32.mrf.mxu0
  %v1669 = vadd.f32 %v1485, %v1668
  %v1670 = vpop.f32.mrf.mxu0
  %1671 = vdwg.mxu0
  %1672 = vmatpush.bf16.msra.mxu0 0
  %1673 = vmatpush.bf16.msra.mxu0 0
  %1674 = vmatpush.bf16.msra.mxu0 0
  %1675 = vmatpush.bf16.msra.mxu0 0
  %1676 = vmatpush.bf16.msra.mxu0 %v1603
  %1677 = vmatpush.bf16.msra.mxu0 %v1597
  %1678 = vmatpush.bf16.msra.mxu0 %v1591
  %1679 = vmatpush.bf16.msra.mxu0 %v1585
  %1680 = vmatmul.bf16.gmra.mxu0 %v1631
  %v1681 = vpop.f32.mrf.mxu0
  %v1682 = vadd.f32 %v1486, %v1681
  %v1683 = vpop.f32.mrf.mxu0
  %1684 = vdwg.mxu0
  %1685 = vmatpush.bf16.msra.mxu0 0
  %1686 = vmatpush.bf16.msra.mxu0 0
  %1687 = vmatpush.bf16.msra.mxu0 0
  %1688 = vmatpush.bf16.msra.mxu0 0
  %1689 = vmatpush.bf16.msra.mxu0 %v1604
  %1690 = vmatpush.bf16.msra.mxu0 %v1598
  %1691 = vmatpush.bf16.msra.mxu0 %v1592
  %1692 = vmatpush.bf16.msra.mxu0 %v1586
  %1693 = vmatmul.bf16.gmra.mxu0 %v1631
  %v1694 = vpop.f32.mrf.mxu0
  %v1695 = vadd.f32 %v1487, %v1694
  %v1696 = vpop.f32.mrf.mxu0
  %1697 = vdwg.mxu0
  %1698 = vmatpush.bf16.msra.mxu0 0
  %1699 = vmatpush.bf16.msra.mxu0 0
  %1700 = vmatpush.bf16.msra.mxu0 0
  %1701 = vmatpush.bf16.msra.mxu0 0
  %1702 = vmatpush.bf16.msra.mxu0 %v1605
  %1703 = vmatpush.bf16.msra.mxu0 %v1599
  %1704 = vmatpush.bf16.msra.mxu0 %v1593
  %1705 = vmatpush.bf16.msra.mxu0 %v1587
  %1706 = vmatmul.bf16.gmra.mxu0 %v1631
  %v1707 = vpop.f32.mrf.mxu0
  %v1708 = vadd.f32 %v1488, %v1707
  %v1709 = vpop.f32.mrf.mxu0
  %1710 = vdwg.mxu0
  %v1711 = vld [vmem:[%s5] sm:$0xff]
  %v1712 = vld [vmem:[%s5 + $0x8] sm:$0xff]
  %v1713 = vld [vmem:[%s5 + $0x10] sm:$0xff]
  %v1714 = vld [vmem:[%s5 + $0x18] sm:$0xff]
  %v1715 = vld [vmem:[%s5 + $0x20] sm:$0xff]
  %v1716 = vld [vmem:[%s5 + $0x28] sm:$0xff]
  %v1717 = vld [vmem:[%s5 + $0x30] sm:$0xff]
  %v1718 = vld [vmem:[%s5 + $0x38] sm:$0xff]
  %v1719 = vld [vmem:[%s5 + $0x40] sm:$0xff]
  %v1720 = vld [vmem:[%s5 + $0x48] sm:$0xff]
  %v1721 = vld [vmem:[%s5 + $0x50] sm:$0xff]
  %v1722 = vld [vmem:[%s5 + $0x58] sm:$0xff]
  %v1723 = vld [vmem:[%s5 + $0x60] sm:$0xff]
  %v1724 = vld [vmem:[%s5 + $0x68] sm:$0xff]
  %v1725 = vld [vmem:[%s5 + $0x70] sm:$0xff]
  %v1726 = vld [vmem:[%s5 + $0x78] sm:$0xff]
  %v1727 = vld [vmem:[%s5 + $0x80] sm:$0xff]
  %v1728 = vld [vmem:[%s5 + $0x88] sm:$0xff]
  %v1729 = vld [vmem:[%s5 + $0x90] sm:$0xff]
  %v1730 = vld [vmem:[%s5 + $0x98] sm:$0xff]
  %v1731 = vld [vmem:[%s5 + $0xa0] sm:$0xff]
  %v1732 = vld [vmem:[%s5 + $0xa8] sm:$0xff]
  %v1733 = vld [vmem:[%s5 + $0xb0] sm:$0xff]
  %v1734 = vld [vmem:[%s5 + $0xb8] sm:$0xff]
  %v1735 = vld [vmem:[%s5 + $0xc0] sm:$0xff]
  %v1736 = vld [vmem:[%s5 + $0xc8] sm:$0xff]
  %v1737 = vld [vmem:[%s5 + $0xd0] sm:$0xff]
  %v1738 = vld [vmem:[%s5 + $0xd8] sm:$0xff]
  %v1739 = vld [vmem:[%s5 + $0xe0] sm:$0xff]
  %v1740 = vld [vmem:[%s5 + $0xe8] sm:$0xff]
  %v1741 = vld [vmem:[%s5 + $0xf0] sm:$0xff]
  %v1742 = vld [vmem:[%s5 + $0xf8] sm:$0xff]
  %v1743 = vld [vmem:[%s5 + $0x100] sm:$0xff]
  %v1744 = vld [vmem:[%s5 + $0x108] sm:$0xff]
  %v1745 = vld [vmem:[%s5 + $0x110] sm:$0xff]
  %v1746 = vld [vmem:[%s5 + $0x118] sm:$0xff]
  %v1747 = vld [vmem:[%s5 + $0x120] sm:$0xff]
  %v1748 = vld [vmem:[%s5 + $0x128] sm:$0xff]
  %v1749 = vld [vmem:[%s5 + $0x130] sm:$0xff]
  %v1750 = vld [vmem:[%s5 + $0x138] sm:$0xff]
  %v1751 = vld [vmem:[%s5 + $0x140] sm:$0xff]
  %v1752 = vld [vmem:[%s5 + $0x148] sm:$0xff]
  %v1753 = vld [vmem:[%s5 + $0x150] sm:$0xff]
  %v1754 = vld [vmem:[%s5 + $0x158] sm:$0xff]
  %v1755 = vld [vmem:[%s5 + $0x160] sm:$0xff]
  %v1756 = vld [vmem:[%s5 + $0x168] sm:$0xff]
  %v1757 = vld [vmem:[%s5 + $0x170] sm:$0xff]
  %v1758 = vld [vmem:[%s5 + $0x178] sm:$0xff]
  %v1759 = vld [vmem:[%s5 + $0x180] sm:$0xff]
  %v1760 = vld [vmem:[%s5 + $0x188] sm:$0xff]
  %v1761 = vld [vmem:[%s5 + $0x190] sm:$0xff]
  %v1762 = vld [vmem:[%s5 + $0x198] sm:$0xff]
  %v1763 = vld [vmem:[%s5 + $0x1a0] sm:$0xff]
  %v1764 = vld [vmem:[%s5 + $0x1a8] sm:$0xff]
  %v1765 = vld [vmem:[%s5 + $0x1b0] sm:$0xff]
  %v1766 = vld [vmem:[%s5 + $0x1b8] sm:$0xff]
  %v1767 = vld [vmem:[%s5 + $0x1c0] sm:$0xff]
  %v1768 = vld [vmem:[%s5 + $0x1c8] sm:$0xff]
  %v1769 = vld [vmem:[%s5 + $0x1d0] sm:$0xff]
  %v1770 = vld [vmem:[%s5 + $0x1d8] sm:$0xff]
  %v1771 = vld [vmem:[%s5 + $0x1e0] sm:$0xff]
  %v1772 = vld [vmem:[%s5 + $0x1e8] sm:$0xff]
  %v1773 = vld [vmem:[%s5 + $0x1f0] sm:$0xff]
  %v1774 = vld [vmem:[%s5 + $0x1f8] sm:$0xff]
  %v1775 = vld [vmem:[%s5 + $0x200] sm:$0xff]
  %v1776 = vld [vmem:[%s5 + $0x208] sm:$0xff]
  %v1777 = vld [vmem:[%s5 + $0x210] sm:$0xff]
  %v1778 = vld [vmem:[%s5 + $0x218] sm:$0xff]
  %v1779 = vld [vmem:[%s5 + $0x220] sm:$0xff]
  %v1780 = vld [vmem:[%s5 + $0x228] sm:$0xff]
  %v1781 = vld [vmem:[%s5 + $0x230] sm:$0xff]
  %v1782 = vld [vmem:[%s5 + $0x238] sm:$0xff]
  %v1783 = vld [vmem:[%s5 + $0x240] sm:$0xff]
  %v1784 = vld [vmem:[%s5 + $0x248] sm:$0xff]
  %v1785 = vld [vmem:[%s5 + $0x250] sm:$0xff]
  %v1786 = vld [vmem:[%s5 + $0x258] sm:$0xff]
  %v1787 = vld [vmem:[%s5 + $0x260] sm:$0xff]
  %v1788 = vld [vmem:[%s5 + $0x268] sm:$0xff]
  %v1789 = vld [vmem:[%s5 + $0x270] sm:$0xff]
  %v1790 = vld [vmem:[%s5 + $0x278] sm:$0xff]
  %v1791 = vld [vmem:[%s5 + $0x280] sm:$0xff]
  %v1792 = vld [vmem:[%s5 + $0x288] sm:$0xff]
  %v1793 = vld [vmem:[%s5 + $0x290] sm:$0xff]
  %v1794 = vld [vmem:[%s5 + $0x298] sm:$0xff]
  %v1795 = vld [vmem:[%s5 + $0x2a0] sm:$0xff]
  %v1796 = vld [vmem:[%s5 + $0x2a8] sm:$0xff]
  %v1797 = vld [vmem:[%s5 + $0x2b0] sm:$0xff]
  %v1798 = vld [vmem:[%s5 + $0x2b8] sm:$0xff]
  %v1799 = vld [vmem:[%s5 + $0x2c0] sm:$0xff]
  %v1800 = vld [vmem:[%s5 + $0x2c8] sm:$0xff]
  %v1801 = vld [vmem:[%s5 + $0x2d0] sm:$0xff]
  %v1802 = vld [vmem:[%s5 + $0x2d8] sm:$0xff]
  %v1803 = vld [vmem:[%s5 + $0x2e0] sm:$0xff]
  %v1804 = vld [vmem:[%s5 + $0x2e8] sm:$0xff]
  %v1805 = vld [vmem:[%s5 + $0x2f0] sm:$0xff]
  %v1806 = vld [vmem:[%s5 + $0x2f8] sm:$0xff]
  %v1807 = vld [vmem:[%s6] sm:$0x3f]
  %v1809 = vperm.slane %v1807, 0
  %v1810 = vperm.slane %v1807, 1
  %v1811 = vperm.slane %v1807, 2
  %v1812 = vperm.slane %v1807, 3
  %v1813 = vperm.slane %v1807, 4
  %v1814 = vperm.slane %v1807, 5
  %v1917 = vunpack.c.l.b16 %v1711
  %v1918 = vunpack.c.h.b16 %v1711
  %v1919 = vunpack.c.l.b16 %v1712
  %v1920 = vunpack.c.h.b16 %v1712
  %v1921 = vunpack.c.l.b16 %v1713
  %v1922 = vunpack.c.h.b16 %v1713
  %v1923 = vunpack.c.l.b16 %v1714
  %v1924 = vunpack.c.h.b16 %v1714
  %v1925 = vunpack.c.l.b16 %v1715
  %v1926 = vunpack.c.h.b16 %v1715
  %v1927 = vunpack.c.l.b16 %v1716
  %v1928 = vunpack.c.h.b16 %v1716
  %v1929 = vunpack.c.l.b16 %v1717
  %v1930 = vunpack.c.h.b16 %v1717
  %v1931 = vunpack.c.l.b16 %v1718
  %v1932 = vunpack.c.h.b16 %v1718
  %v1933 = vunpack.c.l.b16 %v1719
  %v1934 = vunpack.c.h.b16 %v1719
  %v1935 = vunpack.c.l.b16 %v1720
  %v1936 = vunpack.c.h.b16 %v1720
  %v1937 = vunpack.c.l.b16 %v1721
  %v1938 = vunpack.c.h.b16 %v1721
  %v1939 = vunpack.c.l.b16 %v1722
  %v1940 = vunpack.c.h.b16 %v1722
  %v1941 = vunpack.c.l.b16 %v1723
  %v1942 = vunpack.c.h.b16 %v1723
  %v1943 = vunpack.c.l.b16 %v1724
  %v1944 = vunpack.c.h.b16 %v1724
  %v1945 = vunpack.c.l.b16 %v1725
  %v1946 = vunpack.c.h.b16 %v1725
  %v1947 = vunpack.c.l.b16 %v1726
  %v1948 = vunpack.c.h.b16 %v1726
  %v1949 = vunpack.c.l.b16 %v1727
  %v1950 = vunpack.c.h.b16 %v1727
  %v1951 = vunpack.c.l.b16 %v1728
  %v1952 = vunpack.c.h.b16 %v1728
  %v1953 = vunpack.c.l.b16 %v1729
  %v1954 = vunpack.c.h.b16 %v1729
  %v1955 = vunpack.c.l.b16 %v1730
  %v1956 = vunpack.c.h.b16 %v1730
  %v1957 = vunpack.c.l.b16 %v1731
  %v1958 = vunpack.c.h.b16 %v1731
  %v1959 = vunpack.c.l.b16 %v1732
  %v1960 = vunpack.c.h.b16 %v1732
  %v1961 = vunpack.c.l.b16 %v1733
  %v1962 = vunpack.c.h.b16 %v1733
  %v1963 = vunpack.c.l.b16 %v1734
  %v1964 = vunpack.c.h.b16 %v1734
  %v1965 = vunpack.c.l.b16 %v1735
  %v1966 = vunpack.c.h.b16 %v1735
  %v1967 = vunpack.c.l.b16 %v1736
  %v1968 = vunpack.c.h.b16 %v1736
  %v1969 = vunpack.c.l.b16 %v1737
  %v1970 = vunpack.c.h.b16 %v1737
  %v1971 = vunpack.c.l.b16 %v1738
  %v1972 = vunpack.c.h.b16 %v1738
  %v1973 = vunpack.c.l.b16 %v1739
  %v1974 = vunpack.c.h.b16 %v1739
  %v1975 = vunpack.c.l.b16 %v1740
  %v1976 = vunpack.c.h.b16 %v1740
  %v1977 = vunpack.c.l.b16 %v1741
  %v1978 = vunpack.c.h.b16 %v1741
  %v1979 = vunpack.c.l.b16 %v1742
  %v1980 = vunpack.c.h.b16 %v1742
  %v1981 = vunpack.c.l.b16 %v1743
  %v1982 = vunpack.c.h.b16 %v1743
  %v1983 = vunpack.c.l.b16 %v1744
  %v1984 = vunpack.c.h.b16 %v1744
  %v1985 = vunpack.c.l.b16 %v1745
  %v1986 = vunpack.c.h.b16 %v1745
  %v1987 = vunpack.c.l.b16 %v1746
  %v1988 = vunpack.c.h.b16 %v1746
  %v1989 = vunpack.c.l.b16 %v1747
  %v1990 = vunpack.c.h.b16 %v1747
  %v1991 = vunpack.c.l.b16 %v1748
  %v1992 = vunpack.c.h.b16 %v1748
  %v1993 = vunpack.c.l.b16 %v1749
  %v1994 = vunpack.c.h.b16 %v1749
  %v1995 = vunpack.c.l.b16 %v1750
  %v1996 = vunpack.c.h.b16 %v1750
  %v1997 = vunpack.c.l.b16 %v1751
  %v1998 = vunpack.c.h.b16 %v1751
  %v1999 = vunpack.c.l.b16 %v1752
  %v2000 = vunpack.c.h.b16 %v1752
  %v2001 = vunpack.c.l.b16 %v1753
  %v2002 = vunpack.c.h.b16 %v1753
  %v2003 = vunpack.c.l.b16 %v1754
  %v2004 = vunpack.c.h.b16 %v1754
  %v2005 = vunpack.c.l.b16 %v1755
  %v2006 = vunpack.c.h.b16 %v1755
  %v2007 = vunpack.c.l.b16 %v1756
  %v2008 = vunpack.c.h.b16 %v1756
  %v2009 = vunpack.c.l.b16 %v1757
  %v2010 = vunpack.c.h.b16 %v1757
  %v2011 = vunpack.c.l.b16 %v1758
  %v2012 = vunpack.c.h.b16 %v1758
  %v2013 = vunpack.c.l.b16 %v1759
  %v2014 = vunpack.c.h.b16 %v1759
  %v2015 = vunpack.c.l.b16 %v1760
  %v2016 = vunpack.c.h.b16 %v1760
  %v2017 = vunpack.c.l.b16 %v1761
  %v2018 = vunpack.c.h.b16 %v1761
  %v2019 = vunpack.c.l.b16 %v1762
  %v2020 = vunpack.c.h.b16 %v1762
  %v2021 = vunpack.c.l.b16 %v1763
  %v2022 = vunpack.c.h.b16 %v1763
  %v2023 = vunpack.c.l.b16 %v1764
  %v2024 = vunpack.c.h.b16 %v1764
  %v2025 = vunpack.c.l.b16 %v1765
  %v2026 = vunpack.c.h.b16 %v1765
  %v2027 = vunpack.c.l.b16 %v1766
  %v2028 = vunpack.c.h.b16 %v1766
  %v2029 = vunpack.c.l.b16 %v1767
  %v2030 = vunpack.c.h.b16 %v1767
  %v2031 = vunpack.c.l.b16 %v1768
  %v2032 = vunpack.c.h.b16 %v1768
  %v2033 = vunpack.c.l.b16 %v1769
  %v2034 = vunpack.c.h.b16 %v1769
  %v2035 = vunpack.c.l.b16 %v1770
  %v2036 = vunpack.c.h.b16 %v1770
  %v2037 = vunpack.c.l.b16 %v1771
  %v2038 = vunpack.c.h.b16 %v1771
  %v2039 = vunpack.c.l.b16 %v1772
  %v2040 = vunpack.c.h.b16 %v1772
  %v2041 = vunpack.c.l.b16 %v1773
  %v2042 = vunpack.c.h.b16 %v1773
  %v2043 = vunpack.c.l.b16 %v1774
  %v2044 = vunpack.c.h.b16 %v1774
  %v2045 = vunpack.c.l.b16 %v1775
  %v2046 = vunpack.c.h.b16 %v1775
  %v2047 = vunpack.c.l.b16 %v1776
  %v2048 = vunpack.c.h.b16 %v1776
  %v2049 = vunpack.c.l.b16 %v1777
  %v2050 = vunpack.c.h.b16 %v1777
  %v2051 = vunpack.c.l.b16 %v1778
  %v2052 = vunpack.c.h.b16 %v1778
  %v2053 = vunpack.c.l.b16 %v1779
  %v2054 = vunpack.c.h.b16 %v1779
  %v2055 = vunpack.c.l.b16 %v1780
  %v2056 = vunpack.c.h.b16 %v1780
  %v2057 = vunpack.c.l.b16 %v1781
  %v2058 = vunpack.c.h.b16 %v1781
  %v2059 = vunpack.c.l.b16 %v1782
  %v2060 = vunpack.c.h.b16 %v1782
  %v2061 = vunpack.c.l.b16 %v1783
  %v2062 = vunpack.c.h.b16 %v1783
  %v2063 = vunpack.c.l.b16 %v1784
  %v2064 = vunpack.c.h.b16 %v1784
  %v2065 = vunpack.c.l.b16 %v1785
  %v2066 = vunpack.c.h.b16 %v1785
  %v2067 = vunpack.c.l.b16 %v1786
  %v2068 = vunpack.c.h.b16 %v1786
  %v2069 = vunpack.c.l.b16 %v1787
  %v2070 = vunpack.c.h.b16 %v1787
  %v2071 = vunpack.c.l.b16 %v1788
  %v2072 = vunpack.c.h.b16 %v1788
  %v2073 = vunpack.c.l.b16 %v1789
  %v2074 = vunpack.c.h.b16 %v1789
  %v2075 = vunpack.c.l.b16 %v1790
  %v2076 = vunpack.c.h.b16 %v1790
  %v2077 = vunpack.c.l.b16 %v1791
  %v2078 = vunpack.c.h.b16 %v1791
  %v2079 = vunpack.c.l.b16 %v1792
  %v2080 = vunpack.c.h.b16 %v1792
  %v2081 = vunpack.c.l.b16 %v1793
  %v2082 = vunpack.c.h.b16 %v1793
  %v2083 = vunpack.c.l.b16 %v1794
  %v2084 = vunpack.c.h.b16 %v1794
  %v2085 = vunpack.c.l.b16 %v1795
  %v2086 = vunpack.c.h.b16 %v1795
  %v2087 = vunpack.c.l.b16 %v1796
  %v2088 = vunpack.c.h.b16 %v1796
  %v2089 = vunpack.c.l.b16 %v1797
  %v2090 = vunpack.c.h.b16 %v1797
  %v2091 = vunpack.c.l.b16 %v1798
  %v2092 = vunpack.c.h.b16 %v1798
  %v2093 = vunpack.c.l.b16 %v1799
  %v2094 = vunpack.c.h.b16 %v1799
  %v2095 = vunpack.c.l.b16 %v1800
  %v2096 = vunpack.c.h.b16 %v1800
  %v2097 = vunpack.c.l.b16 %v1801
  %v2098 = vunpack.c.h.b16 %v1801
  %v2099 = vunpack.c.l.b16 %v1802
  %v2100 = vunpack.c.h.b16 %v1802
  %v2101 = vunpack.c.l.b16 %v1803
  %v2102 = vunpack.c.h.b16 %v1803
  %v2103 = vunpack.c.l.b16 %v1804
  %v2104 = vunpack.c.h.b16 %v1804
  %v2105 = vunpack.c.l.b16 %v1805
  %v2106 = vunpack.c.h.b16 %v1805
  %v2107 = vunpack.c.l.b16 %v1806
  %v2108 = vunpack.c.h.b16 %v1806
  %v2109 = vpack.c.b16 %v1923, %v1917
  %v2110 = vpack.c.b16 %v1924, %v1918
  %v2111 = vpack.c.b16 %v1925, %v1919
  %v2112 = vpack.c.b16 %v1926, %v1920
  %v2113 = vpack.c.b16 %v1927, %v1921
  %v2114 = vpack.c.b16 %v1928, %v1922
  %v2115 = vpack.c.b16 %v1935, %v1929
  %v2116 = vpack.c.b16 %v1936, %v1930
  %v2117 = vpack.c.b16 %v1937, %v1931
  %v2118 = vpack.c.b16 %v1938, %v1932
  %v2119 = vpack.c.b16 %v1939, %v1933
  %v2120 = vpack.c.b16 %v1940, %v1934
  %v2121 = vpack.c.b16 %v1947, %v1941
  %v2122 = vpack.c.b16 %v1948, %v1942
  %v2123 = vpack.c.b16 %v1949, %v1943
  %v2124 = vpack.c.b16 %v1950, %v1944
  %v2125 = vpack.c.b16 %v1951, %v1945
  %v2126 = vpack.c.b16 %v1952, %v1946
  %v2127 = vpack.c.b16 %v1959, %v1953
  %v2128 = vpack.c.b16 %v1960, %v1954
  %v2129 = vpack.c.b16 %v1961, %v1955
  %v2130 = vpack.c.b16 %v1962, %v1956
  %v2131 = vpack.c.b16 %v1963, %v1957
  %v2132 = vpack.c.b16 %v1964, %v1958
  %v2133 = vpack.c.b16 %v1971, %v1965
  %v2134 = vpack.c.b16 %v1972, %v1966
  %v2135 = vpack.c.b16 %v1973, %v1967
  %v2136 = vpack.c.b16 %v1974, %v1968
  %v2137 = vpack.c.b16 %v1975, %v1969
  %v2138 = vpack.c.b16 %v1976, %v1970
  %v2139 = vpack.c.b16 %v1983, %v1977
  %v2140 = vpack.c.b16 %v1984, %v1978
  %v2141 = vpack.c.b16 %v1985, %v1979
  %v2142 = vpack.c.b16 %v1986, %v1980
  %v2143 = vpack.c.b16 %v1987, %v1981
  %v2144 = vpack.c.b16 %v1988, %v1982
  %v2145 = vpack.c.b16 %v1995, %v1989
  %v2146 = vpack.c.b16 %v1996, %v1990
  %v2147 = vpack.c.b16 %v1997, %v1991
  %v2148 = vpack.c.b16 %v1998, %v1992
  %v2149 = vpack.c.b16 %v1999, %v1993
  %v2150 = vpack.c.b16 %v2000, %v1994
  %v2151 = vpack.c.b16 %v2007, %v2001
  %v2152 = vpack.c.b16 %v2008, %v2002
  %v2153 = vpack.c.b16 %v2009, %v2003
  %v2154 = vpack.c.b16 %v2010, %v2004
  %v2155 = vpack.c.b16 %v2011, %v2005
  %v2156 = vpack.c.b16 %v2012, %v2006
  %v2157 = vpack.c.b16 %v2019, %v2013
  %v2158 = vpack.c.b16 %v2020, %v2014
  %v2159 = vpack.c.b16 %v2021, %v2015
  %v2160 = vpack.c.b16 %v2022, %v2016
  %v2161 = vpack.c.b16 %v2023, %v2017
  %v2162 = vpack.c.b16 %v2024, %v2018
  %v2163 = vpack.c.b16 %v2031, %v2025
  %v2164 = vpack.c.b16 %v2032, %v2026
  %v2165 = vpack.c.b16 %v2033, %v2027
  %v2166 = vpack.c.b16 %v2034, %v2028
  %v2167 = vpack.c.b16 %v2035, %v2029
  %v2168 = vpack.c.b16 %v2036, %v2030
  %v2169 = vpack.c.b16 %v2043, %v2037
  %v2170 = vpack.c.b16 %v2044, %v2038
  %v2171 = vpack.c.b16 %v2045, %v2039
  %v2172 = vpack.c.b16 %v2046, %v2040
  %v2173 = vpack.c.b16 %v2047, %v2041
  %v2174 = vpack.c.b16 %v2048, %v2042
  %v2175 = vpack.c.b16 %v2055, %v2049
  %v2176 = vpack.c.b16 %v2056, %v2050
  %v2177 = vpack.c.b16 %v2057, %v2051
  %v2178 = vpack.c.b16 %v2058, %v2052
  %v2179 = vpack.c.b16 %v2059, %v2053
  %v2180 = vpack.c.b16 %v2060, %v2054
  %v2181 = vpack.c.b16 %v2067, %v2061
  %v2182 = vpack.c.b16 %v2068, %v2062
  %v2183 = vpack.c.b16 %v2069, %v2063
  %v2184 = vpack.c.b16 %v2070, %v2064
  %v2185 = vpack.c.b16 %v2071, %v2065
  %v2186 = vpack.c.b16 %v2072, %v2066
  %v2187 = vpack.c.b16 %v2079, %v2073
  %v2188 = vpack.c.b16 %v2080, %v2074
  %v2189 = vpack.c.b16 %v2081, %v2075
  %v2190 = vpack.c.b16 %v2082, %v2076
  %v2191 = vpack.c.b16 %v2083, %v2077
  %v2192 = vpack.c.b16 %v2084, %v2078
  %v2193 = vpack.c.b16 %v2091, %v2085
  %v2194 = vpack.c.b16 %v2092, %v2086
  %v2195 = vpack.c.b16 %v2093, %v2087
  %v2196 = vpack.c.b16 %v2094, %v2088
  %v2197 = vpack.c.b16 %v2095, %v2089
  %v2198 = vpack.c.b16 %v2096, %v2090
  %v2199 = vpack.c.b16 %v2103, %v2097
  %v2200 = vpack.c.b16 %v2104, %v2098
  %v2201 = vpack.c.b16 %v2105, %v2099
  %v2202 = vpack.c.b16 %v2106, %v2100
  %v2203 = vpack.c.b16 %v2107, %v2101
  %v2204 = vpack.c.b16 %v2108, %v2102
  %2301 = vmatpush.bf16.msra.mxu0 %v2151
  %2302 = vmatpush.bf16.msra.mxu0 %v2145
  %2303 = vmatpush.bf16.msra.mxu0 %v2139
  %2304 = vmatpush.bf16.msra.mxu0 %v2133
  %2305 = vmatpush.bf16.msra.mxu0 %v2127
  %2306 = vmatpush.bf16.msra.mxu0 %v2121
  %2307 = vmatpush.bf16.msra.mxu0 %v2115
  %2308 = vmatpush.bf16.msra.mxu0 %v2109
  %2309 = vmatmul.bf16.gmra.mxu0 0
  %v2310 = vpop.f32.mrf.mxu0
  %v2311 = vadd.f32 %v1809, %v2310
  %v2312 = vpop.f32.mrf.mxu0
  %2313 = vdwg.mxu0
  %2314 = vmatpush.bf16.msra.mxu0 %v2199
  %2315 = vmatpush.bf16.msra.mxu0 %v2193
  %2316 = vmatpush.bf16.msra.mxu0 %v2187
  %2317 = vmatpush.bf16.msra.mxu0 %v2181
  %2318 = vmatpush.bf16.msra.mxu0 %v2175
  %2319 = vmatpush.bf16.msra.mxu0 %v2169
  %2320 = vmatpush.bf16.msra.mxu0 %v2163
  %2321 = vmatpush.bf16.msra.mxu0 %v2157
  %2322 = vmatmul.bf16.gmra.mxu0 0
  %v2323 = vpop.f32.mrf.mxu0
  %v2324 = vadd.f32 %v2311, %v2323
  %v2325 = vpop.f32.mrf.mxu0
  %2326 = vdwg.mxu0
  %2327 = vmatpush.bf16.msra.mxu0 %v2152
  %2328 = vmatpush.bf16.msra.mxu0 %v2146
  %2329 = vmatpush.bf16.msra.mxu0 %v2140
  %2330 = vmatpush.bf16.msra.mxu0 %v2134
  %2331 = vmatpush.bf16.msra.mxu0 %v2128
  %2332 = vmatpush.bf16.msra.mxu0 %v2122
  %2333 = vmatpush.bf16.msra.mxu0 %v2116
  %2334 = vmatpush.bf16.msra.mxu0 %v2110
  %2335 = vmatmul.bf16.gmra.mxu0 0
  %v2336 = vpop.f32.mrf.mxu0
  %v2337 = vadd.f32 %v1810, %v2336
  %v2338 = vpop.f32.mrf.mxu0
  %2339 = vdwg.mxu0
  %2340 = vmatpush.bf16.msra.mxu0 %v2200
  %2341 = vmatpush.bf16.msra.mxu0 %v2194
  %2342 = vmatpush.bf16.msra.mxu0 %v2188
  %2343 = vmatpush.bf16.msra.mxu0 %v2182
  %2344 = vmatpush.bf16.msra.mxu0 %v2176
  %2345 = vmatpush.bf16.msra.mxu0 %v2170
  %2346 = vmatpush.bf16.msra.mxu0 %v2164
  %2347 = vmatpush.bf16.msra.mxu0 %v2158
  %2348 = vmatmul.bf16.gmra.mxu0 0
  %v2349 = vpop.f32.mrf.mxu0
  %v2350 = vadd.f32 %v2337, %v2349
  %v2351 = vpop.f32.mrf.mxu0
  %2352 = vdwg.mxu0
  %2353 = vmatpush.bf16.msra.mxu0 %v2153
  %2354 = vmatpush.bf16.msra.mxu0 %v2147
  %2355 = vmatpush.bf16.msra.mxu0 %v2141
  %2356 = vmatpush.bf16.msra.mxu0 %v2135
  %2357 = vmatpush.bf16.msra.mxu0 %v2129
  %2358 = vmatpush.bf16.msra.mxu0 %v2123
  %2359 = vmatpush.bf16.msra.mxu0 %v2117
  %2360 = vmatpush.bf16.msra.mxu0 %v2111
  %2361 = vmatmul.bf16.gmra.mxu0 0
  %v2362 = vpop.f32.mrf.mxu0
  %v2363 = vadd.f32 %v1811, %v2362
  %v2364 = vpop.f32.mrf.mxu0
  %2365 = vdwg.mxu0
  %2366 = vmatpush.bf16.msra.mxu0 %v2201
  %2367 = vmatpush.bf16.msra.mxu0 %v2195
  %2368 = vmatpush.bf16.msra.mxu0 %v2189
  %2369 = vmatpush.bf16.msra.mxu0 %v2183
  %2370 = vmatpush.bf16.msra.mxu0 %v2177
  %2371 = vmatpush.bf16.msra.mxu0 %v2171
  %2372 = vmatpush.bf16.msra.mxu0 %v2165
  %2373 = vmatpush.bf16.msra.mxu0 %v2159
  %2374 = vmatmul.bf16.gmra.mxu0 0
  %v2375 = vpop.f32.mrf.mxu0
  %v2376 = vadd.f32 %v2363, %v2375
  %v2377 = vpop.f32.mrf.mxu0
  %2378 = vdwg.mxu0
  %2379 = vmatpush.bf16.msra.mxu0 %v2154
  %2380 = vmatpush.bf16.msra.mxu0 %v2148
  %2381 = vmatpush.bf16.msra.mxu0 %v2142
  %2382 = vmatpush.bf16.msra.mxu0 %v2136
  %2383 = vmatpush.bf16.msra.mxu0 %v2130
  %2384 = vmatpush.bf16.msra.mxu0 %v2124
  %2385 = vmatpush.bf16.msra.mxu0 %v2118
  %2386 = vmatpush.bf16.msra.mxu0 %v2112
  %2387 = vmatmul.bf16.gmra.mxu0 0
  %v2388 = vpop.f32.mrf.mxu0
  %v2389 = vadd.f32 %v1812, %v2388
  %v2390 = vpop.f32.mrf.mxu0
  %2391 = vdwg.mxu0
  %2392 = vmatpush.bf16.msra.mxu0 %v2202
  %2393 = vmatpush.bf16.msra.mxu0 %v2196
  %2394 = vmatpush.bf16.msra.mxu0 %v2190
  %2395 = vmatpush.bf16.msra.mxu0 %v2184
  %2396 = vmatpush.bf16.msra.mxu0 %v2178
  %2397 = vmatpush.bf16.msra.mxu0 %v2172
  %2398 = vmatpush.bf16.msra.mxu0 %v2166
  %2399 = vmatpush.bf16.msra.mxu0 %v2160
  %2400 = vmatmul.bf16.gmra.mxu0 0
  %v2401 = vpop.f32.mrf.mxu0
  %v2402 = vadd.f32 %v2389, %v2401
  %v2403 = vpop.f32.mrf.mxu0
  %2404 = vdwg.mxu0
  %2405 = vmatpush.bf16.msra.mxu0 %v2155
  %2406 = vmatpush.bf16.msra.mxu0 %v2149
  %2407 = vmatpush.bf16.msra.mxu0 %v2143
  %2408 = vmatpush.bf16.msra.mxu0 %v2137
  %2409 = vmatpush.bf16.msra.mxu0 %v2131
  %2410 = vmatpush.bf16.msra.mxu0 %v2125
  %2411 = vmatpush.bf16.msra.mxu0 %v2119
  %2412 = vmatpush.bf16.msra.mxu0 %v2113
  %2413 = vmatmul.bf16.gmra.mxu0 0
  %v2414 = vpop.f32.mrf.mxu0
  %v2415 = vadd.f32 %v1813, %v2414
  %v2416 = vpop.f32.mrf.mxu0
  %2417 = vdwg.mxu0
  %2418 = vmatpush.bf16.msra.mxu0 %v2203
  %2419 = vmatpush.bf16.msra.mxu0 %v2197
  %2420 = vmatpush.bf16.msra.mxu0 %v2191
  %2421 = vmatpush.bf16.msra.mxu0 %v2185
  %2422 = vmatpush.bf16.msra.mxu0 %v2179
  %2423 = vmatpush.bf16.msra.mxu0 %v2173
  %2424 = vmatpush.bf16.msra.mxu0 %v2167
  %2425 = vmatpush.bf16.msra.mxu0 %v2161
  %2426 = vmatmul.bf16.gmra.mxu0 0
  %v2427 = vpop.f32.mrf.mxu0
  %v2428 = vadd.f32 %v2415, %v2427
  %v2429 = vpop.f32.mrf.mxu0
  %2430 = vdwg.mxu0
  %2431 = vmatpush.bf16.msra.mxu0 %v2156
  %2432 = vmatpush.bf16.msra.mxu0 %v2150
  %2433 = vmatpush.bf16.msra.mxu0 %v2144
  %2434 = vmatpush.bf16.msra.mxu0 %v2138
  %2435 = vmatpush.bf16.msra.mxu0 %v2132
  %2436 = vmatpush.bf16.msra.mxu0 %v2126
  %2437 = vmatpush.bf16.msra.mxu0 %v2120
  %2438 = vmatpush.bf16.msra.mxu0 %v2114
  %2439 = vmatmul.bf16.gmra.mxu0 0
  %v2440 = vpop.f32.mrf.mxu0
  %v2441 = vadd.f32 %v1814, %v2440
  %v2442 = vpop.f32.mrf.mxu0
  %2443 = vdwg.mxu0
  %2444 = vmatpush.bf16.msra.mxu0 %v2204
  %2445 = vmatpush.bf16.msra.mxu0 %v2198
  %2446 = vmatpush.bf16.msra.mxu0 %v2192
  %2447 = vmatpush.bf16.msra.mxu0 %v2186
  %2448 = vmatpush.bf16.msra.mxu0 %v2180
  %2449 = vmatpush.bf16.msra.mxu0 %v2174
  %2450 = vmatpush.bf16.msra.mxu0 %v2168
  %2451 = vmatpush.bf16.msra.mxu0 %v2162
  %2452 = vmatmul.bf16.gmra.mxu0 0
  %v2453 = vpop.f32.mrf.mxu0
  %v2454 = vadd.f32 %v2441, %v2453
  %v2455 = vpop.f32.mrf.mxu0
  %2456 = vdwg.mxu0
  %v2460 = vrot.slane %v1682, 2
  %v2461 = vrot.slane %v1695, 2
  %v2462 = vrot.slane %v1708, 2
  %v2466 = vadd.f32 %v1643, %v2324
  %v2467 = vadd.f32 %v1656, %v2350
  %v2468 = vadd.f32 %v2460, %v2402
  %v2469 = vadd.f32 %v2461, %v2428
  %v2470 = vmul.f32 %v2466, 0.5
  %v2471 = vmul.f32 %v2468, 0.5
  %v2472 = vtanh.pop %v2470
  %v2473 = vtanh.pop %v2471
  %v2474 = vadd.f32 %v2472, 1.0
  %v2475 = vadd.f32 %v2473, 1.0
  %v2476 = vmul.f32 %v2474, 0.5
  %v2477 = vmul.f32 %v2475, 0.5
  %v2478 = vmul.f32 %v2467, 0.5
  %v2479 = vmul.f32 %v2469, 0.5
  %v2480 = vtanh.pop %v2478
  %v2481 = vtanh.pop %v2479
  %v2482 = vadd.f32 %v2480, 1.0
  %v2483 = vadd.f32 %v2481, 1.0
  %v2484 = vmul.f32 %v2482, 0.5
  %v2485 = vmul.f32 %v2483, 0.5
  %v2486 = vmul.f32 %v2476, %v2376
  %v2487 = vmul.f32 %v2477, %v2454
  %v2488 = vadd.f32 %v1669, %v2486
  %v2489 = vadd.f32 %v2462, %v2487
  %v2490 = vtanh.pop %v2488
  %v2491 = vtanh.pop %v2489
  %v2492 = vsub.f32 1.0, %v2484
  %v2493 = vsub.f32 1.0, %v2485
  %v2494 = vmul.f32 %v2492, %v2490
  %v2495 = vmul.f32 %v2493, %v2491
  %v2496 = vmul.f32 %v2484, 0.0
  %v2497 = vmul.f32 %v2485, 0.0
  %v2498 = vadd.f32 %v2494, %v2496
  %v2499 = vadd.f32 %v2495, %v2497
  %v2500 = vpack.c.bf16 %v2498, %v2498
  %v2501 = vpack.c.bf16 %v2499, %v2499
  %2502 = vmatpush.bf16.msra.mxu0 %v2151
  %2503 = vmatpush.bf16.msra.mxu0 %v2145
  %2504 = vmatpush.bf16.msra.mxu0 %v2139
  %2505 = vmatpush.bf16.msra.mxu0 %v2133
  %2506 = vmatpush.bf16.msra.mxu0 %v2127
  %2507 = vmatpush.bf16.msra.mxu0 %v2121
  %2508 = vmatpush.bf16.msra.mxu0 %v2115
  %2509 = vmatpush.bf16.msra.mxu0 %v2109
  %2510 = vmatmul.bf16.gmra.mxu0 %v2500
  %v2511 = vpop.f32.mrf.mxu0
  %v2512 = vadd.f32 %v1809, %v2511
  %v2513 = vpop.f32.mrf.mxu0
  %2514 = vdwg.mxu0
  %2515 = vmatpush.bf16.msra.mxu0 %v2199
  %2516 = vmatpush.bf16.msra.mxu0 %v2193
  %2517 = vmatpush.bf16.msra.mxu0 %v2187
  %2518 = vmatpush.bf16.msra.mxu0 %v2181
  %2519 = vmatpush.bf16.msra.mxu0 %v2175
  %2520 = vmatpush.bf16.msra.mxu0 %v2169
  %2521 = vmatpush.bf16.msra.mxu0 %v2163
  %2522 = vmatpush.bf16.msra.mxu0 %v2157
  %2523 = vmatmul.bf16.gmra.mxu0 %v2501
  %v2524 = vpop.f32.mrf.mxu0
  %v2525 = vadd.f32 %v2512, %v2524
  %v2526 = vpop.f32.mrf.mxu0
  %2527 = vdwg.mxu0
  %2528 = vmatpush.bf16.msra.mxu0 %v2152
  %2529 = vmatpush.bf16.msra.mxu0 %v2146
  %2530 = vmatpush.bf16.msra.mxu0 %v2140
  %2531 = vmatpush.bf16.msra.mxu0 %v2134
  %2532 = vmatpush.bf16.msra.mxu0 %v2128
  %2533 = vmatpush.bf16.msra.mxu0 %v2122
  %2534 = vmatpush.bf16.msra.mxu0 %v2116
  %2535 = vmatpush.bf16.msra.mxu0 %v2110
  %2536 = vmatmul.bf16.gmra.mxu0 %v2500
  %v2537 = vpop.f32.mrf.mxu0
  %v2538 = vadd.f32 %v1810, %v2537
  %v2539 = vpop.f32.mrf.mxu0
  %2540 = vdwg.mxu0
  %2541 = vmatpush.bf16.msra.mxu0 %v2200
  %2542 = vmatpush.bf16.msra.mxu0 %v2194
  %2543 = vmatpush.bf16.msra.mxu0 %v2188
  %2544 = vmatpush.bf16.msra.mxu0 %v2182
  %2545 = vmatpush.bf16.msra.mxu0 %v2176
  %2546 = vmatpush.bf16.msra.mxu0 %v2170
  %2547 = vmatpush.bf16.msra.mxu0 %v2164
  %2548 = vmatpush.bf16.msra.mxu0 %v2158
  %2549 = vmatmul.bf16.gmra.mxu0 %v2501
  %v2550 = vpop.f32.mrf.mxu0
  %v2551 = vadd.f32 %v2538, %v2550
  %v2552 = vpop.f32.mrf.mxu0
  %2553 = vdwg.mxu0
  %2554 = vmatpush.bf16.msra.mxu0 %v2153
  %2555 = vmatpush.bf16.msra.mxu0 %v2147
  %2556 = vmatpush.bf16.msra.mxu0 %v2141
  %2557 = vmatpush.bf16.msra.mxu0 %v2135
  %2558 = vmatpush.bf16.msra.mxu0 %v2129
  %2559 = vmatpush.bf16.msra.mxu0 %v2123
  %2560 = vmatpush.bf16.msra.mxu0 %v2117
  %2561 = vmatpush.bf16.msra.mxu0 %v2111
  %2562 = vmatmul.bf16.gmra.mxu0 %v2500
  %v2563 = vpop.f32.mrf.mxu0
  %v2564 = vadd.f32 %v1811, %v2563
  %v2565 = vpop.f32.mrf.mxu0
  %2566 = vdwg.mxu0
  %2567 = vmatpush.bf16.msra.mxu0 %v2201
  %2568 = vmatpush.bf16.msra.mxu0 %v2195
  %2569 = vmatpush.bf16.msra.mxu0 %v2189
  %2570 = vmatpush.bf16.msra.mxu0 %v2183
  %2571 = vmatpush.bf16.msra.mxu0 %v2177
  %2572 = vmatpush.bf16.msra.mxu0 %v2171
  %2573 = vmatpush.bf16.msra.mxu0 %v2165
  %2574 = vmatpush.bf16.msra.mxu0 %v2159
  %2575 = vmatmul.bf16.gmra.mxu0 %v2501
  %v2576 = vpop.f32.mrf.mxu0
  %v2577 = vadd.f32 %v2564, %v2576
  %v2578 = vpop.f32.mrf.mxu0
  %2579 = vdwg.mxu0
  %2580 = vmatpush.bf16.msra.mxu0 %v2154
  %2581 = vmatpush.bf16.msra.mxu0 %v2148
  %2582 = vmatpush.bf16.msra.mxu0 %v2142
  %2583 = vmatpush.bf16.msra.mxu0 %v2136
  %2584 = vmatpush.bf16.msra.mxu0 %v2130
  %2585 = vmatpush.bf16.msra.mxu0 %v2124
  %2586 = vmatpush.bf16.msra.mxu0 %v2118
  %2587 = vmatpush.bf16.msra.mxu0 %v2112
  %2588 = vmatmul.bf16.gmra.mxu0 %v2500
  %v2589 = vpop.f32.mrf.mxu0
  %v2590 = vadd.f32 %v1812, %v2589
  %v2591 = vpop.f32.mrf.mxu0
  %2592 = vdwg.mxu0
  %2593 = vmatpush.bf16.msra.mxu0 %v2202
  %2594 = vmatpush.bf16.msra.mxu0 %v2196
  %2595 = vmatpush.bf16.msra.mxu0 %v2190
  %2596 = vmatpush.bf16.msra.mxu0 %v2184
  %2597 = vmatpush.bf16.msra.mxu0 %v2178
  %2598 = vmatpush.bf16.msra.mxu0 %v2172
  %2599 = vmatpush.bf16.msra.mxu0 %v2166
  %2600 = vmatpush.bf16.msra.mxu0 %v2160
  %2601 = vmatmul.bf16.gmra.mxu0 %v2501
  %v2602 = vpop.f32.mrf.mxu0
  %v2603 = vadd.f32 %v2590, %v2602
  %v2604 = vpop.f32.mrf.mxu0
  %2605 = vdwg.mxu0
  %2606 = vmatpush.bf16.msra.mxu0 %v2155
  %2607 = vmatpush.bf16.msra.mxu0 %v2149
  %2608 = vmatpush.bf16.msra.mxu0 %v2143
  %2609 = vmatpush.bf16.msra.mxu0 %v2137
  %2610 = vmatpush.bf16.msra.mxu0 %v2131
  %2611 = vmatpush.bf16.msra.mxu0 %v2125
  %2612 = vmatpush.bf16.msra.mxu0 %v2119
  %2613 = vmatpush.bf16.msra.mxu0 %v2113
  %2614 = vmatmul.bf16.gmra.mxu0 %v2500
  %v2615 = vpop.f32.mrf.mxu0
  %v2616 = vadd.f32 %v1813, %v2615
  %v2617 = vpop.f32.mrf.mxu0
  %2618 = vdwg.mxu0
  %2619 = vmatpush.bf16.msra.mxu0 %v2203
  %2620 = vmatpush.bf16.msra.mxu0 %v2197
  %2621 = vmatpush.bf16.msra.mxu0 %v2191
  %2622 = vmatpush.bf16.msra.mxu0 %v2185
  %2623 = vmatpush.bf16.msra.mxu0 %v2179
  %2624 = vmatpush.bf16.msra.mxu0 %v2173
  %2625 = vmatpush.bf16.msra.mxu0 %v2167
  %2626 = vmatpush.bf16.msra.mxu0 %v2161
  %2627 = vmatmul.bf16.gmra.mxu0 %v2501
  %v2628 = vpop.f32.mrf.mxu0
  %v2629 = vadd.f32 %v2616, %v2628
  %v2630 = vpop.f32.mrf.mxu0
  %2631 = vdwg.mxu0
  %2632 = vmatpush.bf16.msra.mxu0 %v2156
  %2633 = vmatpush.bf16.msra.mxu0 %v2150
  %2634 = vmatpush.bf16.msra.mxu0 %v2144
  %2635 = vmatpush.bf16.msra.mxu0 %v2138
  %2636 = vmatpush.bf16.msra.mxu0 %v2132
  %2637 = vmatpush.bf16.msra.mxu0 %v2126
  %2638 = vmatpush.bf16.msra.mxu0 %v2120
  %2639 = vmatpush.bf16.msra.mxu0 %v2114
  %2640 = vmatmul.bf16.gmra.mxu0 %v2500
  %v2641 = vpop.f32.mrf.mxu0
  %v2642 = vadd.f32 %v1814, %v2641
  %v2643 = vpop.f32.mrf.mxu0
  %2644 = vdwg.mxu0
  %2645 = vmatpush.bf16.msra.mxu0 %v2204
  %2646 = vmatpush.bf16.msra.mxu0 %v2198
  %2647 = vmatpush.bf16.msra.mxu0 %v2192
  %2648 = vmatpush.bf16.msra.mxu0 %v2186
  %2649 = vmatpush.bf16.msra.mxu0 %v2180
  %2650 = vmatpush.bf16.msra.mxu0 %v2174
  %2651 = vmatpush.bf16.msra.mxu0 %v2168
  %2652 = vmatpush.bf16.msra.mxu0 %v2162
  %2653 = vmatmul.bf16.gmra.mxu0 %v2501
  %v2654 = vpop.f32.mrf.mxu0
  %v2655 = vadd.f32 %v2642, %v2654
  %v2656 = vpop.f32.mrf.mxu0
  %2657 = vdwg.mxu0
  %v2658 = vrot.slane %v1682, 6
  %v2659 = vrot.slane %v1695, 6
  %v2660 = vrot.slane %v1708, 6
  %v2668 = vrot.slane %v2525, 6
  %v2669 = vrot.slane %v2551, 6
  %v2670 = vrot.slane %v2603, 6
  %v2671 = vrot.slane %v2629, 6
  %v2676 = vadd.f32 %v1643, %v2668
  %v2677 = vadd.f32 %v1656, %v2669
  %v2678 = vadd.f32 %v2658, %v2670
  %v2679 = vadd.f32 %v2659, %v2671
  %v2680 = vmul.f32 %v2676, 0.5
  %v2681 = vmul.f32 %v2678, 0.5
  %v2682 = vtanh.pop %v2680
  %v2683 = vtanh.pop %v2681
  %v2684 = vadd.f32 %v2682, 1.0
  %v2685 = vadd.f32 %v2683, 1.0
  %v2686 = vmul.f32 %v2684, 0.5
  %v2687 = vmul.f32 %v2685, 0.5
  %v2688 = vmul.f32 %v2677, 0.5
  %v2689 = vmul.f32 %v2679, 0.5
  %v2690 = vtanh.pop %v2688
  %v2691 = vtanh.pop %v2689
  %v2692 = vadd.f32 %v2690, 1.0
  %v2693 = vadd.f32 %v2691, 1.0
  %v2694 = vmul.f32 %v2692, 0.5
  %v2695 = vmul.f32 %v2693, 0.5
  %v2698 = vrot.slane %v2577, 6
  %v2699 = vrot.slane %v2655, 6
  %v2702 = vmul.f32 %v2686, %v2698
  %v2703 = vmul.f32 %v2687, %v2699
  %v2704 = vadd.f32 %v1669, %v2702
  %v2705 = vadd.f32 %v2660, %v2703
  %v2706 = vtanh.pop %v2704
  %v2707 = vtanh.pop %v2705
  %v2708 = vsub.f32 1.0, %v2694
  %v2709 = vsub.f32 1.0, %v2695
  %v2710 = vmul.f32 %v2708, %v2706
  %v2711 = vmul.f32 %v2709, %v2707
  %v2714 = vrot.slane %v2498, 6
  %v2715 = vrot.slane %v2499, 6
  %v2718 = vmul.f32 %v2694, %v2714
  %v2719 = vmul.f32 %v2695, %v2715
  %v2720 = vadd.f32 %v2710, %v2718
  %v2721 = vadd.f32 %v2711, %v2719
  %v2723 = vrot.slane %v2721, 2
  %vm2725 = vcmask 1041408
  %v2726 = vsel %vm2725, %v2498, %v2720
  %v2727 = vsel %vm2725, %v2723, %v2715
  %v2728 = vpack.c.bf16 %v2726, %v2726
  %v2729 = vpack.c.bf16 %v2727, %v2727
  %v2730 = vld [vmem:[%s7] sm:$0xff]
  %v2731 = vld [vmem:[%s7 + $0x8] sm:$0xff]
  %v2732 = vld [vmem:[%s7 + $0x10] sm:$0xff]
  %v2733 = vld [vmem:[%s7 + $0x18] sm:$0xff]
  %v2734 = vld [vmem:[%s7 + $0x20] sm:$0xff]
  %v2735 = vld [vmem:[%s7 + $0x28] sm:$0xff]
  %v2736 = vld [vmem:[%s7 + $0x30] sm:$0xff]
  %v2737 = vld [vmem:[%s7 + $0x38] sm:$0xff]
  %v2738 = vld [vmem:[%s7 + $0x40] sm:$0xff]
  %v2739 = vld [vmem:[%s7 + $0x48] sm:$0xff]
  %v2740 = vld [vmem:[%s7 + $0x50] sm:$0xff]
  %v2741 = vld [vmem:[%s7 + $0x58] sm:$0xff]
  %v2742 = vld [vmem:[%s7 + $0x60] sm:$0xff]
  %v2743 = vld [vmem:[%s7 + $0x68] sm:$0xff]
  %v2744 = vld [vmem:[%s7 + $0x70] sm:$0xff]
  %v2745 = vld [vmem:[%s7 + $0x78] sm:$0xff]
  %v2746 = vld [vmem:[%s7 + $0x80] sm:$0xff]
  %v2747 = vld [vmem:[%s7 + $0x88] sm:$0xff]
  %v2748 = vld [vmem:[%s7 + $0x90] sm:$0xff]
  %v2749 = vld [vmem:[%s7 + $0x98] sm:$0xff]
  %v2750 = vld [vmem:[%s7 + $0xa0] sm:$0xff]
  %v2751 = vld [vmem:[%s7 + $0xa8] sm:$0xff]
  %v2752 = vld [vmem:[%s7 + $0xb0] sm:$0xff]
  %v2753 = vld [vmem:[%s7 + $0xb8] sm:$0xff]
  %v2754 = vld [vmem:[%s7 + $0xc0] sm:$0xff]
  %v2755 = vld [vmem:[%s7 + $0xc8] sm:$0xff]
  %v2756 = vld [vmem:[%s7 + $0xd0] sm:$0xff]
  %v2757 = vld [vmem:[%s7 + $0xd8] sm:$0xff]
  %v2758 = vld [vmem:[%s7 + $0xe0] sm:$0xff]
  %v2759 = vld [vmem:[%s7 + $0xe8] sm:$0xff]
  %v2760 = vld [vmem:[%s7 + $0xf0] sm:$0xff]
  %v2761 = vld [vmem:[%s7 + $0xf8] sm:$0xff]
  %v2762 = vld [vmem:[%s7 + $0x100] sm:$0xff]
  %v2763 = vld [vmem:[%s7 + $0x108] sm:$0xff]
  %v2764 = vld [vmem:[%s7 + $0x110] sm:$0xff]
  %v2765 = vld [vmem:[%s7 + $0x118] sm:$0xff]
  %v2766 = vld [vmem:[%s7 + $0x120] sm:$0xff]
  %v2767 = vld [vmem:[%s7 + $0x128] sm:$0xff]
  %v2768 = vld [vmem:[%s7 + $0x130] sm:$0xff]
  %v2769 = vld [vmem:[%s7 + $0x138] sm:$0xff]
  %v2770 = vld [vmem:[%s7 + $0x140] sm:$0xff]
  %v2771 = vld [vmem:[%s7 + $0x148] sm:$0xff]
  %v2772 = vld [vmem:[%s7 + $0x150] sm:$0xff]
  %v2773 = vld [vmem:[%s7 + $0x158] sm:$0xff]
  %v2774 = vld [vmem:[%s7 + $0x160] sm:$0xff]
  %v2775 = vld [vmem:[%s7 + $0x168] sm:$0xff]
  %v2776 = vld [vmem:[%s7 + $0x170] sm:$0xff]
  %v2777 = vld [vmem:[%s7 + $0x178] sm:$0xff]
  %v2778 = vld [vmem:[%s7 + $0x180] sm:$0xff]
  %v2779 = vld [vmem:[%s7 + $0x188] sm:$0xff]
  %v2780 = vld [vmem:[%s7 + $0x190] sm:$0xff]
  %v2781 = vld [vmem:[%s7 + $0x198] sm:$0xff]
  %v2782 = vld [vmem:[%s7 + $0x1a0] sm:$0xff]
  %v2783 = vld [vmem:[%s7 + $0x1a8] sm:$0xff]
  %v2784 = vld [vmem:[%s7 + $0x1b0] sm:$0xff]
  %v2785 = vld [vmem:[%s7 + $0x1b8] sm:$0xff]
  %v2786 = vld [vmem:[%s7 + $0x1c0] sm:$0xff]
  %v2787 = vld [vmem:[%s7 + $0x1c8] sm:$0xff]
  %v2788 = vld [vmem:[%s7 + $0x1d0] sm:$0xff]
  %v2789 = vld [vmem:[%s7 + $0x1d8] sm:$0xff]
  %v2790 = vld [vmem:[%s7 + $0x1e0] sm:$0xff]
  %v2791 = vld [vmem:[%s7 + $0x1e8] sm:$0xff]
  %v2792 = vld [vmem:[%s7 + $0x1f0] sm:$0xff]
  %v2793 = vld [vmem:[%s7 + $0x1f8] sm:$0xff]
  %v2794 = vld [vmem:[%s7 + $0x200] sm:$0xff]
  %v2795 = vld [vmem:[%s7 + $0x208] sm:$0xff]
  %v2796 = vld [vmem:[%s7 + $0x210] sm:$0xff]
  %v2797 = vld [vmem:[%s7 + $0x218] sm:$0xff]
  %v2798 = vld [vmem:[%s7 + $0x220] sm:$0xff]
  %v2799 = vld [vmem:[%s7 + $0x228] sm:$0xff]
  %v2800 = vld [vmem:[%s7 + $0x230] sm:$0xff]
  %v2801 = vld [vmem:[%s7 + $0x238] sm:$0xff]
  %v2802 = vld [vmem:[%s7 + $0x240] sm:$0xff]
  %v2803 = vld [vmem:[%s7 + $0x248] sm:$0xff]
  %v2804 = vld [vmem:[%s7 + $0x250] sm:$0xff]
  %v2805 = vld [vmem:[%s7 + $0x258] sm:$0xff]
  %v2806 = vld [vmem:[%s7 + $0x260] sm:$0xff]
  %v2807 = vld [vmem:[%s7 + $0x268] sm:$0xff]
  %v2808 = vld [vmem:[%s7 + $0x270] sm:$0xff]
  %v2809 = vld [vmem:[%s7 + $0x278] sm:$0xff]
  %v2810 = vld [vmem:[%s7 + $0x280] sm:$0xff]
  %v2811 = vld [vmem:[%s7 + $0x288] sm:$0xff]
  %v2812 = vld [vmem:[%s7 + $0x290] sm:$0xff]
  %v2813 = vld [vmem:[%s7 + $0x298] sm:$0xff]
  %v2814 = vld [vmem:[%s7 + $0x2a0] sm:$0xff]
  %v2815 = vld [vmem:[%s7 + $0x2a8] sm:$0xff]
  %v2816 = vld [vmem:[%s7 + $0x2b0] sm:$0xff]
  %v2817 = vld [vmem:[%s7 + $0x2b8] sm:$0xff]
  %v2818 = vld [vmem:[%s7 + $0x2c0] sm:$0xff]
  %v2819 = vld [vmem:[%s7 + $0x2c8] sm:$0xff]
  %v2820 = vld [vmem:[%s7 + $0x2d0] sm:$0xff]
  %v2821 = vld [vmem:[%s7 + $0x2d8] sm:$0xff]
  %v2822 = vld [vmem:[%s7 + $0x2e0] sm:$0xff]
  %v2823 = vld [vmem:[%s7 + $0x2e8] sm:$0xff]
  %v2824 = vld [vmem:[%s7 + $0x2f0] sm:$0xff]
  %v2825 = vld [vmem:[%s7 + $0x2f8] sm:$0xff]
  %v2826 = vld [vmem:[%s8] sm:$0x3f]
  %v2828 = vperm.slane %v2826, 0
  %v2829 = vperm.slane %v2826, 1
  %v2830 = vperm.slane %v2826, 2
  %v2831 = vperm.slane %v2826, 3
  %v2832 = vperm.slane %v2826, 4
  %v2833 = vperm.slane %v2826, 5
  %v2936 = vunpack.c.l.b16 %v2730
  %v2937 = vunpack.c.h.b16 %v2730
  %v2938 = vunpack.c.l.b16 %v2731
  %v2939 = vunpack.c.h.b16 %v2731
  %v2940 = vunpack.c.l.b16 %v2732
  %v2941 = vunpack.c.h.b16 %v2732
  %v2942 = vunpack.c.l.b16 %v2733
  %v2943 = vunpack.c.h.b16 %v2733
  %v2944 = vunpack.c.l.b16 %v2734
  %v2945 = vunpack.c.h.b16 %v2734
  %v2946 = vunpack.c.l.b16 %v2735
  %v2947 = vunpack.c.h.b16 %v2735
  %v2948 = vunpack.c.l.b16 %v2736
  %v2949 = vunpack.c.h.b16 %v2736
  %v2950 = vunpack.c.l.b16 %v2737
  %v2951 = vunpack.c.h.b16 %v2737
  %v2952 = vunpack.c.l.b16 %v2738
  %v2953 = vunpack.c.h.b16 %v2738
  %v2954 = vunpack.c.l.b16 %v2739
  %v2955 = vunpack.c.h.b16 %v2739
  %v2956 = vunpack.c.l.b16 %v2740
  %v2957 = vunpack.c.h.b16 %v2740
  %v2958 = vunpack.c.l.b16 %v2741
  %v2959 = vunpack.c.h.b16 %v2741
  %v2960 = vunpack.c.l.b16 %v2742
  %v2961 = vunpack.c.h.b16 %v2742
  %v2962 = vunpack.c.l.b16 %v2743
  %v2963 = vunpack.c.h.b16 %v2743
  %v2964 = vunpack.c.l.b16 %v2744
  %v2965 = vunpack.c.h.b16 %v2744
  %v2966 = vunpack.c.l.b16 %v2745
  %v2967 = vunpack.c.h.b16 %v2745
  %v2968 = vunpack.c.l.b16 %v2746
  %v2969 = vunpack.c.h.b16 %v2746
  %v2970 = vunpack.c.l.b16 %v2747
  %v2971 = vunpack.c.h.b16 %v2747
  %v2972 = vunpack.c.l.b16 %v2748
  %v2973 = vunpack.c.h.b16 %v2748
  %v2974 = vunpack.c.l.b16 %v2749
  %v2975 = vunpack.c.h.b16 %v2749
  %v2976 = vunpack.c.l.b16 %v2750
  %v2977 = vunpack.c.h.b16 %v2750
  %v2978 = vunpack.c.l.b16 %v2751
  %v2979 = vunpack.c.h.b16 %v2751
  %v2980 = vunpack.c.l.b16 %v2752
  %v2981 = vunpack.c.h.b16 %v2752
  %v2982 = vunpack.c.l.b16 %v2753
  %v2983 = vunpack.c.h.b16 %v2753
  %v2984 = vunpack.c.l.b16 %v2754
  %v2985 = vunpack.c.h.b16 %v2754
  %v2986 = vunpack.c.l.b16 %v2755
  %v2987 = vunpack.c.h.b16 %v2755
  %v2988 = vunpack.c.l.b16 %v2756
  %v2989 = vunpack.c.h.b16 %v2756
  %v2990 = vunpack.c.l.b16 %v2757
  %v2991 = vunpack.c.h.b16 %v2757
  %v2992 = vunpack.c.l.b16 %v2758
  %v2993 = vunpack.c.h.b16 %v2758
  %v2994 = vunpack.c.l.b16 %v2759
  %v2995 = vunpack.c.h.b16 %v2759
  %v2996 = vunpack.c.l.b16 %v2760
  %v2997 = vunpack.c.h.b16 %v2760
  %v2998 = vunpack.c.l.b16 %v2761
  %v2999 = vunpack.c.h.b16 %v2761
  %v3000 = vunpack.c.l.b16 %v2762
  %v3001 = vunpack.c.h.b16 %v2762
  %v3002 = vunpack.c.l.b16 %v2763
  %v3003 = vunpack.c.h.b16 %v2763
  %v3004 = vunpack.c.l.b16 %v2764
  %v3005 = vunpack.c.h.b16 %v2764
  %v3006 = vunpack.c.l.b16 %v2765
  %v3007 = vunpack.c.h.b16 %v2765
  %v3008 = vunpack.c.l.b16 %v2766
  %v3009 = vunpack.c.h.b16 %v2766
  %v3010 = vunpack.c.l.b16 %v2767
  %v3011 = vunpack.c.h.b16 %v2767
  %v3012 = vunpack.c.l.b16 %v2768
  %v3013 = vunpack.c.h.b16 %v2768
  %v3014 = vunpack.c.l.b16 %v2769
  %v3015 = vunpack.c.h.b16 %v2769
  %v3016 = vunpack.c.l.b16 %v2770
  %v3017 = vunpack.c.h.b16 %v2770
  %v3018 = vunpack.c.l.b16 %v2771
  %v3019 = vunpack.c.h.b16 %v2771
  %v3020 = vunpack.c.l.b16 %v2772
  %v3021 = vunpack.c.h.b16 %v2772
  %v3022 = vunpack.c.l.b16 %v2773
  %v3023 = vunpack.c.h.b16 %v2773
  %v3024 = vunpack.c.l.b16 %v2774
  %v3025 = vunpack.c.h.b16 %v2774
  %v3026 = vunpack.c.l.b16 %v2775
  %v3027 = vunpack.c.h.b16 %v2775
  %v3028 = vunpack.c.l.b16 %v2776
  %v3029 = vunpack.c.h.b16 %v2776
  %v3030 = vunpack.c.l.b16 %v2777
  %v3031 = vunpack.c.h.b16 %v2777
  %v3032 = vunpack.c.l.b16 %v2778
  %v3033 = vunpack.c.h.b16 %v2778
  %v3034 = vunpack.c.l.b16 %v2779
  %v3035 = vunpack.c.h.b16 %v2779
  %v3036 = vunpack.c.l.b16 %v2780
  %v3037 = vunpack.c.h.b16 %v2780
  %v3038 = vunpack.c.l.b16 %v2781
  %v3039 = vunpack.c.h.b16 %v2781
  %v3040 = vunpack.c.l.b16 %v2782
  %v3041 = vunpack.c.h.b16 %v2782
  %v3042 = vunpack.c.l.b16 %v2783
  %v3043 = vunpack.c.h.b16 %v2783
  %v3044 = vunpack.c.l.b16 %v2784
  %v3045 = vunpack.c.h.b16 %v2784
  %v3046 = vunpack.c.l.b16 %v2785
  %v3047 = vunpack.c.h.b16 %v2785
  %v3048 = vunpack.c.l.b16 %v2786
  %v3049 = vunpack.c.h.b16 %v2786
  %v3050 = vunpack.c.l.b16 %v2787
  %v3051 = vunpack.c.h.b16 %v2787
  %v3052 = vunpack.c.l.b16 %v2788
  %v3053 = vunpack.c.h.b16 %v2788
  %v3054 = vunpack.c.l.b16 %v2789
  %v3055 = vunpack.c.h.b16 %v2789
  %v3056 = vunpack.c.l.b16 %v2790
  %v3057 = vunpack.c.h.b16 %v2790
  %v3058 = vunpack.c.l.b16 %v2791
  %v3059 = vunpack.c.h.b16 %v2791
  %v3060 = vunpack.c.l.b16 %v2792
  %v3061 = vunpack.c.h.b16 %v2792
  %v3062 = vunpack.c.l.b16 %v2793
  %v3063 = vunpack.c.h.b16 %v2793
  %v3064 = vunpack.c.l.b16 %v2794
  %v3065 = vunpack.c.h.b16 %v2794
  %v3066 = vunpack.c.l.b16 %v2795
  %v3067 = vunpack.c.h.b16 %v2795
  %v3068 = vunpack.c.l.b16 %v2796
  %v3069 = vunpack.c.h.b16 %v2796
  %v3070 = vunpack.c.l.b16 %v2797
  %v3071 = vunpack.c.h.b16 %v2797
  %v3072 = vunpack.c.l.b16 %v2798
  %v3073 = vunpack.c.h.b16 %v2798
  %v3074 = vunpack.c.l.b16 %v2799
  %v3075 = vunpack.c.h.b16 %v2799
  %v3076 = vunpack.c.l.b16 %v2800
  %v3077 = vunpack.c.h.b16 %v2800
  %v3078 = vunpack.c.l.b16 %v2801
  %v3079 = vunpack.c.h.b16 %v2801
  %v3080 = vunpack.c.l.b16 %v2802
  %v3081 = vunpack.c.h.b16 %v2802
  %v3082 = vunpack.c.l.b16 %v2803
  %v3083 = vunpack.c.h.b16 %v2803
  %v3084 = vunpack.c.l.b16 %v2804
  %v3085 = vunpack.c.h.b16 %v2804
  %v3086 = vunpack.c.l.b16 %v2805
  %v3087 = vunpack.c.h.b16 %v2805
  %v3088 = vunpack.c.l.b16 %v2806
  %v3089 = vunpack.c.h.b16 %v2806
  %v3090 = vunpack.c.l.b16 %v2807
  %v3091 = vunpack.c.h.b16 %v2807
  %v3092 = vunpack.c.l.b16 %v2808
  %v3093 = vunpack.c.h.b16 %v2808
  %v3094 = vunpack.c.l.b16 %v2809
  %v3095 = vunpack.c.h.b16 %v2809
  %v3096 = vunpack.c.l.b16 %v2810
  %v3097 = vunpack.c.h.b16 %v2810
  %v3098 = vunpack.c.l.b16 %v2811
  %v3099 = vunpack.c.h.b16 %v2811
  %v3100 = vunpack.c.l.b16 %v2812
  %v3101 = vunpack.c.h.b16 %v2812
  %v3102 = vunpack.c.l.b16 %v2813
  %v3103 = vunpack.c.h.b16 %v2813
  %v3104 = vunpack.c.l.b16 %v2814
  %v3105 = vunpack.c.h.b16 %v2814
  %v3106 = vunpack.c.l.b16 %v2815
  %v3107 = vunpack.c.h.b16 %v2815
  %v3108 = vunpack.c.l.b16 %v2816
  %v3109 = vunpack.c.h.b16 %v2816
  %v3110 = vunpack.c.l.b16 %v2817
  %v3111 = vunpack.c.h.b16 %v2817
  %v3112 = vunpack.c.l.b16 %v2818
  %v3113 = vunpack.c.h.b16 %v2818
  %v3114 = vunpack.c.l.b16 %v2819
  %v3115 = vunpack.c.h.b16 %v2819
  %v3116 = vunpack.c.l.b16 %v2820
  %v3117 = vunpack.c.h.b16 %v2820
  %v3118 = vunpack.c.l.b16 %v2821
  %v3119 = vunpack.c.h.b16 %v2821
  %v3120 = vunpack.c.l.b16 %v2822
  %v3121 = vunpack.c.h.b16 %v2822
  %v3122 = vunpack.c.l.b16 %v2823
  %v3123 = vunpack.c.h.b16 %v2823
  %v3124 = vunpack.c.l.b16 %v2824
  %v3125 = vunpack.c.h.b16 %v2824
  %v3126 = vunpack.c.l.b16 %v2825
  %v3127 = vunpack.c.h.b16 %v2825
  %v3128 = vpack.c.b16 %v2942, %v2936
  %v3129 = vpack.c.b16 %v2943, %v2937
  %v3130 = vpack.c.b16 %v2944, %v2938
  %v3131 = vpack.c.b16 %v2945, %v2939
  %v3132 = vpack.c.b16 %v2946, %v2940
  %v3133 = vpack.c.b16 %v2947, %v2941
  %v3134 = vpack.c.b16 %v2954, %v2948
  %v3135 = vpack.c.b16 %v2955, %v2949
  %v3136 = vpack.c.b16 %v2956, %v2950
  %v3137 = vpack.c.b16 %v2957, %v2951
  %v3138 = vpack.c.b16 %v2958, %v2952
  %v3139 = vpack.c.b16 %v2959, %v2953
  %v3140 = vpack.c.b16 %v2966, %v2960
  %v3141 = vpack.c.b16 %v2967, %v2961
  %v3142 = vpack.c.b16 %v2968, %v2962
  %v3143 = vpack.c.b16 %v2969, %v2963
  %v3144 = vpack.c.b16 %v2970, %v2964
  %v3145 = vpack.c.b16 %v2971, %v2965
  %v3146 = vpack.c.b16 %v2978, %v2972
  %v3147 = vpack.c.b16 %v2979, %v2973
  %v3148 = vpack.c.b16 %v2980, %v2974
  %v3149 = vpack.c.b16 %v2981, %v2975
  %v3150 = vpack.c.b16 %v2982, %v2976
  %v3151 = vpack.c.b16 %v2983, %v2977
  %v3152 = vpack.c.b16 %v2990, %v2984
  %v3153 = vpack.c.b16 %v2991, %v2985
  %v3154 = vpack.c.b16 %v2992, %v2986
  %v3155 = vpack.c.b16 %v2993, %v2987
  %v3156 = vpack.c.b16 %v2994, %v2988
  %v3157 = vpack.c.b16 %v2995, %v2989
  %v3158 = vpack.c.b16 %v3002, %v2996
  %v3159 = vpack.c.b16 %v3003, %v2997
  %v3160 = vpack.c.b16 %v3004, %v2998
  %v3161 = vpack.c.b16 %v3005, %v2999
  %v3162 = vpack.c.b16 %v3006, %v3000
  %v3163 = vpack.c.b16 %v3007, %v3001
  %v3164 = vpack.c.b16 %v3014, %v3008
  %v3165 = vpack.c.b16 %v3015, %v3009
  %v3166 = vpack.c.b16 %v3016, %v3010
  %v3167 = vpack.c.b16 %v3017, %v3011
  %v3168 = vpack.c.b16 %v3018, %v3012
  %v3169 = vpack.c.b16 %v3019, %v3013
  %v3170 = vpack.c.b16 %v3026, %v3020
  %v3171 = vpack.c.b16 %v3027, %v3021
  %v3172 = vpack.c.b16 %v3028, %v3022
  %v3173 = vpack.c.b16 %v3029, %v3023
  %v3174 = vpack.c.b16 %v3030, %v3024
  %v3175 = vpack.c.b16 %v3031, %v3025
  %v3176 = vpack.c.b16 %v3038, %v3032
  %v3177 = vpack.c.b16 %v3039, %v3033
  %v3178 = vpack.c.b16 %v3040, %v3034
  %v3179 = vpack.c.b16 %v3041, %v3035
  %v3180 = vpack.c.b16 %v3042, %v3036
  %v3181 = vpack.c.b16 %v3043, %v3037
  %v3182 = vpack.c.b16 %v3050, %v3044
  %v3183 = vpack.c.b16 %v3051, %v3045
  %v3184 = vpack.c.b16 %v3052, %v3046
  %v3185 = vpack.c.b16 %v3053, %v3047
  %v3186 = vpack.c.b16 %v3054, %v3048
  %v3187 = vpack.c.b16 %v3055, %v3049
  %v3188 = vpack.c.b16 %v3062, %v3056
  %v3189 = vpack.c.b16 %v3063, %v3057
  %v3190 = vpack.c.b16 %v3064, %v3058
  %v3191 = vpack.c.b16 %v3065, %v3059
  %v3192 = vpack.c.b16 %v3066, %v3060
  %v3193 = vpack.c.b16 %v3067, %v3061
  %v3194 = vpack.c.b16 %v3074, %v3068
  %v3195 = vpack.c.b16 %v3075, %v3069
  %v3196 = vpack.c.b16 %v3076, %v3070
  %v3197 = vpack.c.b16 %v3077, %v3071
  %v3198 = vpack.c.b16 %v3078, %v3072
  %v3199 = vpack.c.b16 %v3079, %v3073
  %v3200 = vpack.c.b16 %v3086, %v3080
  %v3201 = vpack.c.b16 %v3087, %v3081
  %v3202 = vpack.c.b16 %v3088, %v3082
  %v3203 = vpack.c.b16 %v3089, %v3083
  %v3204 = vpack.c.b16 %v3090, %v3084
  %v3205 = vpack.c.b16 %v3091, %v3085
  %v3206 = vpack.c.b16 %v3098, %v3092
  %v3207 = vpack.c.b16 %v3099, %v3093
  %v3208 = vpack.c.b16 %v3100, %v3094
  %v3209 = vpack.c.b16 %v3101, %v3095
  %v3210 = vpack.c.b16 %v3102, %v3096
  %v3211 = vpack.c.b16 %v3103, %v3097
  %v3212 = vpack.c.b16 %v3110, %v3104
  %v3213 = vpack.c.b16 %v3111, %v3105
  %v3214 = vpack.c.b16 %v3112, %v3106
  %v3215 = vpack.c.b16 %v3113, %v3107
  %v3216 = vpack.c.b16 %v3114, %v3108
  %v3217 = vpack.c.b16 %v3115, %v3109
  %v3218 = vpack.c.b16 %v3122, %v3116
  %v3219 = vpack.c.b16 %v3123, %v3117
  %v3220 = vpack.c.b16 %v3124, %v3118
  %v3221 = vpack.c.b16 %v3125, %v3119
  %v3222 = vpack.c.b16 %v3126, %v3120
  %v3223 = vpack.c.b16 %v3127, %v3121
  %3320 = vmatpush.bf16.msra.mxu0 %v3170
  %3321 = vmatpush.bf16.msra.mxu0 %v3164
  %3322 = vmatpush.bf16.msra.mxu0 %v3158
  %3323 = vmatpush.bf16.msra.mxu0 %v3152
  %3324 = vmatpush.bf16.msra.mxu0 %v3146
  %3325 = vmatpush.bf16.msra.mxu0 %v3140
  %3326 = vmatpush.bf16.msra.mxu0 %v3134
  %3327 = vmatpush.bf16.msra.mxu0 %v3128
  %3328 = vmatmul.bf16.gmra.mxu0 %v2728
  %v3329 = vpop.f32.mrf.mxu0
  %v3330 = vadd.f32 %v2828, %v3329
  %v3331 = vpop.f32.mrf.mxu0
  %3332 = vdwg.mxu0
  %3333 = vmatpush.bf16.msra.mxu0 %v3218
  %3334 = vmatpush.bf16.msra.mxu0 %v3212
  %3335 = vmatpush.bf16.msra.mxu0 %v3206
  %3336 = vmatpush.bf16.msra.mxu0 %v3200
  %3337 = vmatpush.bf16.msra.mxu0 %v3194
  %3338 = vmatpush.bf16.msra.mxu0 %v3188
  %3339 = vmatpush.bf16.msra.mxu0 %v3182
  %3340 = vmatpush.bf16.msra.mxu0 %v3176
  %3341 = vmatmul.bf16.gmra.mxu0 %v2729
  %v3342 = vpop.f32.mrf.mxu0
  %v3343 = vadd.f32 %v3330, %v3342
  %v3344 = vpop.f32.mrf.mxu0
  %3345 = vdwg.mxu0
  %3346 = vmatpush.bf16.msra.mxu0 %v3171
  %3347 = vmatpush.bf16.msra.mxu0 %v3165
  %3348 = vmatpush.bf16.msra.mxu0 %v3159
  %3349 = vmatpush.bf16.msra.mxu0 %v3153
  %3350 = vmatpush.bf16.msra.mxu0 %v3147
  %3351 = vmatpush.bf16.msra.mxu0 %v3141
  %3352 = vmatpush.bf16.msra.mxu0 %v3135
  %3353 = vmatpush.bf16.msra.mxu0 %v3129
  %3354 = vmatmul.bf16.gmra.mxu0 %v2728
  %v3355 = vpop.f32.mrf.mxu0
  %v3356 = vadd.f32 %v2829, %v3355
  %v3357 = vpop.f32.mrf.mxu0
  %3358 = vdwg.mxu0
  %3359 = vmatpush.bf16.msra.mxu0 %v3219
  %3360 = vmatpush.bf16.msra.mxu0 %v3213
  %3361 = vmatpush.bf16.msra.mxu0 %v3207
  %3362 = vmatpush.bf16.msra.mxu0 %v3201
  %3363 = vmatpush.bf16.msra.mxu0 %v3195
  %3364 = vmatpush.bf16.msra.mxu0 %v3189
  %3365 = vmatpush.bf16.msra.mxu0 %v3183
  %3366 = vmatpush.bf16.msra.mxu0 %v3177
  %3367 = vmatmul.bf16.gmra.mxu0 %v2729
  %v3368 = vpop.f32.mrf.mxu0
  %v3369 = vadd.f32 %v3356, %v3368
  %v3370 = vpop.f32.mrf.mxu0
  %3371 = vdwg.mxu0
  %3372 = vmatpush.bf16.msra.mxu0 %v3172
  %3373 = vmatpush.bf16.msra.mxu0 %v3166
  %3374 = vmatpush.bf16.msra.mxu0 %v3160
  %3375 = vmatpush.bf16.msra.mxu0 %v3154
  %3376 = vmatpush.bf16.msra.mxu0 %v3148
  %3377 = vmatpush.bf16.msra.mxu0 %v3142
  %3378 = vmatpush.bf16.msra.mxu0 %v3136
  %3379 = vmatpush.bf16.msra.mxu0 %v3130
  %3380 = vmatmul.bf16.gmra.mxu0 %v2728
  %v3381 = vpop.f32.mrf.mxu0
  %v3382 = vadd.f32 %v2830, %v3381
  %v3383 = vpop.f32.mrf.mxu0
  %3384 = vdwg.mxu0
  %3385 = vmatpush.bf16.msra.mxu0 %v3220
  %3386 = vmatpush.bf16.msra.mxu0 %v3214
  %3387 = vmatpush.bf16.msra.mxu0 %v3208
  %3388 = vmatpush.bf16.msra.mxu0 %v3202
  %3389 = vmatpush.bf16.msra.mxu0 %v3196
  %3390 = vmatpush.bf16.msra.mxu0 %v3190
  %3391 = vmatpush.bf16.msra.mxu0 %v3184
  %3392 = vmatpush.bf16.msra.mxu0 %v3178
  %3393 = vmatmul.bf16.gmra.mxu0 %v2729
  %v3394 = vpop.f32.mrf.mxu0
  %v3395 = vadd.f32 %v3382, %v3394
  %v3396 = vpop.f32.mrf.mxu0
  %3397 = vdwg.mxu0
  %3398 = vmatpush.bf16.msra.mxu0 %v3173
  %3399 = vmatpush.bf16.msra.mxu0 %v3167
  %3400 = vmatpush.bf16.msra.mxu0 %v3161
  %3401 = vmatpush.bf16.msra.mxu0 %v3155
  %3402 = vmatpush.bf16.msra.mxu0 %v3149
  %3403 = vmatpush.bf16.msra.mxu0 %v3143
  %3404 = vmatpush.bf16.msra.mxu0 %v3137
  %3405 = vmatpush.bf16.msra.mxu0 %v3131
  %3406 = vmatmul.bf16.gmra.mxu0 %v2728
  %v3407 = vpop.f32.mrf.mxu0
  %v3408 = vadd.f32 %v2831, %v3407
  %v3409 = vpop.f32.mrf.mxu0
  %3410 = vdwg.mxu0
  %3411 = vmatpush.bf16.msra.mxu0 %v3221
  %3412 = vmatpush.bf16.msra.mxu0 %v3215
  %3413 = vmatpush.bf16.msra.mxu0 %v3209
  %3414 = vmatpush.bf16.msra.mxu0 %v3203
  %3415 = vmatpush.bf16.msra.mxu0 %v3197
  %3416 = vmatpush.bf16.msra.mxu0 %v3191
  %3417 = vmatpush.bf16.msra.mxu0 %v3185
  %3418 = vmatpush.bf16.msra.mxu0 %v3179
  %3419 = vmatmul.bf16.gmra.mxu0 %v2729
  %v3420 = vpop.f32.mrf.mxu0
  %v3421 = vadd.f32 %v3408, %v3420
  %v3422 = vpop.f32.mrf.mxu0
  %3423 = vdwg.mxu0
  %3424 = vmatpush.bf16.msra.mxu0 %v3174
  %3425 = vmatpush.bf16.msra.mxu0 %v3168
  %3426 = vmatpush.bf16.msra.mxu0 %v3162
  %3427 = vmatpush.bf16.msra.mxu0 %v3156
  %3428 = vmatpush.bf16.msra.mxu0 %v3150
  %3429 = vmatpush.bf16.msra.mxu0 %v3144
  %3430 = vmatpush.bf16.msra.mxu0 %v3138
  %3431 = vmatpush.bf16.msra.mxu0 %v3132
  %3432 = vmatmul.bf16.gmra.mxu0 %v2728
  %v3433 = vpop.f32.mrf.mxu0
  %v3434 = vadd.f32 %v2832, %v3433
  %v3435 = vpop.f32.mrf.mxu0
  %3436 = vdwg.mxu0
  %3437 = vmatpush.bf16.msra.mxu0 %v3222
  %3438 = vmatpush.bf16.msra.mxu0 %v3216
  %3439 = vmatpush.bf16.msra.mxu0 %v3210
  %3440 = vmatpush.bf16.msra.mxu0 %v3204
  %3441 = vmatpush.bf16.msra.mxu0 %v3198
  %3442 = vmatpush.bf16.msra.mxu0 %v3192
  %3443 = vmatpush.bf16.msra.mxu0 %v3186
  %3444 = vmatpush.bf16.msra.mxu0 %v3180
  %3445 = vmatmul.bf16.gmra.mxu0 %v2729
  %v3446 = vpop.f32.mrf.mxu0
  %v3447 = vadd.f32 %v3434, %v3446
  %v3448 = vpop.f32.mrf.mxu0
  %3449 = vdwg.mxu0
  %3450 = vmatpush.bf16.msra.mxu0 %v3175
  %3451 = vmatpush.bf16.msra.mxu0 %v3169
  %3452 = vmatpush.bf16.msra.mxu0 %v3163
  %3453 = vmatpush.bf16.msra.mxu0 %v3157
  %3454 = vmatpush.bf16.msra.mxu0 %v3151
  %3455 = vmatpush.bf16.msra.mxu0 %v3145
  %3456 = vmatpush.bf16.msra.mxu0 %v3139
  %3457 = vmatpush.bf16.msra.mxu0 %v3133
  %3458 = vmatmul.bf16.gmra.mxu0 %v2728
  %v3459 = vpop.f32.mrf.mxu0
  %v3460 = vadd.f32 %v2833, %v3459
  %v3461 = vpop.f32.mrf.mxu0
  %3462 = vdwg.mxu0
  %3463 = vmatpush.bf16.msra.mxu0 %v3223
  %3464 = vmatpush.bf16.msra.mxu0 %v3217
  %3465 = vmatpush.bf16.msra.mxu0 %v3211
  %3466 = vmatpush.bf16.msra.mxu0 %v3205
  %3467 = vmatpush.bf16.msra.mxu0 %v3199
  %3468 = vmatpush.bf16.msra.mxu0 %v3193
  %3469 = vmatpush.bf16.msra.mxu0 %v3187
  %3470 = vmatpush.bf16.msra.mxu0 %v3181
  %3471 = vmatmul.bf16.gmra.mxu0 %v2729
  %v3472 = vpop.f32.mrf.mxu0
  %v3473 = vadd.f32 %v3460, %v3472
  %v3474 = vpop.f32.mrf.mxu0
  %3475 = vdwg.mxu0
  %v3476 = vld [vmem:[%s9] sm:$0xff]
  %v3477 = vld [vmem:[%s9 + $0x8] sm:$0xff]
  %v3478 = vld [vmem:[%s9 + $0x10] sm:$0xff]
  %v3479 = vld [vmem:[%s9 + $0x18] sm:$0xff]
  %v3480 = vld [vmem:[%s9 + $0x20] sm:$0xff]
  %v3481 = vld [vmem:[%s9 + $0x28] sm:$0xff]
  %v3482 = vld [vmem:[%s9 + $0x30] sm:$0xff]
  %v3483 = vld [vmem:[%s9 + $0x38] sm:$0xff]
  %v3484 = vld [vmem:[%s9 + $0x40] sm:$0xff]
  %v3485 = vld [vmem:[%s9 + $0x48] sm:$0xff]
  %v3486 = vld [vmem:[%s9 + $0x50] sm:$0xff]
  %v3487 = vld [vmem:[%s9 + $0x58] sm:$0xff]
  %v3488 = vld [vmem:[%s9 + $0x60] sm:$0xff]
  %v3489 = vld [vmem:[%s9 + $0x68] sm:$0xff]
  %v3490 = vld [vmem:[%s9 + $0x70] sm:$0xff]
  %v3491 = vld [vmem:[%s9 + $0x78] sm:$0xff]
  %v3492 = vld [vmem:[%s9 + $0x80] sm:$0xff]
  %v3493 = vld [vmem:[%s9 + $0x88] sm:$0xff]
  %v3494 = vld [vmem:[%s9 + $0x90] sm:$0xff]
  %v3495 = vld [vmem:[%s9 + $0x98] sm:$0xff]
  %v3496 = vld [vmem:[%s9 + $0xa0] sm:$0xff]
  %v3497 = vld [vmem:[%s9 + $0xa8] sm:$0xff]
  %v3498 = vld [vmem:[%s9 + $0xb0] sm:$0xff]
  %v3499 = vld [vmem:[%s9 + $0xb8] sm:$0xff]
  %v3500 = vld [vmem:[%s9 + $0xc0] sm:$0xff]
  %v3501 = vld [vmem:[%s9 + $0xc8] sm:$0xff]
  %v3502 = vld [vmem:[%s9 + $0xd0] sm:$0xff]
  %v3503 = vld [vmem:[%s9 + $0xd8] sm:$0xff]
  %v3504 = vld [vmem:[%s9 + $0xe0] sm:$0xff]
  %v3505 = vld [vmem:[%s9 + $0xe8] sm:$0xff]
  %v3506 = vld [vmem:[%s9 + $0xf0] sm:$0xff]
  %v3507 = vld [vmem:[%s9 + $0xf8] sm:$0xff]
  %v3508 = vld [vmem:[%s9 + $0x100] sm:$0xff]
  %v3509 = vld [vmem:[%s9 + $0x108] sm:$0xff]
  %v3510 = vld [vmem:[%s9 + $0x110] sm:$0xff]
  %v3511 = vld [vmem:[%s9 + $0x118] sm:$0xff]
  %v3512 = vld [vmem:[%s9 + $0x120] sm:$0xff]
  %v3513 = vld [vmem:[%s9 + $0x128] sm:$0xff]
  %v3514 = vld [vmem:[%s9 + $0x130] sm:$0xff]
  %v3515 = vld [vmem:[%s9 + $0x138] sm:$0xff]
  %v3516 = vld [vmem:[%s9 + $0x140] sm:$0xff]
  %v3517 = vld [vmem:[%s9 + $0x148] sm:$0xff]
  %v3518 = vld [vmem:[%s9 + $0x150] sm:$0xff]
  %v3519 = vld [vmem:[%s9 + $0x158] sm:$0xff]
  %v3520 = vld [vmem:[%s9 + $0x160] sm:$0xff]
  %v3521 = vld [vmem:[%s9 + $0x168] sm:$0xff]
  %v3522 = vld [vmem:[%s9 + $0x170] sm:$0xff]
  %v3523 = vld [vmem:[%s9 + $0x178] sm:$0xff]
  %v3524 = vld [vmem:[%s9 + $0x180] sm:$0xff]
  %v3525 = vld [vmem:[%s9 + $0x188] sm:$0xff]
  %v3526 = vld [vmem:[%s9 + $0x190] sm:$0xff]
  %v3527 = vld [vmem:[%s9 + $0x198] sm:$0xff]
  %v3528 = vld [vmem:[%s9 + $0x1a0] sm:$0xff]
  %v3529 = vld [vmem:[%s9 + $0x1a8] sm:$0xff]
  %v3530 = vld [vmem:[%s9 + $0x1b0] sm:$0xff]
  %v3531 = vld [vmem:[%s9 + $0x1b8] sm:$0xff]
  %v3532 = vld [vmem:[%s9 + $0x1c0] sm:$0xff]
  %v3533 = vld [vmem:[%s9 + $0x1c8] sm:$0xff]
  %v3534 = vld [vmem:[%s9 + $0x1d0] sm:$0xff]
  %v3535 = vld [vmem:[%s9 + $0x1d8] sm:$0xff]
  %v3536 = vld [vmem:[%s9 + $0x1e0] sm:$0xff]
  %v3537 = vld [vmem:[%s9 + $0x1e8] sm:$0xff]
  %v3538 = vld [vmem:[%s9 + $0x1f0] sm:$0xff]
  %v3539 = vld [vmem:[%s9 + $0x1f8] sm:$0xff]
  %v3540 = vld [vmem:[%s9 + $0x200] sm:$0xff]
  %v3541 = vld [vmem:[%s9 + $0x208] sm:$0xff]
  %v3542 = vld [vmem:[%s9 + $0x210] sm:$0xff]
  %v3543 = vld [vmem:[%s9 + $0x218] sm:$0xff]
  %v3544 = vld [vmem:[%s9 + $0x220] sm:$0xff]
  %v3545 = vld [vmem:[%s9 + $0x228] sm:$0xff]
  %v3546 = vld [vmem:[%s9 + $0x230] sm:$0xff]
  %v3547 = vld [vmem:[%s9 + $0x238] sm:$0xff]
  %v3548 = vld [vmem:[%s9 + $0x240] sm:$0xff]
  %v3549 = vld [vmem:[%s9 + $0x248] sm:$0xff]
  %v3550 = vld [vmem:[%s9 + $0x250] sm:$0xff]
  %v3551 = vld [vmem:[%s9 + $0x258] sm:$0xff]
  %v3552 = vld [vmem:[%s9 + $0x260] sm:$0xff]
  %v3553 = vld [vmem:[%s9 + $0x268] sm:$0xff]
  %v3554 = vld [vmem:[%s9 + $0x270] sm:$0xff]
  %v3555 = vld [vmem:[%s9 + $0x278] sm:$0xff]
  %v3556 = vld [vmem:[%s9 + $0x280] sm:$0xff]
  %v3557 = vld [vmem:[%s9 + $0x288] sm:$0xff]
  %v3558 = vld [vmem:[%s9 + $0x290] sm:$0xff]
  %v3559 = vld [vmem:[%s9 + $0x298] sm:$0xff]
  %v3560 = vld [vmem:[%s9 + $0x2a0] sm:$0xff]
  %v3561 = vld [vmem:[%s9 + $0x2a8] sm:$0xff]
  %v3562 = vld [vmem:[%s9 + $0x2b0] sm:$0xff]
  %v3563 = vld [vmem:[%s9 + $0x2b8] sm:$0xff]
  %v3564 = vld [vmem:[%s9 + $0x2c0] sm:$0xff]
  %v3565 = vld [vmem:[%s9 + $0x2c8] sm:$0xff]
  %v3566 = vld [vmem:[%s9 + $0x2d0] sm:$0xff]
  %v3567 = vld [vmem:[%s9 + $0x2d8] sm:$0xff]
  %v3568 = vld [vmem:[%s9 + $0x2e0] sm:$0xff]
  %v3569 = vld [vmem:[%s9 + $0x2e8] sm:$0xff]
  %v3570 = vld [vmem:[%s9 + $0x2f0] sm:$0xff]
  %v3571 = vld [vmem:[%s9 + $0x2f8] sm:$0xff]
  %v3572 = vld [vmem:[%s10] sm:$0x3f]
  %v3574 = vperm.slane %v3572, 0
  %v3575 = vperm.slane %v3572, 1
  %v3576 = vperm.slane %v3572, 2
  %v3577 = vperm.slane %v3572, 3
  %v3578 = vperm.slane %v3572, 4
  %v3579 = vperm.slane %v3572, 5
  %v3682 = vunpack.c.l.b16 %v3476
  %v3683 = vunpack.c.h.b16 %v3476
  %v3684 = vunpack.c.l.b16 %v3477
  %v3685 = vunpack.c.h.b16 %v3477
  %v3686 = vunpack.c.l.b16 %v3478
  %v3687 = vunpack.c.h.b16 %v3478
  %v3688 = vunpack.c.l.b16 %v3479
  %v3689 = vunpack.c.h.b16 %v3479
  %v3690 = vunpack.c.l.b16 %v3480
  %v3691 = vunpack.c.h.b16 %v3480
  %v3692 = vunpack.c.l.b16 %v3481
  %v3693 = vunpack.c.h.b16 %v3481
  %v3694 = vunpack.c.l.b16 %v3482
  %v3695 = vunpack.c.h.b16 %v3482
  %v3696 = vunpack.c.l.b16 %v3483
  %v3697 = vunpack.c.h.b16 %v3483
  %v3698 = vunpack.c.l.b16 %v3484
  %v3699 = vunpack.c.h.b16 %v3484
  %v3700 = vunpack.c.l.b16 %v3485
  %v3701 = vunpack.c.h.b16 %v3485
  %v3702 = vunpack.c.l.b16 %v3486
  %v3703 = vunpack.c.h.b16 %v3486
  %v3704 = vunpack.c.l.b16 %v3487
  %v3705 = vunpack.c.h.b16 %v3487
  %v3706 = vunpack.c.l.b16 %v3488
  %v3707 = vunpack.c.h.b16 %v3488
  %v3708 = vunpack.c.l.b16 %v3489
  %v3709 = vunpack.c.h.b16 %v3489
  %v3710 = vunpack.c.l.b16 %v3490
  %v3711 = vunpack.c.h.b16 %v3490
  %v3712 = vunpack.c.l.b16 %v3491
  %v3713 = vunpack.c.h.b16 %v3491
  %v3714 = vunpack.c.l.b16 %v3492
  %v3715 = vunpack.c.h.b16 %v3492
  %v3716 = vunpack.c.l.b16 %v3493
  %v3717 = vunpack.c.h.b16 %v3493
  %v3718 = vunpack.c.l.b16 %v3494
  %v3719 = vunpack.c.h.b16 %v3494
  %v3720 = vunpack.c.l.b16 %v3495
  %v3721 = vunpack.c.h.b16 %v3495
  %v3722 = vunpack.c.l.b16 %v3496
  %v3723 = vunpack.c.h.b16 %v3496
  %v3724 = vunpack.c.l.b16 %v3497
  %v3725 = vunpack.c.h.b16 %v3497
  %v3726 = vunpack.c.l.b16 %v3498
  %v3727 = vunpack.c.h.b16 %v3498
  %v3728 = vunpack.c.l.b16 %v3499
  %v3729 = vunpack.c.h.b16 %v3499
  %v3730 = vunpack.c.l.b16 %v3500
  %v3731 = vunpack.c.h.b16 %v3500
  %v3732 = vunpack.c.l.b16 %v3501
  %v3733 = vunpack.c.h.b16 %v3501
  %v3734 = vunpack.c.l.b16 %v3502
  %v3735 = vunpack.c.h.b16 %v3502
  %v3736 = vunpack.c.l.b16 %v3503
  %v3737 = vunpack.c.h.b16 %v3503
  %v3738 = vunpack.c.l.b16 %v3504
  %v3739 = vunpack.c.h.b16 %v3504
  %v3740 = vunpack.c.l.b16 %v3505
  %v3741 = vunpack.c.h.b16 %v3505
  %v3742 = vunpack.c.l.b16 %v3506
  %v3743 = vunpack.c.h.b16 %v3506
  %v3744 = vunpack.c.l.b16 %v3507
  %v3745 = vunpack.c.h.b16 %v3507
  %v3746 = vunpack.c.l.b16 %v3508
  %v3747 = vunpack.c.h.b16 %v3508
  %v3748 = vunpack.c.l.b16 %v3509
  %v3749 = vunpack.c.h.b16 %v3509
  %v3750 = vunpack.c.l.b16 %v3510
  %v3751 = vunpack.c.h.b16 %v3510
  %v3752 = vunpack.c.l.b16 %v3511
  %v3753 = vunpack.c.h.b16 %v3511
  %v3754 = vunpack.c.l.b16 %v3512
  %v3755 = vunpack.c.h.b16 %v3512
  %v3756 = vunpack.c.l.b16 %v3513
  %v3757 = vunpack.c.h.b16 %v3513
  %v3758 = vunpack.c.l.b16 %v3514
  %v3759 = vunpack.c.h.b16 %v3514
  %v3760 = vunpack.c.l.b16 %v3515
  %v3761 = vunpack.c.h.b16 %v3515
  %v3762 = vunpack.c.l.b16 %v3516
  %v3763 = vunpack.c.h.b16 %v3516
  %v3764 = vunpack.c.l.b16 %v3517
  %v3765 = vunpack.c.h.b16 %v3517
  %v3766 = vunpack.c.l.b16 %v3518
  %v3767 = vunpack.c.h.b16 %v3518
  %v3768 = vunpack.c.l.b16 %v3519
  %v3769 = vunpack.c.h.b16 %v3519
  %v3770 = vunpack.c.l.b16 %v3520
  %v3771 = vunpack.c.h.b16 %v3520
  %v3772 = vunpack.c.l.b16 %v3521
  %v3773 = vunpack.c.h.b16 %v3521
  %v3774 = vunpack.c.l.b16 %v3522
  %v3775 = vunpack.c.h.b16 %v3522
  %v3776 = vunpack.c.l.b16 %v3523
  %v3777 = vunpack.c.h.b16 %v3523
  %v3778 = vunpack.c.l.b16 %v3524
  %v3779 = vunpack.c.h.b16 %v3524
  %v3780 = vunpack.c.l.b16 %v3525
  %v3781 = vunpack.c.h.b16 %v3525
  %v3782 = vunpack.c.l.b16 %v3526
  %v3783 = vunpack.c.h.b16 %v3526
  %v3784 = vunpack.c.l.b16 %v3527
  %v3785 = vunpack.c.h.b16 %v3527
  %v3786 = vunpack.c.l.b16 %v3528
  %v3787 = vunpack.c.h.b16 %v3528
  %v3788 = vunpack.c.l.b16 %v3529
  %v3789 = vunpack.c.h.b16 %v3529
  %v3790 = vunpack.c.l.b16 %v3530
  %v3791 = vunpack.c.h.b16 %v3530
  %v3792 = vunpack.c.l.b16 %v3531
  %v3793 = vunpack.c.h.b16 %v3531
  %v3794 = vunpack.c.l.b16 %v3532
  %v3795 = vunpack.c.h.b16 %v3532
  %v3796 = vunpack.c.l.b16 %v3533
  %v3797 = vunpack.c.h.b16 %v3533
  %v3798 = vunpack.c.l.b16 %v3534
  %v3799 = vunpack.c.h.b16 %v3534
  %v3800 = vunpack.c.l.b16 %v3535
  %v3801 = vunpack.c.h.b16 %v3535
  %v3802 = vunpack.c.l.b16 %v3536
  %v3803 = vunpack.c.h.b16 %v3536
  %v3804 = vunpack.c.l.b16 %v3537
  %v3805 = vunpack.c.h.b16 %v3537
  %v3806 = vunpack.c.l.b16 %v3538
  %v3807 = vunpack.c.h.b16 %v3538
  %v3808 = vunpack.c.l.b16 %v3539
  %v3809 = vunpack.c.h.b16 %v3539
  %v3810 = vunpack.c.l.b16 %v3540
  %v3811 = vunpack.c.h.b16 %v3540
  %v3812 = vunpack.c.l.b16 %v3541
  %v3813 = vunpack.c.h.b16 %v3541
  %v3814 = vunpack.c.l.b16 %v3542
  %v3815 = vunpack.c.h.b16 %v3542
  %v3816 = vunpack.c.l.b16 %v3543
  %v3817 = vunpack.c.h.b16 %v3543
  %v3818 = vunpack.c.l.b16 %v3544
  %v3819 = vunpack.c.h.b16 %v3544
  %v3820 = vunpack.c.l.b16 %v3545
  %v3821 = vunpack.c.h.b16 %v3545
  %v3822 = vunpack.c.l.b16 %v3546
  %v3823 = vunpack.c.h.b16 %v3546
  %v3824 = vunpack.c.l.b16 %v3547
  %v3825 = vunpack.c.h.b16 %v3547
  %v3826 = vunpack.c.l.b16 %v3548
  %v3827 = vunpack.c.h.b16 %v3548
  %v3828 = vunpack.c.l.b16 %v3549
  %v3829 = vunpack.c.h.b16 %v3549
  %v3830 = vunpack.c.l.b16 %v3550
  %v3831 = vunpack.c.h.b16 %v3550
  %v3832 = vunpack.c.l.b16 %v3551
  %v3833 = vunpack.c.h.b16 %v3551
  %v3834 = vunpack.c.l.b16 %v3552
  %v3835 = vunpack.c.h.b16 %v3552
  %v3836 = vunpack.c.l.b16 %v3553
  %v3837 = vunpack.c.h.b16 %v3553
  %v3838 = vunpack.c.l.b16 %v3554
  %v3839 = vunpack.c.h.b16 %v3554
  %v3840 = vunpack.c.l.b16 %v3555
  %v3841 = vunpack.c.h.b16 %v3555
  %v3842 = vunpack.c.l.b16 %v3556
  %v3843 = vunpack.c.h.b16 %v3556
  %v3844 = vunpack.c.l.b16 %v3557
  %v3845 = vunpack.c.h.b16 %v3557
  %v3846 = vunpack.c.l.b16 %v3558
  %v3847 = vunpack.c.h.b16 %v3558
  %v3848 = vunpack.c.l.b16 %v3559
  %v3849 = vunpack.c.h.b16 %v3559
  %v3850 = vunpack.c.l.b16 %v3560
  %v3851 = vunpack.c.h.b16 %v3560
  %v3852 = vunpack.c.l.b16 %v3561
  %v3853 = vunpack.c.h.b16 %v3561
  %v3854 = vunpack.c.l.b16 %v3562
  %v3855 = vunpack.c.h.b16 %v3562
  %v3856 = vunpack.c.l.b16 %v3563
  %v3857 = vunpack.c.h.b16 %v3563
  %v3858 = vunpack.c.l.b16 %v3564
  %v3859 = vunpack.c.h.b16 %v3564
  %v3860 = vunpack.c.l.b16 %v3565
  %v3861 = vunpack.c.h.b16 %v3565
  %v3862 = vunpack.c.l.b16 %v3566
  %v3863 = vunpack.c.h.b16 %v3566
  %v3864 = vunpack.c.l.b16 %v3567
  %v3865 = vunpack.c.h.b16 %v3567
  %v3866 = vunpack.c.l.b16 %v3568
  %v3867 = vunpack.c.h.b16 %v3568
  %v3868 = vunpack.c.l.b16 %v3569
  %v3869 = vunpack.c.h.b16 %v3569
  %v3870 = vunpack.c.l.b16 %v3570
  %v3871 = vunpack.c.h.b16 %v3570
  %v3872 = vunpack.c.l.b16 %v3571
  %v3873 = vunpack.c.h.b16 %v3571
  %v3874 = vpack.c.b16 %v3688, %v3682
  %v3875 = vpack.c.b16 %v3689, %v3683
  %v3876 = vpack.c.b16 %v3690, %v3684
  %v3877 = vpack.c.b16 %v3691, %v3685
  %v3878 = vpack.c.b16 %v3692, %v3686
  %v3879 = vpack.c.b16 %v3693, %v3687
  %v3880 = vpack.c.b16 %v3700, %v3694
  %v3881 = vpack.c.b16 %v3701, %v3695
  %v3882 = vpack.c.b16 %v3702, %v3696
  %v3883 = vpack.c.b16 %v3703, %v3697
  %v3884 = vpack.c.b16 %v3704, %v3698
  %v3885 = vpack.c.b16 %v3705, %v3699
  %v3886 = vpack.c.b16 %v3712, %v3706
  %v3887 = vpack.c.b16 %v3713, %v3707
  %v3888 = vpack.c.b16 %v3714, %v3708
  %v3889 = vpack.c.b16 %v3715, %v3709
  %v3890 = vpack.c.b16 %v3716, %v3710
  %v3891 = vpack.c.b16 %v3717, %v3711
  %v3892 = vpack.c.b16 %v3724, %v3718
  %v3893 = vpack.c.b16 %v3725, %v3719
  %v3894 = vpack.c.b16 %v3726, %v3720
  %v3895 = vpack.c.b16 %v3727, %v3721
  %v3896 = vpack.c.b16 %v3728, %v3722
  %v3897 = vpack.c.b16 %v3729, %v3723
  %v3898 = vpack.c.b16 %v3736, %v3730
  %v3899 = vpack.c.b16 %v3737, %v3731
  %v3900 = vpack.c.b16 %v3738, %v3732
  %v3901 = vpack.c.b16 %v3739, %v3733
  %v3902 = vpack.c.b16 %v3740, %v3734
  %v3903 = vpack.c.b16 %v3741, %v3735
  %v3904 = vpack.c.b16 %v3748, %v3742
  %v3905 = vpack.c.b16 %v3749, %v3743
  %v3906 = vpack.c.b16 %v3750, %v3744
  %v3907 = vpack.c.b16 %v3751, %v3745
  %v3908 = vpack.c.b16 %v3752, %v3746
  %v3909 = vpack.c.b16 %v3753, %v3747
  %v3910 = vpack.c.b16 %v3760, %v3754
  %v3911 = vpack.c.b16 %v3761, %v3755
  %v3912 = vpack.c.b16 %v3762, %v3756
  %v3913 = vpack.c.b16 %v3763, %v3757
  %v3914 = vpack.c.b16 %v3764, %v3758
  %v3915 = vpack.c.b16 %v3765, %v3759
  %v3916 = vpack.c.b16 %v3772, %v3766
  %v3917 = vpack.c.b16 %v3773, %v3767
  %v3918 = vpack.c.b16 %v3774, %v3768
  %v3919 = vpack.c.b16 %v3775, %v3769
  %v3920 = vpack.c.b16 %v3776, %v3770
  %v3921 = vpack.c.b16 %v3777, %v3771
  %v3922 = vpack.c.b16 %v3784, %v3778
  %v3923 = vpack.c.b16 %v3785, %v3779
  %v3924 = vpack.c.b16 %v3786, %v3780
  %v3925 = vpack.c.b16 %v3787, %v3781
  %v3926 = vpack.c.b16 %v3788, %v3782
  %v3927 = vpack.c.b16 %v3789, %v3783
  %v3928 = vpack.c.b16 %v3796, %v3790
  %v3929 = vpack.c.b16 %v3797, %v3791
  %v3930 = vpack.c.b16 %v3798, %v3792
  %v3931 = vpack.c.b16 %v3799, %v3793
  %v3932 = vpack.c.b16 %v3800, %v3794
  %v3933 = vpack.c.b16 %v3801, %v3795
  %v3934 = vpack.c.b16 %v3808, %v3802
  %v3935 = vpack.c.b16 %v3809, %v3803
  %v3936 = vpack.c.b16 %v3810, %v3804
  %v3937 = vpack.c.b16 %v3811, %v3805
  %v3938 = vpack.c.b16 %v3812, %v3806
  %v3939 = vpack.c.b16 %v3813, %v3807
  %v3940 = vpack.c.b16 %v3820, %v3814
  %v3941 = vpack.c.b16 %v3821, %v3815
  %v3942 = vpack.c.b16 %v3822, %v3816
  %v3943 = vpack.c.b16 %v3823, %v3817
  %v3944 = vpack.c.b16 %v3824, %v3818
  %v3945 = vpack.c.b16 %v3825, %v3819
  %v3946 = vpack.c.b16 %v3832, %v3826
  %v3947 = vpack.c.b16 %v3833, %v3827
  %v3948 = vpack.c.b16 %v3834, %v3828
  %v3949 = vpack.c.b16 %v3835, %v3829
  %v3950 = vpack.c.b16 %v3836, %v3830
  %v3951 = vpack.c.b16 %v3837, %v3831
  %v3952 = vpack.c.b16 %v3844, %v3838
  %v3953 = vpack.c.b16 %v3845, %v3839
  %v3954 = vpack.c.b16 %v3846, %v3840
  %v3955 = vpack.c.b16 %v3847, %v3841
  %v3956 = vpack.c.b16 %v3848, %v3842
  %v3957 = vpack.c.b16 %v3849, %v3843
  %v3958 = vpack.c.b16 %v3856, %v3850
  %v3959 = vpack.c.b16 %v3857, %v3851
  %v3960 = vpack.c.b16 %v3858, %v3852
  %v3961 = vpack.c.b16 %v3859, %v3853
  %v3962 = vpack.c.b16 %v3860, %v3854
  %v3963 = vpack.c.b16 %v3861, %v3855
  %v3964 = vpack.c.b16 %v3868, %v3862
  %v3965 = vpack.c.b16 %v3869, %v3863
  %v3966 = vpack.c.b16 %v3870, %v3864
  %v3967 = vpack.c.b16 %v3871, %v3865
  %v3968 = vpack.c.b16 %v3872, %v3866
  %v3969 = vpack.c.b16 %v3873, %v3867
  %4066 = vmatpush.bf16.msra.mxu0 %v3916
  %4067 = vmatpush.bf16.msra.mxu0 %v3910
  %4068 = vmatpush.bf16.msra.mxu0 %v3904
  %4069 = vmatpush.bf16.msra.mxu0 %v3898
  %4070 = vmatpush.bf16.msra.mxu0 %v3892
  %4071 = vmatpush.bf16.msra.mxu0 %v3886
  %4072 = vmatpush.bf16.msra.mxu0 %v3880
  %4073 = vmatpush.bf16.msra.mxu0 %v3874
  %4074 = vmatmul.bf16.gmra.mxu0 0
  %v4075 = vpop.f32.mrf.mxu0
  %v4076 = vadd.f32 %v3574, %v4075
  %v4077 = vpop.f32.mrf.mxu0
  %4078 = vdwg.mxu0
  %4079 = vmatpush.bf16.msra.mxu0 %v3964
  %4080 = vmatpush.bf16.msra.mxu0 %v3958
  %4081 = vmatpush.bf16.msra.mxu0 %v3952
  %4082 = vmatpush.bf16.msra.mxu0 %v3946
  %4083 = vmatpush.bf16.msra.mxu0 %v3940
  %4084 = vmatpush.bf16.msra.mxu0 %v3934
  %4085 = vmatpush.bf16.msra.mxu0 %v3928
  %4086 = vmatpush.bf16.msra.mxu0 %v3922
  %4087 = vmatmul.bf16.gmra.mxu0 0
  %v4088 = vpop.f32.mrf.mxu0
  %v4089 = vadd.f32 %v4076, %v4088
  %v4090 = vpop.f32.mrf.mxu0
  %4091 = vdwg.mxu0
  %4092 = vmatpush.bf16.msra.mxu0 %v3917
  %4093 = vmatpush.bf16.msra.mxu0 %v3911
  %4094 = vmatpush.bf16.msra.mxu0 %v3905
  %4095 = vmatpush.bf16.msra.mxu0 %v3899
  %4096 = vmatpush.bf16.msra.mxu0 %v3893
  %4097 = vmatpush.bf16.msra.mxu0 %v3887
  %4098 = vmatpush.bf16.msra.mxu0 %v3881
  %4099 = vmatpush.bf16.msra.mxu0 %v3875
  %4100 = vmatmul.bf16.gmra.mxu0 0
  %v4101 = vpop.f32.mrf.mxu0
  %v4102 = vadd.f32 %v3575, %v4101
  %v4103 = vpop.f32.mrf.mxu0
  %4104 = vdwg.mxu0
  %4105 = vmatpush.bf16.msra.mxu0 %v3965
  %4106 = vmatpush.bf16.msra.mxu0 %v3959
  %4107 = vmatpush.bf16.msra.mxu0 %v3953
  %4108 = vmatpush.bf16.msra.mxu0 %v3947
  %4109 = vmatpush.bf16.msra.mxu0 %v3941
  %4110 = vmatpush.bf16.msra.mxu0 %v3935
  %4111 = vmatpush.bf16.msra.mxu0 %v3929
  %4112 = vmatpush.bf16.msra.mxu0 %v3923
  %4113 = vmatmul.bf16.gmra.mxu0 0
  %v4114 = vpop.f32.mrf.mxu0
  %v4115 = vadd.f32 %v4102, %v4114
  %v4116 = vpop.f32.mrf.mxu0
  %4117 = vdwg.mxu0
  %4118 = vmatpush.bf16.msra.mxu0 %v3918
  %4119 = vmatpush.bf16.msra.mxu0 %v3912
  %4120 = vmatpush.bf16.msra.mxu0 %v3906
  %4121 = vmatpush.bf16.msra.mxu0 %v3900
  %4122 = vmatpush.bf16.msra.mxu0 %v3894
  %4123 = vmatpush.bf16.msra.mxu0 %v3888
  %4124 = vmatpush.bf16.msra.mxu0 %v3882
  %4125 = vmatpush.bf16.msra.mxu0 %v3876
  %4126 = vmatmul.bf16.gmra.mxu0 0
  %v4127 = vpop.f32.mrf.mxu0
  %v4128 = vadd.f32 %v3576, %v4127
  %v4129 = vpop.f32.mrf.mxu0
  %4130 = vdwg.mxu0
  %4131 = vmatpush.bf16.msra.mxu0 %v3966
  %4132 = vmatpush.bf16.msra.mxu0 %v3960
  %4133 = vmatpush.bf16.msra.mxu0 %v3954
  %4134 = vmatpush.bf16.msra.mxu0 %v3948
  %4135 = vmatpush.bf16.msra.mxu0 %v3942
  %4136 = vmatpush.bf16.msra.mxu0 %v3936
  %4137 = vmatpush.bf16.msra.mxu0 %v3930
  %4138 = vmatpush.bf16.msra.mxu0 %v3924
  %4139 = vmatmul.bf16.gmra.mxu0 0
  %v4140 = vpop.f32.mrf.mxu0
  %v4141 = vadd.f32 %v4128, %v4140
  %v4142 = vpop.f32.mrf.mxu0
  %4143 = vdwg.mxu0
  %4144 = vmatpush.bf16.msra.mxu0 %v3919
  %4145 = vmatpush.bf16.msra.mxu0 %v3913
  %4146 = vmatpush.bf16.msra.mxu0 %v3907
  %4147 = vmatpush.bf16.msra.mxu0 %v3901
  %4148 = vmatpush.bf16.msra.mxu0 %v3895
  %4149 = vmatpush.bf16.msra.mxu0 %v3889
  %4150 = vmatpush.bf16.msra.mxu0 %v3883
  %4151 = vmatpush.bf16.msra.mxu0 %v3877
  %4152 = vmatmul.bf16.gmra.mxu0 0
  %v4153 = vpop.f32.mrf.mxu0
  %v4154 = vadd.f32 %v3577, %v4153
  %v4155 = vpop.f32.mrf.mxu0
  %4156 = vdwg.mxu0
  %4157 = vmatpush.bf16.msra.mxu0 %v3967
  %4158 = vmatpush.bf16.msra.mxu0 %v3961
  %4159 = vmatpush.bf16.msra.mxu0 %v3955
  %4160 = vmatpush.bf16.msra.mxu0 %v3949
  %4161 = vmatpush.bf16.msra.mxu0 %v3943
  %4162 = vmatpush.bf16.msra.mxu0 %v3937
  %4163 = vmatpush.bf16.msra.mxu0 %v3931
  %4164 = vmatpush.bf16.msra.mxu0 %v3925
  %4165 = vmatmul.bf16.gmra.mxu0 0
  %v4166 = vpop.f32.mrf.mxu0
  %v4167 = vadd.f32 %v4154, %v4166
  %v4168 = vpop.f32.mrf.mxu0
  %4169 = vdwg.mxu0
  %4170 = vmatpush.bf16.msra.mxu0 %v3920
  %4171 = vmatpush.bf16.msra.mxu0 %v3914
  %4172 = vmatpush.bf16.msra.mxu0 %v3908
  %4173 = vmatpush.bf16.msra.mxu0 %v3902
  %4174 = vmatpush.bf16.msra.mxu0 %v3896
  %4175 = vmatpush.bf16.msra.mxu0 %v3890
  %4176 = vmatpush.bf16.msra.mxu0 %v3884
  %4177 = vmatpush.bf16.msra.mxu0 %v3878
  %4178 = vmatmul.bf16.gmra.mxu0 0
  %v4179 = vpop.f32.mrf.mxu0
  %v4180 = vadd.f32 %v3578, %v4179
  %v4181 = vpop.f32.mrf.mxu0
  %4182 = vdwg.mxu0
  %4183 = vmatpush.bf16.msra.mxu0 %v3968
  %4184 = vmatpush.bf16.msra.mxu0 %v3962
  %4185 = vmatpush.bf16.msra.mxu0 %v3956
  %4186 = vmatpush.bf16.msra.mxu0 %v3950
  %4187 = vmatpush.bf16.msra.mxu0 %v3944
  %4188 = vmatpush.bf16.msra.mxu0 %v3938
  %4189 = vmatpush.bf16.msra.mxu0 %v3932
  %4190 = vmatpush.bf16.msra.mxu0 %v3926
  %4191 = vmatmul.bf16.gmra.mxu0 0
  %v4192 = vpop.f32.mrf.mxu0
  %v4193 = vadd.f32 %v4180, %v4192
  %v4194 = vpop.f32.mrf.mxu0
  %4195 = vdwg.mxu0
  %4196 = vmatpush.bf16.msra.mxu0 %v3921
  %4197 = vmatpush.bf16.msra.mxu0 %v3915
  %4198 = vmatpush.bf16.msra.mxu0 %v3909
  %4199 = vmatpush.bf16.msra.mxu0 %v3903
  %4200 = vmatpush.bf16.msra.mxu0 %v3897
  %4201 = vmatpush.bf16.msra.mxu0 %v3891
  %4202 = vmatpush.bf16.msra.mxu0 %v3885
  %4203 = vmatpush.bf16.msra.mxu0 %v3879
  %4204 = vmatmul.bf16.gmra.mxu0 0
  %v4205 = vpop.f32.mrf.mxu0
  %v4206 = vadd.f32 %v3579, %v4205
  %v4207 = vpop.f32.mrf.mxu0
  %4208 = vdwg.mxu0
  %4209 = vmatpush.bf16.msra.mxu0 %v3969
  %4210 = vmatpush.bf16.msra.mxu0 %v3963
  %4211 = vmatpush.bf16.msra.mxu0 %v3957
  %4212 = vmatpush.bf16.msra.mxu0 %v3951
  %4213 = vmatpush.bf16.msra.mxu0 %v3945
  %4214 = vmatpush.bf16.msra.mxu0 %v3939
  %4215 = vmatpush.bf16.msra.mxu0 %v3933
  %4216 = vmatpush.bf16.msra.mxu0 %v3927
  %4217 = vmatmul.bf16.gmra.mxu0 0
  %v4218 = vpop.f32.mrf.mxu0
  %v4219 = vadd.f32 %v4206, %v4218
  %v4220 = vpop.f32.mrf.mxu0
  %4221 = vdwg.mxu0
  %v4225 = vrot.slane %v3421, 2
  %v4226 = vrot.slane %v3447, 2
  %v4227 = vrot.slane %v3473, 2
  %v4231 = vadd.f32 %v3343, %v4089
  %v4232 = vadd.f32 %v3369, %v4115
  %v4233 = vadd.f32 %v4225, %v4167
  %v4234 = vadd.f32 %v4226, %v4193
  %v4235 = vmul.f32 %v4231, 0.5
  %v4236 = vmul.f32 %v4233, 0.5
  %v4237 = vtanh.pop %v4235
  %v4238 = vtanh.pop %v4236
  %v4239 = vadd.f32 %v4237, 1.0
  %v4240 = vadd.f32 %v4238, 1.0
  %v4241 = vmul.f32 %v4239, 0.5
  %v4242 = vmul.f32 %v4240, 0.5
  %v4243 = vmul.f32 %v4232, 0.5
  %v4244 = vmul.f32 %v4234, 0.5
  %v4245 = vtanh.pop %v4243
  %v4246 = vtanh.pop %v4244
  %v4247 = vadd.f32 %v4245, 1.0
  %v4248 = vadd.f32 %v4246, 1.0
  %v4249 = vmul.f32 %v4247, 0.5
  %v4250 = vmul.f32 %v4248, 0.5
  %v4251 = vmul.f32 %v4241, %v4141
  %v4252 = vmul.f32 %v4242, %v4219
  %v4253 = vadd.f32 %v3395, %v4251
  %v4254 = vadd.f32 %v4227, %v4252
  %v4255 = vtanh.pop %v4253
  %v4256 = vtanh.pop %v4254
  %v4257 = vsub.f32 1.0, %v4249
  %v4258 = vsub.f32 1.0, %v4250
  %v4259 = vmul.f32 %v4257, %v4255
  %v4260 = vmul.f32 %v4258, %v4256
  %v4261 = vmul.f32 %v4249, 0.0
  %v4262 = vmul.f32 %v4250, 0.0
  %v4263 = vadd.f32 %v4259, %v4261
  %v4264 = vadd.f32 %v4260, %v4262
  %v4265 = vpack.c.bf16 %v4263, %v4263
  %v4266 = vpack.c.bf16 %v4264, %v4264
  %4267 = vmatpush.bf16.msra.mxu0 %v3916
  %4268 = vmatpush.bf16.msra.mxu0 %v3910
  %4269 = vmatpush.bf16.msra.mxu0 %v3904
  %4270 = vmatpush.bf16.msra.mxu0 %v3898
  %4271 = vmatpush.bf16.msra.mxu0 %v3892
  %4272 = vmatpush.bf16.msra.mxu0 %v3886
  %4273 = vmatpush.bf16.msra.mxu0 %v3880
  %4274 = vmatpush.bf16.msra.mxu0 %v3874
  %4275 = vmatmul.bf16.gmra.mxu0 %v4265
  %v4276 = vpop.f32.mrf.mxu0
  %v4277 = vadd.f32 %v3574, %v4276
  %v4278 = vpop.f32.mrf.mxu0
  %4279 = vdwg.mxu0
  %4280 = vmatpush.bf16.msra.mxu0 %v3964
  %4281 = vmatpush.bf16.msra.mxu0 %v3958
  %4282 = vmatpush.bf16.msra.mxu0 %v3952
  %4283 = vmatpush.bf16.msra.mxu0 %v3946
  %4284 = vmatpush.bf16.msra.mxu0 %v3940
  %4285 = vmatpush.bf16.msra.mxu0 %v3934
  %4286 = vmatpush.bf16.msra.mxu0 %v3928
  %4287 = vmatpush.bf16.msra.mxu0 %v3922
  %4288 = vmatmul.bf16.gmra.mxu0 %v4266
  %v4289 = vpop.f32.mrf.mxu0
  %v4290 = vadd.f32 %v4277, %v4289
  %v4291 = vpop.f32.mrf.mxu0
  %4292 = vdwg.mxu0
  %4293 = vmatpush.bf16.msra.mxu0 %v3917
  %4294 = vmatpush.bf16.msra.mxu0 %v3911
  %4295 = vmatpush.bf16.msra.mxu0 %v3905
  %4296 = vmatpush.bf16.msra.mxu0 %v3899
  %4297 = vmatpush.bf16.msra.mxu0 %v3893
  %4298 = vmatpush.bf16.msra.mxu0 %v3887
  %4299 = vmatpush.bf16.msra.mxu0 %v3881
  %4300 = vmatpush.bf16.msra.mxu0 %v3875
  %4301 = vmatmul.bf16.gmra.mxu0 %v4265
  %v4302 = vpop.f32.mrf.mxu0
  %v4303 = vadd.f32 %v3575, %v4302
  %v4304 = vpop.f32.mrf.mxu0
  %4305 = vdwg.mxu0
  %4306 = vmatpush.bf16.msra.mxu0 %v3965
  %4307 = vmatpush.bf16.msra.mxu0 %v3959
  %4308 = vmatpush.bf16.msra.mxu0 %v3953
  %4309 = vmatpush.bf16.msra.mxu0 %v3947
  %4310 = vmatpush.bf16.msra.mxu0 %v3941
  %4311 = vmatpush.bf16.msra.mxu0 %v3935
  %4312 = vmatpush.bf16.msra.mxu0 %v3929
  %4313 = vmatpush.bf16.msra.mxu0 %v3923
  %4314 = vmatmul.bf16.gmra.mxu0 %v4266
  %v4315 = vpop.f32.mrf.mxu0
  %v4316 = vadd.f32 %v4303, %v4315
  %v4317 = vpop.f32.mrf.mxu0
  %4318 = vdwg.mxu0
  %4319 = vmatpush.bf16.msra.mxu0 %v3918
  %4320 = vmatpush.bf16.msra.mxu0 %v3912
  %4321 = vmatpush.bf16.msra.mxu0 %v3906
  %4322 = vmatpush.bf16.msra.mxu0 %v3900
  %4323 = vmatpush.bf16.msra.mxu0 %v3894
  %4324 = vmatpush.bf16.msra.mxu0 %v3888
  %4325 = vmatpush.bf16.msra.mxu0 %v3882
  %4326 = vmatpush.bf16.msra.mxu0 %v3876
  %4327 = vmatmul.bf16.gmra.mxu0 %v4265
  %v4328 = vpop.f32.mrf.mxu0
  %v4329 = vadd.f32 %v3576, %v4328
  %v4330 = vpop.f32.mrf.mxu0
  %4331 = vdwg.mxu0
  %4332 = vmatpush.bf16.msra.mxu0 %v3966
  %4333 = vmatpush.bf16.msra.mxu0 %v3960
  %4334 = vmatpush.bf16.msra.mxu0 %v3954
  %4335 = vmatpush.bf16.msra.mxu0 %v3948
  %4336 = vmatpush.bf16.msra.mxu0 %v3942
  %4337 = vmatpush.bf16.msra.mxu0 %v3936
  %4338 = vmatpush.bf16.msra.mxu0 %v3930
  %4339 = vmatpush.bf16.msra.mxu0 %v3924
  %4340 = vmatmul.bf16.gmra.mxu0 %v4266
  %v4341 = vpop.f32.mrf.mxu0
  %v4342 = vadd.f32 %v4329, %v4341
  %v4343 = vpop.f32.mrf.mxu0
  %4344 = vdwg.mxu0
  %4345 = vmatpush.bf16.msra.mxu0 %v3919
  %4346 = vmatpush.bf16.msra.mxu0 %v3913
  %4347 = vmatpush.bf16.msra.mxu0 %v3907
  %4348 = vmatpush.bf16.msra.mxu0 %v3901
  %4349 = vmatpush.bf16.msra.mxu0 %v3895
  %4350 = vmatpush.bf16.msra.mxu0 %v3889
  %4351 = vmatpush.bf16.msra.mxu0 %v3883
  %4352 = vmatpush.bf16.msra.mxu0 %v3877
  %4353 = vmatmul.bf16.gmra.mxu0 %v4265
  %v4354 = vpop.f32.mrf.mxu0
  %v4355 = vadd.f32 %v3577, %v4354
  %v4356 = vpop.f32.mrf.mxu0
  %4357 = vdwg.mxu0
  %4358 = vmatpush.bf16.msra.mxu0 %v3967
  %4359 = vmatpush.bf16.msra.mxu0 %v3961
  %4360 = vmatpush.bf16.msra.mxu0 %v3955
  %4361 = vmatpush.bf16.msra.mxu0 %v3949
  %4362 = vmatpush.bf16.msra.mxu0 %v3943
  %4363 = vmatpush.bf16.msra.mxu0 %v3937
  %4364 = vmatpush.bf16.msra.mxu0 %v3931
  %4365 = vmatpush.bf16.msra.mxu0 %v3925
  %4366 = vmatmul.bf16.gmra.mxu0 %v4266
  %v4367 = vpop.f32.mrf.mxu0
  %v4368 = vadd.f32 %v4355, %v4367
  %v4369 = vpop.f32.mrf.mxu0
  %4370 = vdwg.mxu0
  %4371 = vmatpush.bf16.msra.mxu0 %v3920
  %4372 = vmatpush.bf16.msra.mxu0 %v3914
  %4373 = vmatpush.bf16.msra.mxu0 %v3908
  %4374 = vmatpush.bf16.msra.mxu0 %v3902
  %4375 = vmatpush.bf16.msra.mxu0 %v3896
  %4376 = vmatpush.bf16.msra.mxu0 %v3890
  %4377 = vmatpush.bf16.msra.mxu0 %v3884
  %4378 = vmatpush.bf16.msra.mxu0 %v3878
  %4379 = vmatmul.bf16.gmra.mxu0 %v4265
  %v4380 = vpop.f32.mrf.mxu0
  %v4381 = vadd.f32 %v3578, %v4380
  %v4382 = vpop.f32.mrf.mxu0
  %4383 = vdwg.mxu0
  %4384 = vmatpush.bf16.msra.mxu0 %v3968
  %4385 = vmatpush.bf16.msra.mxu0 %v3962
  %4386 = vmatpush.bf16.msra.mxu0 %v3956
  %4387 = vmatpush.bf16.msra.mxu0 %v3950
  %4388 = vmatpush.bf16.msra.mxu0 %v3944
  %4389 = vmatpush.bf16.msra.mxu0 %v3938
  %4390 = vmatpush.bf16.msra.mxu0 %v3932
  %4391 = vmatpush.bf16.msra.mxu0 %v3926
  %4392 = vmatmul.bf16.gmra.mxu0 %v4266
  %v4393 = vpop.f32.mrf.mxu0
  %v4394 = vadd.f32 %v4381, %v4393
  %v4395 = vpop.f32.mrf.mxu0
  %4396 = vdwg.mxu0
  %4397 = vmatpush.bf16.msra.mxu0 %v3921
  %4398 = vmatpush.bf16.msra.mxu0 %v3915
  %4399 = vmatpush.bf16.msra.mxu0 %v3909
  %4400 = vmatpush.bf16.msra.mxu0 %v3903
  %4401 = vmatpush.bf16.msra.mxu0 %v3897
  %4402 = vmatpush.bf16.msra.mxu0 %v3891
  %4403 = vmatpush.bf16.msra.mxu0 %v3885
  %4404 = vmatpush.bf16.msra.mxu0 %v3879
  %4405 = vmatmul.bf16.gmra.mxu0 %v4265
  %v4406 = vpop.f32.mrf.mxu0
  %v4407 = vadd.f32 %v3579, %v4406
  %v4408 = vpop.f32.mrf.mxu0
  %4409 = vdwg.mxu0
  %4410 = vmatpush.bf16.msra.mxu0 %v3969
  %4411 = vmatpush.bf16.msra.mxu0 %v3963
  %4412 = vmatpush.bf16.msra.mxu0 %v3957
  %4413 = vmatpush.bf16.msra.mxu0 %v3951
  %4414 = vmatpush.bf16.msra.mxu0 %v3945
  %4415 = vmatpush.bf16.msra.mxu0 %v3939
  %4416 = vmatpush.bf16.msra.mxu0 %v3933
  %4417 = vmatpush.bf16.msra.mxu0 %v3927
  %4418 = vmatmul.bf16.gmra.mxu0 %v4266
  %v4419 = vpop.f32.mrf.mxu0
  %v4420 = vadd.f32 %v4407, %v4419
  %v4421 = vpop.f32.mrf.mxu0
  %4422 = vdwg.mxu0
  %v4423 = vrot.slane %v3421, 6
  %v4424 = vrot.slane %v3447, 6
  %v4425 = vrot.slane %v3473, 6
  %v4433 = vrot.slane %v4290, 6
  %v4434 = vrot.slane %v4316, 6
  %v4435 = vrot.slane %v4368, 6
  %v4436 = vrot.slane %v4394, 6
  %v4441 = vadd.f32 %v3343, %v4433
  %v4442 = vadd.f32 %v3369, %v4434
  %v4443 = vadd.f32 %v4423, %v4435
  %v4444 = vadd.f32 %v4424, %v4436
  %v4445 = vmul.f32 %v4441, 0.5
  %v4446 = vmul.f32 %v4443, 0.5
  %v4447 = vtanh.pop %v4445
  %v4448 = vtanh.pop %v4446
  %v4449 = vadd.f32 %v4447, 1.0
  %v4450 = vadd.f32 %v4448, 1.0
  %v4451 = vmul.f32 %v4449, 0.5
  %v4452 = vmul.f32 %v4450, 0.5
  %v4453 = vmul.f32 %v4442, 0.5
  %v4454 = vmul.f32 %v4444, 0.5
  %v4455 = vtanh.pop %v4453
  %v4456 = vtanh.pop %v4454
  %v4457 = vadd.f32 %v4455, 1.0
  %v4458 = vadd.f32 %v4456, 1.0
  %v4459 = vmul.f32 %v4457, 0.5
  %v4460 = vmul.f32 %v4458, 0.5
  %v4463 = vrot.slane %v4342, 6
  %v4464 = vrot.slane %v4420, 6
  %v4467 = vmul.f32 %v4451, %v4463
  %v4468 = vmul.f32 %v4452, %v4464
  %v4469 = vadd.f32 %v3395, %v4467
  %v4470 = vadd.f32 %v4425, %v4468
  %v4471 = vtanh.pop %v4469
  %v4472 = vtanh.pop %v4470
  %v4473 = vsub.f32 1.0, %v4459
  %v4474 = vsub.f32 1.0, %v4460
  %v4475 = vmul.f32 %v4473, %v4471
  %v4476 = vmul.f32 %v4474, %v4472
  %v4479 = vrot.slane %v4263, 6
  %v4480 = vrot.slane %v4264, 6
  %v4483 = vmul.f32 %v4459, %v4479
  %v4484 = vmul.f32 %v4460, %v4480
  %v4485 = vadd.f32 %v4475, %v4483
  %v4486 = vadd.f32 %v4476, %v4484
  %v4488 = vrot.slane %v4486, 2
  %v4490 = vsel %vm2725, %v4263, %v4485
  %v4491 = vsel %vm2725, %v4488, %v4480
  %v4492 = vpack.c.bf16 %v4490, %v4490
  %v4493 = vpack.c.bf16 %v4491, %v4491
  %v4494 = vld [vmem:[%s11] sm:$0xff]
  %v4495 = vld [vmem:[%s11 + $0x8] sm:$0xff]
  %v4496 = vld [vmem:[%s11 + $0x10] sm:$0xff]
  %v4497 = vld [vmem:[%s11 + $0x18] sm:$0xff]
  %v4498 = vld [vmem:[%s11 + $0x20] sm:$0xff]
  %v4499 = vld [vmem:[%s11 + $0x28] sm:$0xff]
  %v4500 = vld [vmem:[%s11 + $0x30] sm:$0xff]
  %v4501 = vld [vmem:[%s11 + $0x38] sm:$0xff]
  %v4502 = vld [vmem:[%s11 + $0x40] sm:$0xff]
  %v4503 = vld [vmem:[%s11 + $0x48] sm:$0xff]
  %v4504 = vld [vmem:[%s11 + $0x50] sm:$0xff]
  %v4505 = vld [vmem:[%s11 + $0x58] sm:$0xff]
  %v4506 = vld [vmem:[%s11 + $0x60] sm:$0xff]
  %v4507 = vld [vmem:[%s11 + $0x68] sm:$0xff]
  %v4508 = vld [vmem:[%s11 + $0x70] sm:$0xff]
  %v4509 = vld [vmem:[%s11 + $0x78] sm:$0xff]
  %v4510 = vld [vmem:[%s11 + $0x80] sm:$0xff]
  %v4511 = vld [vmem:[%s11 + $0x88] sm:$0xff]
  %v4512 = vld [vmem:[%s11 + $0x90] sm:$0xff]
  %v4513 = vld [vmem:[%s11 + $0x98] sm:$0xff]
  %v4514 = vld [vmem:[%s11 + $0xa0] sm:$0xff]
  %v4515 = vld [vmem:[%s11 + $0xa8] sm:$0xff]
  %v4516 = vld [vmem:[%s11 + $0xb0] sm:$0xff]
  %v4517 = vld [vmem:[%s11 + $0xb8] sm:$0xff]
  %v4518 = vld [vmem:[%s11 + $0xc0] sm:$0xff]
  %v4519 = vld [vmem:[%s11 + $0xc8] sm:$0xff]
  %v4520 = vld [vmem:[%s11 + $0xd0] sm:$0xff]
  %v4521 = vld [vmem:[%s11 + $0xd8] sm:$0xff]
  %v4522 = vld [vmem:[%s11 + $0xe0] sm:$0xff]
  %v4523 = vld [vmem:[%s11 + $0xe8] sm:$0xff]
  %v4524 = vld [vmem:[%s11 + $0xf0] sm:$0xff]
  %v4525 = vld [vmem:[%s11 + $0xf8] sm:$0xff]
  %v4526 = vld [vmem:[%s12] sm:$0x3]
  %v4528 = vperm.slane %v4526, 0
  %v4529 = vperm.slane %v4526, 1
  %v4564 = vunpack.c.l.b16 %v4494
  %v4565 = vunpack.c.h.b16 %v4494
  %v4566 = vunpack.c.l.b16 %v4495
  %v4567 = vunpack.c.h.b16 %v4495
  %v4568 = vunpack.c.l.b16 %v4496
  %v4569 = vunpack.c.h.b16 %v4496
  %v4570 = vunpack.c.l.b16 %v4497
  %v4571 = vunpack.c.h.b16 %v4497
  %v4572 = vunpack.c.l.b16 %v4498
  %v4573 = vunpack.c.h.b16 %v4498
  %v4574 = vunpack.c.l.b16 %v4499
  %v4575 = vunpack.c.h.b16 %v4499
  %v4576 = vunpack.c.l.b16 %v4500
  %v4577 = vunpack.c.h.b16 %v4500
  %v4578 = vunpack.c.l.b16 %v4501
  %v4579 = vunpack.c.h.b16 %v4501
  %v4580 = vunpack.c.l.b16 %v4502
  %v4581 = vunpack.c.h.b16 %v4502
  %v4582 = vunpack.c.l.b16 %v4503
  %v4583 = vunpack.c.h.b16 %v4503
  %v4584 = vunpack.c.l.b16 %v4504
  %v4585 = vunpack.c.h.b16 %v4504
  %v4586 = vunpack.c.l.b16 %v4505
  %v4587 = vunpack.c.h.b16 %v4505
  %v4588 = vunpack.c.l.b16 %v4506
  %v4589 = vunpack.c.h.b16 %v4506
  %v4590 = vunpack.c.l.b16 %v4507
  %v4591 = vunpack.c.h.b16 %v4507
  %v4592 = vunpack.c.l.b16 %v4508
  %v4593 = vunpack.c.h.b16 %v4508
  %v4594 = vunpack.c.l.b16 %v4509
  %v4595 = vunpack.c.h.b16 %v4509
  %v4596 = vunpack.c.l.b16 %v4510
  %v4597 = vunpack.c.h.b16 %v4510
  %v4598 = vunpack.c.l.b16 %v4511
  %v4599 = vunpack.c.h.b16 %v4511
  %v4600 = vunpack.c.l.b16 %v4512
  %v4601 = vunpack.c.h.b16 %v4512
  %v4602 = vunpack.c.l.b16 %v4513
  %v4603 = vunpack.c.h.b16 %v4513
  %v4604 = vunpack.c.l.b16 %v4514
  %v4605 = vunpack.c.h.b16 %v4514
  %v4606 = vunpack.c.l.b16 %v4515
  %v4607 = vunpack.c.h.b16 %v4515
  %v4608 = vunpack.c.l.b16 %v4516
  %v4609 = vunpack.c.h.b16 %v4516
  %v4610 = vunpack.c.l.b16 %v4517
  %v4611 = vunpack.c.h.b16 %v4517
  %v4612 = vunpack.c.l.b16 %v4518
  %v4613 = vunpack.c.h.b16 %v4518
  %v4614 = vunpack.c.l.b16 %v4519
  %v4615 = vunpack.c.h.b16 %v4519
  %v4616 = vunpack.c.l.b16 %v4520
  %v4617 = vunpack.c.h.b16 %v4520
  %v4618 = vunpack.c.l.b16 %v4521
  %v4619 = vunpack.c.h.b16 %v4521
  %v4620 = vunpack.c.l.b16 %v4522
  %v4621 = vunpack.c.h.b16 %v4522
  %v4622 = vunpack.c.l.b16 %v4523
  %v4623 = vunpack.c.h.b16 %v4523
  %v4624 = vunpack.c.l.b16 %v4524
  %v4625 = vunpack.c.h.b16 %v4524
  %v4626 = vunpack.c.l.b16 %v4525
  %v4627 = vunpack.c.h.b16 %v4525
  %v4628 = vpack.c.b16 %v4566, %v4564
  %v4629 = vpack.c.b16 %v4567, %v4565
  %v4630 = vpack.c.b16 %v4570, %v4568
  %v4631 = vpack.c.b16 %v4571, %v4569
  %v4632 = vpack.c.b16 %v4574, %v4572
  %v4633 = vpack.c.b16 %v4575, %v4573
  %v4634 = vpack.c.b16 %v4578, %v4576
  %v4635 = vpack.c.b16 %v4579, %v4577
  %v4636 = vpack.c.b16 %v4582, %v4580
  %v4637 = vpack.c.b16 %v4583, %v4581
  %v4638 = vpack.c.b16 %v4586, %v4584
  %v4639 = vpack.c.b16 %v4587, %v4585
  %v4640 = vpack.c.b16 %v4590, %v4588
  %v4641 = vpack.c.b16 %v4591, %v4589
  %v4642 = vpack.c.b16 %v4594, %v4592
  %v4643 = vpack.c.b16 %v4595, %v4593
  %v4644 = vpack.c.b16 %v4598, %v4596
  %v4645 = vpack.c.b16 %v4599, %v4597
  %v4646 = vpack.c.b16 %v4602, %v4600
  %v4647 = vpack.c.b16 %v4603, %v4601
  %v4648 = vpack.c.b16 %v4606, %v4604
  %v4649 = vpack.c.b16 %v4607, %v4605
  %v4650 = vpack.c.b16 %v4610, %v4608
  %v4651 = vpack.c.b16 %v4611, %v4609
  %v4652 = vpack.c.b16 %v4614, %v4612
  %v4653 = vpack.c.b16 %v4615, %v4613
  %v4654 = vpack.c.b16 %v4618, %v4616
  %v4655 = vpack.c.b16 %v4619, %v4617
  %v4656 = vpack.c.b16 %v4622, %v4620
  %v4657 = vpack.c.b16 %v4623, %v4621
  %v4658 = vpack.c.b16 %v4626, %v4624
  %v4659 = vpack.c.b16 %v4627, %v4625
  %4692 = vmatpush.bf16.msra.mxu0 %v4642
  %4693 = vmatpush.bf16.msra.mxu0 %v4640
  %4694 = vmatpush.bf16.msra.mxu0 %v4638
  %4695 = vmatpush.bf16.msra.mxu0 %v4636
  %4696 = vmatpush.bf16.msra.mxu0 %v4634
  %4697 = vmatpush.bf16.msra.mxu0 %v4632
  %4698 = vmatpush.bf16.msra.mxu0 %v4630
  %4699 = vmatpush.bf16.msra.mxu0 %v4628
  %4700 = vmatmul.bf16.gmra.mxu0 %v4492
  %v4701 = vpop.f32.mrf.mxu0
  %v4702 = vadd.f32 %v4528, %v4701
  %v4703 = vpop.f32.mrf.mxu0
  %4704 = vdwg.mxu0
  %4705 = vmatpush.bf16.msra.mxu0 %v4658
  %4706 = vmatpush.bf16.msra.mxu0 %v4656
  %4707 = vmatpush.bf16.msra.mxu0 %v4654
  %4708 = vmatpush.bf16.msra.mxu0 %v4652
  %4709 = vmatpush.bf16.msra.mxu0 %v4650
  %4710 = vmatpush.bf16.msra.mxu0 %v4648
  %4711 = vmatpush.bf16.msra.mxu0 %v4646
  %4712 = vmatpush.bf16.msra.mxu0 %v4644
  %4713 = vmatmul.bf16.gmra.mxu0 %v4493
  %v4714 = vpop.f32.mrf.mxu0
  %v4715 = vadd.f32 %v4702, %v4714
  %v4716 = vpop.f32.mrf.mxu0
  %4717 = vdwg.mxu0
  %4718 = vmatpush.bf16.msra.mxu0 %v4643
  %4719 = vmatpush.bf16.msra.mxu0 %v4641
  %4720 = vmatpush.bf16.msra.mxu0 %v4639
  %4721 = vmatpush.bf16.msra.mxu0 %v4637
  %4722 = vmatpush.bf16.msra.mxu0 %v4635
  %4723 = vmatpush.bf16.msra.mxu0 %v4633
  %4724 = vmatpush.bf16.msra.mxu0 %v4631
  %4725 = vmatpush.bf16.msra.mxu0 %v4629
  %4726 = vmatmul.bf16.gmra.mxu0 %v4492
  %v4727 = vpop.f32.mrf.mxu0
  %v4728 = vadd.f32 %v4529, %v4727
  %v4729 = vpop.f32.mrf.mxu0
  %4730 = vdwg.mxu0
  %4731 = vmatpush.bf16.msra.mxu0 %v4659
  %4732 = vmatpush.bf16.msra.mxu0 %v4657
  %4733 = vmatpush.bf16.msra.mxu0 %v4655
  %4734 = vmatpush.bf16.msra.mxu0 %v4653
  %4735 = vmatpush.bf16.msra.mxu0 %v4651
  %4736 = vmatpush.bf16.msra.mxu0 %v4649
  %4737 = vmatpush.bf16.msra.mxu0 %v4647
  %4738 = vmatpush.bf16.msra.mxu0 %v4645
  %4739 = vmatmul.bf16.gmra.mxu0 %v4493
  %v4740 = vpop.f32.mrf.mxu0
  %v4741 = vadd.f32 %v4728, %v4740
  %v4742 = vpop.f32.mrf.mxu0
  %4743 = vdwg.mxu0
  %v4744 = vtanh.pop %v4715
  %v4745 = vtanh.pop %v4741
  %v4746 = vpack.c.bf16 %v4744, %v4744
  %v4747 = vpack.c.bf16 %v4745, %v4745
  %v4748 = vld [vmem:[%s13] sm:$0xf]
  %v4749 = vld [vmem:[%s13 + $0x4] sm:$0xf]
  %v4750 = vld [vmem:[%s13 + $0x8] sm:$0xf]
  %v4751 = vld [vmem:[%s13 + $0xc] sm:$0xf]
  %v4752 = vld [vmem:[%s13 + $0x10] sm:$0xf]
  %v4753 = vld [vmem:[%s13 + $0x14] sm:$0xf]
  %v4754 = vld [vmem:[%s13 + $0x18] sm:$0xf]
  %v4755 = vld [vmem:[%s13 + $0x1c] sm:$0xf]
  %v4756 = vld [vmem:[%s13 + $0x20] sm:$0xf]
  %v4757 = vld [vmem:[%s13 + $0x24] sm:$0xf]
  %v4758 = vld [vmem:[%s13 + $0x28] sm:$0xf]
  %v4759 = vld [vmem:[%s13 + $0x2c] sm:$0xf]
  %v4760 = vld [vmem:[%s13 + $0x30] sm:$0xf]
  %v4761 = vld [vmem:[%s13 + $0x34] sm:$0xf]
  %v4762 = vld [vmem:[%s13 + $0x38] sm:$0xf]
  %v4763 = vld [vmem:[%s13 + $0x3c] sm:$0xf]
  %v4764 = vld [vmem:[%s13 + $0x40] sm:$0xf]
  %v4765 = vld [vmem:[%s13 + $0x44] sm:$0xf]
  %v4766 = vld [vmem:[%s13 + $0x48] sm:$0xf]
  %v4767 = vld [vmem:[%s13 + $0x4c] sm:$0xf]
  %v4768 = vld [vmem:[%s13 + $0x50] sm:$0xf]
  %v4769 = vld [vmem:[%s13 + $0x54] sm:$0xf]
  %v4770 = vld [vmem:[%s13 + $0x58] sm:$0xf]
  %v4771 = vld [vmem:[%s13 + $0x5c] sm:$0xf]
  %v4772 = vld [vmem:[%s13 + $0x60] sm:$0xf]
  %v4773 = vld [vmem:[%s13 + $0x64] sm:$0xf]
  %v4774 = vld [vmem:[%s13 + $0x68] sm:$0xf]
  %v4775 = vld [vmem:[%s13 + $0x6c] sm:$0xf]
  %v4776 = vld [vmem:[%s13 + $0x70] sm:$0xf]
  %v4777 = vld [vmem:[%s13 + $0x74] sm:$0xf]
  %v4778 = vld [vmem:[%s13 + $0x78] sm:$0xf]
  %v4779 = vld [vmem:[%s13 + $0x7c] sm:$0xf]
  %v4812 = vunpack.c.l.b16 %v4748
  %v4813 = vunpack.c.l.b16 %v4749
  %v4814 = vunpack.c.l.b16 %v4750
  %v4815 = vunpack.c.l.b16 %v4751
  %v4816 = vunpack.c.l.b16 %v4752
  %v4817 = vunpack.c.l.b16 %v4753
  %v4818 = vunpack.c.l.b16 %v4754
  %v4819 = vunpack.c.l.b16 %v4755
  %v4820 = vunpack.c.l.b16 %v4756
  %v4821 = vunpack.c.l.b16 %v4757
  %v4822 = vunpack.c.l.b16 %v4758
  %v4823 = vunpack.c.l.b16 %v4759
  %v4824 = vunpack.c.l.b16 %v4760
  %v4825 = vunpack.c.l.b16 %v4761
  %v4826 = vunpack.c.l.b16 %v4762
  %v4827 = vunpack.c.l.b16 %v4763
  %v4828 = vunpack.c.l.b16 %v4764
  %v4829 = vunpack.c.l.b16 %v4765
  %v4830 = vunpack.c.l.b16 %v4766
  %v4831 = vunpack.c.l.b16 %v4767
  %v4832 = vunpack.c.l.b16 %v4768
  %v4833 = vunpack.c.l.b16 %v4769
  %v4834 = vunpack.c.l.b16 %v4770
  %v4835 = vunpack.c.l.b16 %v4771
  %v4836 = vunpack.c.l.b16 %v4772
  %v4837 = vunpack.c.l.b16 %v4773
  %v4838 = vunpack.c.l.b16 %v4774
  %v4839 = vunpack.c.l.b16 %v4775
  %v4840 = vunpack.c.l.b16 %v4776
  %v4841 = vunpack.c.l.b16 %v4777
  %v4842 = vunpack.c.l.b16 %v4778
  %v4843 = vunpack.c.l.b16 %v4779
  %v4844 = vpack.c.b16 %v4813, %v4812
  %v4845 = vpack.c.b16 %v4815, %v4814
  %v4846 = vpack.c.b16 %v4817, %v4816
  %v4847 = vpack.c.b16 %v4819, %v4818
  %v4848 = vpack.c.b16 %v4821, %v4820
  %v4849 = vpack.c.b16 %v4823, %v4822
  %v4850 = vpack.c.b16 %v4825, %v4824
  %v4851 = vpack.c.b16 %v4827, %v4826
  %v4852 = vpack.c.b16 %v4829, %v4828
  %v4853 = vpack.c.b16 %v4831, %v4830
  %v4854 = vpack.c.b16 %v4833, %v4832
  %v4855 = vpack.c.b16 %v4835, %v4834
  %v4856 = vpack.c.b16 %v4837, %v4836
  %v4857 = vpack.c.b16 %v4839, %v4838
  %v4858 = vpack.c.b16 %v4841, %v4840
  %v4859 = vpack.c.b16 %v4843, %v4842
  %4876 = vmatpush.bf16.msra.mxu0 %v4851
  %4877 = vmatpush.bf16.msra.mxu0 %v4850
  %4878 = vmatpush.bf16.msra.mxu0 %v4849
  %4879 = vmatpush.bf16.msra.mxu0 %v4848
  %4880 = vmatpush.bf16.msra.mxu0 %v4847
  %4881 = vmatpush.bf16.msra.mxu0 %v4846
  %4882 = vmatpush.bf16.msra.mxu0 %v4845
  %4883 = vmatpush.bf16.msra.mxu0 %v4844
  %4884 = vmatmul.bf16.gmra.mxu0 %v4746
  %v4885 = vpop.f32.mrf.mxu0
  %v4886 = vadd.f32 0.0, %v4885
  %v4887 = vpop.f32.mrf.mxu0
  %4888 = vdwg.mxu0
  %4889 = vmatpush.bf16.msra.mxu0 %v4859
  %4890 = vmatpush.bf16.msra.mxu0 %v4858
  %4891 = vmatpush.bf16.msra.mxu0 %v4857
  %4892 = vmatpush.bf16.msra.mxu0 %v4856
  %4893 = vmatpush.bf16.msra.mxu0 %v4855
  %4894 = vmatpush.bf16.msra.mxu0 %v4854
  %4895 = vmatpush.bf16.msra.mxu0 %v4853
  %4896 = vmatpush.bf16.msra.mxu0 %v4852
  %4897 = vmatmul.bf16.gmra.mxu0 %v4747
  %v4898 = vpop.f32.mrf.mxu0
  %v4899 = vadd.f32 %v4886, %v4898
  %v4900 = vpop.f32.mrf.mxu0
  %4901 = vdwg.mxu0
  %v4903 = vrot.slane %v4899, 2
  %v4905 = vmax.f32 %v4899, %v4903
  %v4906 = vsub.f32 %v4899, %v4905
  %v4907 = vmul.f32 %v4906, 1.442695
  %v4908 = vpow.pop %v4907
  %v4910 = vrot.slane %v4905, 6
  %v4912 = vsub.f32 %v4899, %v4910
  %v4913 = vmul.f32 %v4912, 1.442695
  %v4914 = vpow.pop %v4913
  %v4916 = vrot.slane %v4914, 2
  %v4918 = vadd.f32 %v4908, %v4916
  %v4919 = vrcp.pop %v4918
  %v4920 = vmul.f32 %v4908, %v4919
  %4922 = vset.pattern.permute.xlu0 0
  %4923 = vperm.xlu0 %4922, %v4920
  %v4924 = vpop.permute.xlu0 %4923
  %v4926 = vmul.f32 %v4490, %v4924
  %v4927 = vmul.f32 %v4491, %v4924
  %v4929 = vrot.slane %v4919, 6
  %v4931 = vmul.f32 %v4914, %v4929
  %4933 = vset.pattern.permute.xlu0 0
  %4934 = vperm.xlu0 %4933, %v4931
  %v4935 = vpop.permute.xlu0 %4934
  %v4937 = vmul.f32 %v4490, %v4935
  %v4938 = vmul.f32 %v4491, %v4935
  %v4941 = vrot.slane %v4937, 2
  %v4942 = vrot.slane %v4938, 2
  %v4945 = vadd.f32 %v4926, %v4941
  %v4946 = vadd.f32 %v4927, %v4942
  %v4947 = vpack.c.bf16 %v4945, %v4945
  %v4948 = vpack.c.bf16 %v4946, %v4946
  %v4949 = vld [vmem:[%s14] sm:$0xf]
  %v4950 = vld [vmem:[%s14 + $0x4] sm:$0xf]
  %v4951 = vld [vmem:[%s14 + $0x8] sm:$0xf]
  %v4952 = vld [vmem:[%s14 + $0xc] sm:$0xf]
  %v4953 = vld [vmem:[%s14 + $0x10] sm:$0xf]
  %v4954 = vld [vmem:[%s14 + $0x14] sm:$0xf]
  %v4955 = vld [vmem:[%s14 + $0x18] sm:$0xf]
  %v4956 = vld [vmem:[%s14 + $0x1c] sm:$0xf]
  %v4957 = vld [vmem:[%s14 + $0x20] sm:$0xf]
  %v4958 = vld [vmem:[%s14 + $0x24] sm:$0xf]
  %v4959 = vld [vmem:[%s14 + $0x28] sm:$0xf]
  %v4960 = vld [vmem:[%s14 + $0x2c] sm:$0xf]
  %v4961 = vld [vmem:[%s14 + $0x30] sm:$0xf]
  %v4962 = vld [vmem:[%s14 + $0x34] sm:$0xf]
  %v4963 = vld [vmem:[%s14 + $0x38] sm:$0xf]
  %v4964 = vld [vmem:[%s14 + $0x3c] sm:$0xf]
  %v4965 = vld [vmem:[%s14 + $0x40] sm:$0xf]
  %v4966 = vld [vmem:[%s14 + $0x44] sm:$0xf]
  %v4967 = vld [vmem:[%s14 + $0x48] sm:$0xf]
  %v4968 = vld [vmem:[%s14 + $0x4c] sm:$0xf]
  %v4969 = vld [vmem:[%s14 + $0x50] sm:$0xf]
  %v4970 = vld [vmem:[%s14 + $0x54] sm:$0xf]
  %v4971 = vld [vmem:[%s14 + $0x58] sm:$0xf]
  %v4972 = vld [vmem:[%s14 + $0x5c] sm:$0xf]
  %v4973 = vld [vmem:[%s14 + $0x60] sm:$0xf]
  %v4974 = vld [vmem:[%s14 + $0x64] sm:$0xf]
  %v4975 = vld [vmem:[%s14 + $0x68] sm:$0xf]
  %v4976 = vld [vmem:[%s14 + $0x6c] sm:$0xf]
  %v4977 = vld [vmem:[%s14 + $0x70] sm:$0xf]
  %v4978 = vld [vmem:[%s14 + $0x74] sm:$0xf]
  %v4979 = vld [vmem:[%s14 + $0x78] sm:$0xf]
  %v4980 = vld [vmem:[%s14 + $0x7c] sm:$0xf]
  %v4981 = vld [vmem:[%s15] sm:$0x1]
  %v4983 = vperm.slane %v4981, 0
  %v5017 = vunpack.c.l.b16 %v4949
  %v5018 = vunpack.c.l.b16 %v4950
  %v5019 = vunpack.c.l.b16 %v4951
  %v5020 = vunpack.c.l.b16 %v4952
  %v5021 = vunpack.c.l.b16 %v4953
  %v5022 = vunpack.c.l.b16 %v4954
  %v5023 = vunpack.c.l.b16 %v4955
  %v5024 = vunpack.c.l.b16 %v4956
  %v5025 = vunpack.c.l.b16 %v4957
  %v5026 = vunpack.c.l.b16 %v4958
  %v5027 = vunpack.c.l.b16 %v4959
  %v5028 = vunpack.c.l.b16 %v4960
  %v5029 = vunpack.c.l.b16 %v4961
  %v5030 = vunpack.c.l.b16 %v4962
  %v5031 = vunpack.c.l.b16 %v4963
  %v5032 = vunpack.c.l.b16 %v4964
  %v5033 = vunpack.c.l.b16 %v4965
  %v5034 = vunpack.c.l.b16 %v4966
  %v5035 = vunpack.c.l.b16 %v4967
  %v5036 = vunpack.c.l.b16 %v4968
  %v5037 = vunpack.c.l.b16 %v4969
  %v5038 = vunpack.c.l.b16 %v4970
  %v5039 = vunpack.c.l.b16 %v4971
  %v5040 = vunpack.c.l.b16 %v4972
  %v5041 = vunpack.c.l.b16 %v4973
  %v5042 = vunpack.c.l.b16 %v4974
  %v5043 = vunpack.c.l.b16 %v4975
  %v5044 = vunpack.c.l.b16 %v4976
  %v5045 = vunpack.c.l.b16 %v4977
  %v5046 = vunpack.c.l.b16 %v4978
  %v5047 = vunpack.c.l.b16 %v4979
  %v5048 = vunpack.c.l.b16 %v4980
  %v5049 = vpack.c.b16 %v5018, %v5017
  %v5050 = vpack.c.b16 %v5020, %v5019
  %v5051 = vpack.c.b16 %v5022, %v5021
  %v5052 = vpack.c.b16 %v5024, %v5023
  %v5053 = vpack.c.b16 %v5026, %v5025
  %v5054 = vpack.c.b16 %v5028, %v5027
  %v5055 = vpack.c.b16 %v5030, %v5029
  %v5056 = vpack.c.b16 %v5032, %v5031
  %v5057 = vpack.c.b16 %v5034, %v5033
  %v5058 = vpack.c.b16 %v5036, %v5035
  %v5059 = vpack.c.b16 %v5038, %v5037
  %v5060 = vpack.c.b16 %v5040, %v5039
  %v5061 = vpack.c.b16 %v5042, %v5041
  %v5062 = vpack.c.b16 %v5044, %v5043
  %v5063 = vpack.c.b16 %v5046, %v5045
  %v5064 = vpack.c.b16 %v5048, %v5047
  %5081 = vmatpush.bf16.msra.mxu0 %v5056
  %5082 = vmatpush.bf16.msra.mxu0 %v5055
  %5083 = vmatpush.bf16.msra.mxu0 %v5054
  %5084 = vmatpush.bf16.msra.mxu0 %v5053
  %5085 = vmatpush.bf16.msra.mxu0 %v5052
  %5086 = vmatpush.bf16.msra.mxu0 %v5051
  %5087 = vmatpush.bf16.msra.mxu0 %v5050
  %5088 = vmatpush.bf16.msra.mxu0 %v5049
  %5089 = vmatmul.bf16.gmra.mxu0 %v4947
  %v5090 = vpop.f32.mrf.mxu0
  %v5091 = vadd.f32 %v4983, %v5090
  %v5092 = vpop.f32.mrf.mxu0
  %5093 = vdwg.mxu0
  %5094 = vmatpush.bf16.msra.mxu0 %v5064
  %5095 = vmatpush.bf16.msra.mxu0 %v5063
  %5096 = vmatpush.bf16.msra.mxu0 %v5062
  %5097 = vmatpush.bf16.msra.mxu0 %v5061
  %5098 = vmatpush.bf16.msra.mxu0 %v5060
  %5099 = vmatpush.bf16.msra.mxu0 %v5059
  %5100 = vmatpush.bf16.msra.mxu0 %v5058
  %5101 = vmatpush.bf16.msra.mxu0 %v5057
  %5102 = vmatmul.bf16.gmra.mxu0 %v4948
  %v5103 = vpop.f32.mrf.mxu0
  %v5104 = vadd.f32 %v5091, %v5103
  %v5105 = vpop.f32.mrf.mxu0
  %5106 = vdwg.mxu0
  %5107 = vst [vmem:[%s16] sm:$0x3] %v5104
  // Predicated region
  $region66: #{rsna_forward.1} parent=0 // pred_check
    _
  $region67: #{rsna_forward.1} parent=0 // pred_check_branch
    %5109 = sbr.rel (0) target = $region69
  $region68: #{rsna_forward.1} parent=0 // pred_region
    _
  $region69: #{rsna_forward.1} parent=0 // pred_fallthru
    _
  // Predicated region
  $region70: #{rsna_forward.1} parent=0 // pred_check
    _
  $region71: #{rsna_forward.1} parent=0 // pred_check_branch
    %5111 = sbr.rel (0) target = $region73
  $region72: #{rsna_forward.1} parent=0 // pred_region
    _
  $region73: #{rsna_forward.1} parent=0 // pred_fallthru
    _

</llo_original>
